<compile_context>
chip_gen: v7x
topology: tpu7x:2x2x1
jax: 0.10.0
libtpu: 0.0.40
codegen_flags: <defaults>
</compile_context>

<pallas_src>
import functools
from types import SimpleNamespace

import jax
import jax.numpy as jnp
from jax.experimental import pallas as pl
from jax.experimental.pallas import tpu as pltpu


# ----------------------------------------------------------------------------
# Kernel: one LSTM layer, both directions, time loop inside the kernel.
# ----------------------------------------------------------------------------
def _lstm_dir_kernel(x_ref, wih_ref, whh_ref, b_ref, *rest, inv_t, final):
    if final:
        wlin_ref, out_ref, gx_ref, h_ref, c_ref, hsum_ref = rest
        y_ref = None
    else:
        y_ref, gx_ref, h_ref, c_ref = rest
        wlin_ref = out_ref = hsum_ref = None

    bp, H = h_ref.shape
    G = 4 * H
    t_chunk = gx_ref.shape[0] // bp

    chunk = pl.program_id(1)
    is_rev = pl.program_id(0) == 1          # direction 1 scans time backwards

    # ---- init recurrent carries at the first chunk of each direction ----
    @pl.when(chunk == 0)
    def _():
        h_ref[...] = jnp.zeros_like(h_ref)
        c_ref[...] = jnp.zeros_like(c_ref)
        if final:
            hsum_ref[...] = jnp.zeros_like(hsum_ref)

    # ---- hoisted input projection: one big MXU matmul per input part ----
    num_parts = x_ref.shape[0]
    acc = jnp.dot(x_ref[0], wih_ref[0], preferred_element_type=jnp.float32)
    for p in range(1, num_parts):
        acc = acc + jnp.dot(x_ref[p], wih_ref[p],
                            preferred_element_type=jnp.float32)
    gx_ref[...] = acc + b_ref[...]          # (Tc*Bp, 4H); bias folded in once

    whh = whh_ref[...]                      # (H, 4H), resident for the chunk
    lane = jax.lax.broadcasted_iota(jnp.int32, (bp, G), 1)
    is_g_lane = (lane >= 2 * H) & (lane < 3 * H)   # tanh ("g") gate lanes

    def step(s, carry):
        h, c, hsum = carry
        t = jnp.where(is_rev, t_chunk - 1 - s, s)
        row = pl.multiple_of(t * bp, bp)
        gates = gx_ref[pl.ds(row, bp), :] + jnp.dot(
            h, whh, preferred_element_type=jnp.float32)
        # Full-width nonlinearities (1 sigmoid + 1 tanh on (Bp,4H)) + VPU select
        # instead of four sliced 32-lane transcendentals.
        act = jnp.where(is_g_lane, jnp.tanh(gates), jax.nn.sigmoid(gates))
        i_g = act[:, 0 * H:1 * H]
        f_g = act[:, 1 * H:2 * H]
        g_g = act[:, 2 * H:3 * H]
        o_g = act[:, 3 * H:4 * H]
        c = f_g * c + i_g * g_g
        h = o_g * jnp.tanh(c)
        if final:
            hsum = hsum + h                 # fused mean-over-time accumulator
        else:
            y_ref[pl.ds(row, bp), :] = h    # VMEM store; one HBM DMA per chunk
        return h, c, hsum

    init = (h_ref[...], c_ref[...],
            hsum_ref[...] if final else jnp.zeros((bp, H), jnp.float32))
    h, c, hsum = jax.lax.fori_loop(0, t_chunk, step, init,
                                   unroll=t_chunk <= 8)
    h_ref[...] = h
    c_ref[...] = c

    if final:
        hsum_ref[...] = hsum

        @pl.when(chunk == pl.num_programs(1) - 1)
        def _():
            # Fused mean + Linear (per-direction partial; summed in the wrapper).
            out_ref[...] = jnp.dot(hsum * inv_t, wlin_ref[...],
                                   preferred_element_type=jnp.float32)


# ----------------------------------------------------------------------------
# pallas_call wrapper for one layer
# ----------------------------------------------------------------------------
def _pick_t_chunk(seq_len, per_step_bytes, budget=6 << 20):
    """Largest divisor of seq_len whose resident chunk slabs fit the budget."""
    tc = 1
    for cand in range(1, seq_len + 1):
        if seq_len % cand == 0 and cand * per_step_bytes <= budget:
            tc = cand
    return tc


def _lstm_layer_pallas(x_parts, wih, whh, bias, wlin, *, seq_len, bp):
    """One LSTM layer (both directions in a single kernel).

    x_parts : (P, T*Bp, Dp)  time-major, batch padded to Bp sublanes.
    wih     : (ndir, P, Dp, 4H)   whh : (ndir, H, 4H)   bias : (ndir, 1, 4H)
    wlin    : None for intermediate layers, else (ndir, H, O) -> fused
              mean-over-time + Linear partials are emitted instead of y.
    """
    ndir, P, Dp, G = wih.shape
    H = G // 4
    final = wlin is not None

    # Chunk the time axis so the (double-buffered) activation slabs stay small.
    per_step = 4 * bp * (2 * P * Dp + G + (0 if final else 2 * H))
    tc = _pick_t_chunk(seq_len, per_step)
    nc = seq_len // tc

    def x_map(d, i):            # backward direction walks chunks in reverse
        return (0, i + d * (nc - 1 - 2 * i), 0)

    in_specs = [
        pl.BlockSpec((P, tc * bp, Dp), x_map),
        pl.BlockSpec((None, P, Dp, G), lambda d, i: (d, 0, 0, 0)),
        pl.BlockSpec((None, H, G), lambda d, i: (d, 0, 0)),
        pl.BlockSpec((None, 1, G), lambda d, i: (d, 0, 0)),
    ]
    scratch = [
        pltpu.VMEM((tc * bp, G), jnp.float32),   # hoisted input projection
        pltpu.VMEM((bp, H), jnp.float32),        # h carry
        pltpu.VMEM((bp, H), jnp.float32),        # c carry
    ]
    args = [x_parts, wih, whh, bias]
    if final:
        O = wlin.shape[-1]
        in_specs.append(pl.BlockSpec((None, H, O), lambda d, i: (d, 0, 0)))
        out_specs = pl.BlockSpec((None, bp, O), lambda d, i: (d, 0, 0))
        out_shape = jax.ShapeDtypeStruct((ndir, bp, O), jnp.float32)
        scratch.append(pltpu.VMEM((bp, H), jnp.float32))   # running h-sum
        args.append(wlin)
    else:
        def y_map(d, i):
            return (d, i + d * (nc - 1 - 2 * i), 0)
        out_specs = pl.BlockSpec((None, tc * bp, H), y_map)
        out_shape = jax.ShapeDtypeStruct((ndir, seq_len * bp, H), jnp.float32)

    kernel = functools.partial(_lstm_dir_kernel, inv_t=1.0 / seq_len,
                               final=final)
    return pl.pallas_call(
        kernel,
        out_shape=out_shape,
        grid_spec=pltpu.PrefetchScalarGridSpec(
            num_scalar_prefetch=0,
            grid=(ndir, nc),
            in_specs=in_specs,
            out_specs=out_specs,
            scratch_shapes=scratch,
        ),
        compiler_params=pltpu.CompilerParams(
            # directions are independent -> megacore sharding on v7x;
            # time chunks are a sequential recurrence (carry in scratch).
            dimension_semantics=("parallel", "arbitrary"),
            vmem_limit_bytes=32 * 1024 * 1024,
        ),
    )(*args)


# ----------------------------------------------------------------------------
# Full module forward (glue in plain JAX, hot path in Pallas)
# ----------------------------------------------------------------------------
@jax.jit
def lstm_forward(x_btd, params, lin_w_t, lin_b):
    """Matches LSTM.forward: y, _ = lstm(x); return linear(y.mean(1))."""
    B, T, D = x_btd.shape
    ndir = params[0][1].shape[0]            # whh_s: (ndir, H, 4H)
    H = params[0][1].shape[1]
    O = lin_w_t.shape[-1]
    bp = ((B + 7) // 8) * 8                 # pad batch to full sublanes

    x = jnp.transpose(x_btd, (1, 0, 2)).astype(jnp.float32)    # (T, B, D)
    if bp != B:
        x = jnp.pad(x, ((0, 0), (0, bp - B), (0, 0)))
    x_parts = x.reshape(1, T * bp, D)       # (P=1, T*Bp, D) direction-major

    wlin = lin_w_t.reshape(ndir, H, O)      # per-direction slices of the Linear
    num_layers = len(params)
    for layer in range(num_layers):
        wih_s, whh_s, b_s = params[layer]
        if layer == num_layers - 1:
            parts = _lstm_layer_pallas(x_parts, wih_s, whh_s, b_s, wlin,
                                       seq_len=T, bp=bp)       # (ndir, Bp, O)
            return parts.sum(axis=0)[:B] + lin_b               # (B, O)
        x_parts = _lstm_layer_pallas(x_parts, wih_s, whh_s, b_s, None,
                                     seq_len=T, bp=bp)         # (ndir, T*Bp, H)


# ----------------------------------------------------------------------------
# Pure-JAX reference (same math, no Pallas) for a correctness check
# ----------------------------------------------------------------------------
def _layer_ref(x_tbd, w_ih_t, w_hh_t, b):
    T, B, _ = x_tbd.shape
    H = w_hh_t.shape[0]
    h = jnp.zeros((B, H), jnp.float32)
    c = jnp.zeros((B, H), jnp.float32)
    ys = []
    for t in range(T):
        gates = x_tbd[t] @ w_ih_t + h @ w_hh_t + b
        i = jax.nn.sigmoid(gates[:, :H])
        f = jax.nn.sigmoid(gates[:, H:2 * H])
        g = jnp.tanh(gates[:, 2 * H:3 * H])
        o = jax.nn.sigmoid(gates[:, 3 * H:])
        c = f * c + i * g
        h = o * jnp.tanh(c)
        ys.append(h)
    return jnp.stack(ys, 0)


def lstm_forward_ref(x_btd, params, lin_w_t, lin_b):
    x = jnp.transpose(x_btd, (1, 0, 2)).astype(jnp.float32)
    for wih_s, whh_s, b_s in params:
        ndir = wih_s.shape[0]
        outs = []
        for d in range(ndir):
            w_ih_t = wih_s[d].reshape(-1, wih_s.shape[-1])
            y = _layer_ref(x if d == 0 else x[::-1], w_ih_t, whh_s[d], b_s[d])
            outs.append(y if d == 0 else y[::-1])
        x = jnp.concatenate(outs, axis=-1) if ndir == 2 else outs[0]
    return jnp.mean(x, axis=0) @ lin_w_t + lin_b


# ----------------------------------------------------------------------------
# Deterministic parameter init (PyTorch-style uniform(-1/sqrt(H), 1/sqrt(H)))
# ----------------------------------------------------------------------------
def init_params(key, config):
    H = config.lstm_hidden
    ndir = 2 if config.lstm_bidirectional else 1
    k = 1.0 / float(H) ** 0.5

    params = []
    for layer in range(config.lstm_num_layers):
        in_dim = config.input_feature if layer == 0 else H * ndir
        P = 1 if layer == 0 else ndir
        Dp = in_dim // P
        wih_list, whh_list, b_list = [], [], []
        for _ in range(ndir):
            key, k1, k2, k3, k4 = jax.random.split(key, 5)
            w_ih = jax.random.uniform(k1, (4 * H, in_dim), jnp.float32, -k, k)
            w_hh = jax.random.uniform(k2, (4 * H, H), jnp.float32, -k, k)
            b_ih = jax.random.uniform(k3, (4 * H,), jnp.float32, -k, k)
            b_hh = jax.random.uniform(k4, (4 * H,), jnp.float32, -k, k)
            wih_list.append(w_ih.T.reshape(P, Dp, 4 * H))   # (P, Dp, 4H)
            whh_list.append(w_hh.T)                         # (H, 4H)
            b_list.append((b_ih + b_hh).reshape(1, 4 * H))  # (1, 4H)
        params.append((jnp.stack(wih_list),   # (ndir, P, Dp, 4H)
                       jnp.stack(whh_list),   # (ndir, H, 4H)
                       jnp.stack(b_list)))    # (ndir, 1, 4H)

    lin_in = H * ndir
    kl = 1.0 / float(lin_in) ** 0.5
    key, k5, k6 = jax.random.split(key, 3)
    lin_w = jax.random.uniform(k5, (config.output_feature, lin_in),
                               jnp.float32, -kl, kl)
    lin_b = jax.random.uniform(k6, (config.output_feature,),
                               jnp.float32, -kl, kl)
    return params, lin_w.T, lin_b          # lin_w_t: (ndir*H, O), lin_b: (O,)


# ----------------------------------------------------------------------------
if __name__ == "__main__":
    config = SimpleNamespace(
        input_feature=16,
        lstm_hidden=32,
        lstm_num_layers=2,
        lstm_bidirectional=True,
        output_feature=8,
    )
    B, T = 2, 8

    key = jax.random.PRNGKey(0)
    key, kx = jax.random.split(key)
    x = jax.random.normal(kx, (B, T, config.input_feature), jnp.float32)

    params, lin_w_t, lin_b = init_params(key, config)

    out = lstm_forward(x, params, lin_w_t, lin_b)
    out = jax.block_until_ready(out)
    assert out.shape == (B, config.output_feature), out.shape

    ref = lstm_forward_ref(x, params, lin_w_t, lin_b)
    assert jnp.allclose(out, ref, atol=2e-4, rtol=2e-4), (
        "Pallas output mismatch vs JAX reference"
    )

    print("KERNEL_OK")
</pallas_src>

<mosaic_0001>
module attributes {stable_mosaic.version = 11 : i64} {
  func.func @_lstm_dir_kernel(%arg0: i32, %arg1: i32, %arg2: memref<1x64x16xf32, #tpu.memory_space<vmem>>, %arg3: memref<1x1x16x128xf32, #tpu.memory_space<vmem>>, %arg4: memref<1x32x128xf32, #tpu.memory_space<vmem>>, %arg5: memref<1x1x128xf32, #tpu.memory_space<vmem>>, %arg6: memref<1x64x32xf32, #tpu.memory_space<vmem>>, %arg7: memref<64x128xf32, #tpu.memory_space<vmem>>, %arg8: memref<8x32xf32, #tpu.memory_space<vmem>>, %arg9: memref<8x32xf32, #tpu.memory_space<vmem>>) attributes {dimension_semantics = [#tpu.dimension_semantics<parallel>, #tpu.dimension_semantics<arbitrary>], iteration_bounds = array<i64: 2, 1>, scalar_prefetch = 0 : i64, scratch_operands = 3 : i64, tpu.core_type = #tpu.core_type<tc>, window_params = [{transform_indices = @transform_0, window_bounds = array<i64: 1, 64, 16>}, {transform_indices = @transform_1, window_bounds = array<i64: 1, 1, 16, 128>}, {transform_indices = @transform_2, window_bounds = array<i64: 1, 32, 128>}, {transform_indices = @transform_3, window_bounds = array<i64: 1, 1, 128>}, {transform_indices = @transform_4, window_bounds = array<i64: 1, 64, 32>}]} {
    %c1_i32 = arith.constant 1 : i32
    %0 = arith.cmpi eq, %arg0, %c1_i32 : i32
    %c0_i32 = arith.constant 0 : i32
    %1 = arith.cmpi eq, %arg1, %c0_i32 : i32
    %2 = arith.extui %1 : i1 to i32
    %c0_i32_0 = arith.constant 0 : i32
    %3 = arith.cmpi ne, %2, %c0_i32_0 : i32
    scf.if %3 {
      %cst_81 = arith.constant 0.000000e+00 : f32
      %250 = vector.broadcast %cst_81 : f32 to vector<8x32xf32>
      %c0_82 = arith.constant 0 : index
      %c0_83 = arith.constant 0 : index
      %251 = vector.load %arg8[%c0_82, %c0_83] : memref<8x32xf32, #tpu.memory_space<vmem>>, vector<8x32xf32>
      tpu.vector_store %arg8[%c0_82, %c0_83], %250 {strides = array<i32>} : memref<8x32xf32, #tpu.memory_space<vmem>>, vector<8x32xf32>,
      %cst_84 = arith.constant 0.000000e+00 : f32
      %252 = vector.broadcast %cst_84 : f32 to vector<8x32xf32>
      %c0_85 = arith.constant 0 : index
      %c0_86 = arith.constant 0 : index
      %253 = vector.load %arg9[%c0_85, %c0_86] : memref<8x32xf32, #tpu.memory_space<vmem>>, vector<8x32xf32>
      tpu.vector_store %arg9[%c0_85, %c0_86], %252 {strides = array<i32>} : memref<8x32xf32, #tpu.memory_space<vmem>>, vector<8x32xf32>,
    } else {
    }
    %c0 = arith.constant 0 : index
    %c0_1 = arith.constant 0 : index
    %c0_2 = arith.constant 0 : index
    %4 = vector.load %arg2[%c0, %c0_1, %c0_2] : memref<1x64x16xf32, #tpu.memory_space<vmem>>, vector<1x64x16xf32>
    %5 = vector.shape_cast %4 : vector<1x64x16xf32> to vector<64x16xf32>
    %c0_3 = arith.constant 0 : index
    %c0_4 = arith.constant 0 : index
    %c0_5 = arith.constant 0 : index
    %c0_6 = arith.constant 0 : index
    %6 = vector.load %arg3[%c0_3, %c0_4, %c0_5, %c0_6] : memref<1x1x16x128xf32, #tpu.memory_space<vmem>>, vector<1x1x16x128xf32>
    %7 = vector.shape_cast %6 : vector<1x1x16x128xf32> to vector<16x128xf32>
    %cst = arith.constant dense<0.000000e+00> : vector<64x128xf32>
    %8 = tpu.matmul %5, %7, %cst {dimension_numbers = #tpu.dot_dimension_numbers<[1], [0], [0], [1], [0, 0, 1, 1], [], []>} : vector<64x16xf32>, vector<16x128xf32>, vector<64x128xf32> -> vector<64x128xf32>
    %c0_7 = arith.constant 0 : index
    %c0_8 = arith.constant 0 : index
    %c0_9 = arith.constant 0 : index
    %9 = vector.load %arg5[%c0_7, %c0_8, %c0_9] : memref<1x1x128xf32, #tpu.memory_space<vmem>>, vector<1x1x128xf32>
    %10 = vector.shape_cast %9 : vector<1x1x128xf32> to vector<1x128xf32>
    %11 = vector.broadcast %10 : vector<1x128xf32> to vector<64x128xf32>
    %12 = arith.addf %8, %11 : vector<64x128xf32>
    %c0_10 = arith.constant 0 : index
    %c0_11 = arith.constant 0 : index
    %13 = vector.load %arg7[%c0_10, %c0_11] : memref<64x128xf32, #tpu.memory_space<vmem>>, vector<64x128xf32>
    tpu.vector_store %arg7[%c0_10, %c0_11], %12 {strides = array<i32>} : memref<64x128xf32, #tpu.memory_space<vmem>>, vector<64x128xf32>,
    %c0_12 = arith.constant 0 : index
    %c0_13 = arith.constant 0 : index
    %c0_14 = arith.constant 0 : index
    %14 = vector.load %arg4[%c0_12, %c0_13, %c0_14] : memref<1x32x128xf32, #tpu.memory_space<vmem>>, vector<1x32x128xf32>
    %15 = vector.shape_cast %14 : vector<1x32x128xf32> to vector<32x128xf32>
    %16 = tpu.iota {dimensions = array<i32: 1>} : vector<8x128xi32>
    %c64_i32 = arith.constant 64 : i32
    %17 = vector.broadcast %c64_i32 : i32 to vector<8x128xi32>
    %18 = arith.cmpi sge, %16, %17 : vector<8x128xi32>
    %c96_i32 = arith.constant 96 : i32
    %19 = vector.broadcast %c96_i32 : i32 to vector<8x128xi32>
    %20 = arith.cmpi slt, %16, %19 : vector<8x128xi32>
    %21 = arith.andi %18, %20 : vector<8x128xi1>
    %c0_15 = arith.constant 0 : index
    %c0_16 = arith.constant 0 : index
    %22 = vector.load %arg8[%c0_15, %c0_16] : memref<8x32xf32, #tpu.memory_space<vmem>>, vector<8x32xf32>
    %c0_17 = arith.constant 0 : index
    %c0_18 = arith.constant 0 : index
    %23 = vector.load %arg9[%c0_17, %c0_18] : memref<8x32xf32, #tpu.memory_space<vmem>>, vector<8x32xf32>
    %c0_i32_19 = arith.constant 0 : i32
    %c7_i32 = arith.constant 7 : i32
    %24 = arith.subi %c7_i32, %c0_i32_19 : i32
    %25 = arith.select %0, %24, %c0_i32_19 : i32
    %c8_i32 = arith.constant 8 : i32
    %26 = arith.muli %25, %c8_i32 : i32
    %27 = tpu.assume_multiple %26, 8 : i32
    %28 = arith.index_cast %27 : i32 to index
    %c0_20 = arith.constant 0 : index
    %29 = vector.load %arg7[%28, %c0_20] : memref<64x128xf32, #tpu.memory_space<vmem>>, vector<8x128xf32>
    %cst_21 = arith.constant dense<0.000000e+00> : vector<8x128xf32>
    %30 = tpu.matmul %22, %15, %cst_21 {dimension_numbers = #tpu.dot_dimension_numbers<[1], [0], [0], [1], [0, 0, 1, 1], [], []>} : vector<8x32xf32>, vector<32x128xf32>, vector<8x128xf32> -> vector<8x128xf32>
    %31 = arith.addf %29, %30 : vector<8x128xf32>
    %32 = math.tanh %31 : vector<8x128xf32>
    %33 = arith.negf %31 : vector<8x128xf32>
    %34 = math.exp %33 : vector<8x128xf32>
    %cst_22 = arith.constant 1.000000e+00 : f32
    %35 = vector.broadcast %cst_22 : f32 to vector<8x128xf32>
    %36 = arith.addf %35, %34 : vector<8x128xf32>
    %37 = arith.divf %35, %36 : vector<8x128xf32>
    %38 = arith.select %21, %32, %37 : vector<8x128xi1>, vector<8x128xf32>
    %39 = vector.extract_strided_slice %38 {offsets = [0, 0], sizes = [8, 32], strides = [1, 1]} : vector<8x128xf32> to vector<8x32xf32>
    %40 = vector.extract_strided_slice %38 {offsets = [0, 32], sizes = [8, 32], strides = [1, 1]} : vector<8x128xf32> to vector<8x32xf32>
    %41 = vector.extract_strided_slice %38 {offsets = [0, 64], sizes = [8, 32], strides = [1, 1]} : vector<8x128xf32> to vector<8x32xf32>
    %42 = vector.extract_strided_slice %38 {offsets = [0, 96], sizes = [8, 32], strides = [1, 1]} : vector<8x128xf32> to vector<8x32xf32>
    %43 = arith.mulf %40, %23 : vector<8x32xf32>
    %44 = arith.mulf %39, %41 : vector<8x32xf32>
    %45 = arith.addf %43, %44 : vector<8x32xf32>
    %46 = math.tanh %45 : vector<8x32xf32>
    %47 = arith.mulf %42, %46 : vector<8x32xf32>
    %c0_23 = arith.constant 0 : index
    %48 = arith.index_cast %27 : i32 to index
    %c0_24 = arith.constant 0 : index
    %49 = vector.load %arg6[%c0_23, %48, %c0_24] : memref<1x64x32xf32, #tpu.memory_space<vmem>>, vector<1x8x32xf32>
    %50 = vector.shape_cast %49 : vector<1x8x32xf32> to vector<8x32xf32>
    %51 = vector.shape_cast %47 : vector<8x32xf32> to vector<1x8x32xf32>
    tpu.vector_store %arg6[%c0_23, %48, %c0_24], %51 {strides = array<i32>} : memref<1x64x32xf32, #tpu.memory_space<vmem>>, vector<1x8x32xf32>,
    %c1_i32_25 = arith.constant 1 : i32
    %c7_i32_26 = arith.constant 7 : i32
    %52 = arith.subi %c7_i32_26, %c1_i32_25 : i32
    %53 = arith.select %0, %52, %c1_i32_25 : i32
    %c8_i32_27 = arith.constant 8 : i32
    %54 = arith.muli %53, %c8_i32_27 : i32
    %55 = tpu.assume_multiple %54, 8 : i32
    %56 = arith.index_cast %55 : i32 to index
    %c0_28 = arith.constant 0 : index
    %57 = vector.load %arg7[%56, %c0_28] : memref<64x128xf32, #tpu.memory_space<vmem>>, vector<8x128xf32>
    %cst_29 = arith.constant dense<0.000000e+00> : vector<8x128xf32>
    %58 = tpu.matmul %47, %15, %cst_29 {dimension_numbers = #tpu.dot_dimension_numbers<[1], [0], [0], [1], [0, 0, 1, 1], [], []>} : vector<8x32xf32>, vector<32x128xf32>, vector<8x128xf32> -> vector<8x128xf32>
    %59 = arith.addf %57, %58 : vector<8x128xf32>
    %60 = math.tanh %59 : vector<8x128xf32>
    %61 = arith.negf %59 : vector<8x128xf32>
    %62 = math.exp %61 : vector<8x128xf32>
    %cst_30 = arith.constant 1.000000e+00 : f32
    %63 = vector.broadcast %cst_30 : f32 to vector<8x128xf32>
    %64 = arith.addf %63, %62 : vector<8x128xf32>
    %65 = arith.divf %63, %64 : vector<8x128xf32>
    %66 = arith.select %21, %60, %65 : vector<8x128xi1>, vector<8x128xf32>
    %67 = vector.extract_strided_slice %66 {offsets = [0, 0], sizes = [8, 32], strides = [1, 1]} : vector<8x128xf32> to vector<8x32xf32>
    %68 = vector.extract_strided_slice %66 {offsets = [0, 32], sizes = [8, 32], strides = [1, 1]} : vector<8x128xf32> to vector<8x32xf32>
    %69 = vector.extract_strided_slice %66 {offsets = [0, 64], sizes = [8, 32], strides = [1, 1]} : vector<8x128xf32> to vector<8x32xf32>
    %70 = vector.extract_strided_slice %66 {offsets = [0, 96], sizes = [8, 32], strides = [1, 1]} : vector<8x128xf32> to vector<8x32xf32>
    %71 = arith.mulf %68, %45 : vector<8x32xf32>
    %72 = arith.mulf %67, %69 : vector<8x32xf32>
    %73 = arith.addf %71, %72 : vector<8x32xf32>
    %74 = math.tanh %73 : vector<8x32xf32>
    %75 = arith.mulf %70, %74 : vector<8x32xf32>
    %c0_31 = arith.constant 0 : index
    %76 = arith.index_cast %55 : i32 to index
    %c0_32 = arith.constant 0 : index
    %77 = vector.load %arg6[%c0_31, %76, %c0_32] : memref<1x64x32xf32, #tpu.memory_space<vmem>>, vector<1x8x32xf32>
    %78 = vector.shape_cast %77 : vector<1x8x32xf32> to vector<8x32xf32>
    %79 = vector.shape_cast %75 : vector<8x32xf32> to vector<1x8x32xf32>
    tpu.vector_store %arg6[%c0_31, %76, %c0_32], %79 {strides = array<i32>} : memref<1x64x32xf32, #tpu.memory_space<vmem>>, vector<1x8x32xf32>,
    %c2_i32 = arith.constant 2 : i32
    %c7_i32_33 = arith.constant 7 : i32
    %80 = arith.subi %c7_i32_33, %c2_i32 : i32
    %81 = arith.select %0, %80, %c2_i32 : i32
    %c8_i32_34 = arith.constant 8 : i32
    %82 = arith.muli %81, %c8_i32_34 : i32
    %83 = tpu.assume_multiple %82, 8 : i32
    %84 = arith.index_cast %83 : i32 to index
    %c0_35 = arith.constant 0 : index
    %85 = vector.load %arg7[%84, %c0_35] : memref<64x128xf32, #tpu.memory_space<vmem>>, vector<8x128xf32>
    %cst_36 = arith.constant dense<0.000000e+00> : vector<8x128xf32>
    %86 = tpu.matmul %75, %15, %cst_36 {dimension_numbers = #tpu.dot_dimension_numbers<[1], [0], [0], [1], [0, 0, 1, 1], [], []>} : vector<8x32xf32>, vector<32x128xf32>, vector<8x128xf32> -> vector<8x128xf32>
    %87 = arith.addf %85, %86 : vector<8x128xf32>
    %88 = math.tanh %87 : vector<8x128xf32>
    %89 = arith.negf %87 : vector<8x128xf32>
    %90 = math.exp %89 : vector<8x128xf32>
    %cst_37 = arith.constant 1.000000e+00 : f32
    %91 = vector.broadcast %cst_37 : f32 to vector<8x128xf32>
    %92 = arith.addf %91, %90 : vector<8x128xf32>
    %93 = arith.divf %91, %92 : vector<8x128xf32>
    %94 = arith.select %21, %88, %93 : vector<8x128xi1>, vector<8x128xf32>
    %95 = vector.extract_strided_slice %94 {offsets = [0, 0], sizes = [8, 32], strides = [1, 1]} : vector<8x128xf32> to vector<8x32xf32>
    %96 = vector.extract_strided_slice %94 {offsets = [0, 32], sizes = [8, 32], strides = [1, 1]} : vector<8x128xf32> to vector<8x32xf32>
    %97 = vector.extract_strided_slice %94 {offsets = [0, 64], sizes = [8, 32], strides = [1, 1]} : vector<8x128xf32> to vector<8x32xf32>
    %98 = vector.extract_strided_slice %94 {offsets = [0, 96], sizes = [8, 32], strides = [1, 1]} : vector<8x128xf32> to vector<8x32xf32>
    %99 = arith.mulf %96, %73 : vector<8x32xf32>
    %100 = arith.mulf %95, %97 : vector<8x32xf32>
    %101 = arith.addf %99, %100 : vector<8x32xf32>
    %102 = math.tanh %101 : vector<8x32xf32>
    %103 = arith.mulf %98, %102 : vector<8x32xf32>
    %c0_38 = arith.constant 0 : index
    %104 = arith.index_cast %83 : i32 to index
    %c0_39 = arith.constant 0 : index
    %105 = vector.load %arg6[%c0_38, %104, %c0_39] : memref<1x64x32xf32, #tpu.memory_space<vmem>>, vector<1x8x32xf32>
    %106 = vector.shape_cast %105 : vector<1x8x32xf32> to vector<8x32xf32>
    %107 = vector.shape_cast %103 : vector<8x32xf32> to vector<1x8x32xf32>
    tpu.vector_store %arg6[%c0_38, %104, %c0_39], %107 {strides = array<i32>} : memref<1x64x32xf32, #tpu.memory_space<vmem>>, vector<1x8x32xf32>,
    %c3_i32 = arith.constant 3 : i32
    %c7_i32_40 = arith.constant 7 : i32
    %108 = arith.subi %c7_i32_40, %c3_i32 : i32
    %109 = arith.select %0, %108, %c3_i32 : i32
    %c8_i32_41 = arith.constant 8 : i32
    %110 = arith.muli %109, %c8_i32_41 : i32
    %111 = tpu.assume_multiple %110, 8 : i32
    %112 = arith.index_cast %111 : i32 to index
    %c0_42 = arith.constant 0 : index
    %113 = vector.load %arg7[%112, %c0_42] : memref<64x128xf32, #tpu.memory_space<vmem>>, vector<8x128xf32>
    %cst_43 = arith.constant dense<0.000000e+00> : vector<8x128xf32>
    %114 = tpu.matmul %103, %15, %cst_43 {dimension_numbers = #tpu.dot_dimension_numbers<[1], [0], [0], [1], [0, 0, 1, 1], [], []>} : vector<8x32xf32>, vector<32x128xf32>, vector<8x128xf32> -> vector<8x128xf32>
    %115 = arith.addf %113, %114 : vector<8x128xf32>
    %116 = math.tanh %115 : vector<8x128xf32>
    %117 = arith.negf %115 : vector<8x128xf32>
    %118 = math.exp %117 : vector<8x128xf32>
    %cst_44 = arith.constant 1.000000e+00 : f32
    %119 = vector.broadcast %cst_44 : f32 to vector<8x128xf32>
    %120 = arith.addf %119, %118 : vector<8x128xf32>
    %121 = arith.divf %119, %120 : vector<8x128xf32>
    %122 = arith.select %21, %116, %121 : vector<8x128xi1>, vector<8x128xf32>
    %123 = vector.extract_strided_slice %122 {offsets = [0, 0], sizes = [8, 32], strides = [1, 1]} : vector<8x128xf32> to vector<8x32xf32>
    %124 = vector.extract_strided_slice %122 {offsets = [0, 32], sizes = [8, 32], strides = [1, 1]} : vector<8x128xf32> to vector<8x32xf32>
    %125 = vector.extract_strided_slice %122 {offsets = [0, 64], sizes = [8, 32], strides = [1, 1]} : vector<8x128xf32> to vector<8x32xf32>
    %126 = vector.extract_strided_slice %122 {offsets = [0, 96], sizes = [8, 32], strides = [1, 1]} : vector<8x128xf32> to vector<8x32xf32>
    %127 = arith.mulf %124, %101 : vector<8x32xf32>
    %128 = arith.mulf %123, %125 : vector<8x32xf32>
    %129 = arith.addf %127, %128 : vector<8x32xf32>
    %130 = math.tanh %129 : vector<8x32xf32>
    %131 = arith.mulf %126, %130 : vector<8x32xf32>
    %c0_45 = arith.constant 0 : index
    %132 = arith.index_cast %111 : i32 to index
    %c0_46 = arith.constant 0 : index
    %133 = vector.load %arg6[%c0_45, %132, %c0_46] : memref<1x64x32xf32, #tpu.memory_space<vmem>>, vector<1x8x32xf32>
    %134 = vector.shape_cast %133 : vector<1x8x32xf32> to vector<8x32xf32>
    %135 = vector.shape_cast %131 : vector<8x32xf32> to vector<1x8x32xf32>
    tpu.vector_store %arg6[%c0_45, %132, %c0_46], %135 {strides = array<i32>} : memref<1x64x32xf32, #tpu.memory_space<vmem>>, vector<1x8x32xf32>,
    %c4_i32 = arith.constant 4 : i32
    %c7_i32_47 = arith.constant 7 : i32
    %136 = arith.subi %c7_i32_47, %c4_i32 : i32
    %137 = arith.select %0, %136, %c4_i32 : i32
    %c8_i32_48 = arith.constant 8 : i32
    %138 = arith.muli %137, %c8_i32_48 : i32
    %139 = tpu.assume_multiple %138, 8 : i32
    %140 = arith.index_cast %139 : i32 to index
    %c0_49 = arith.constant 0 : index
    %141 = vector.load %arg7[%140, %c0_49] : memref<64x128xf32, #tpu.memory_space<vmem>>, vector<8x128xf32>
    %cst_50 = arith.constant dense<0.000000e+00> : vector<8x128xf32>
    %142 = tpu.matmul %131, %15, %cst_50 {dimension_numbers = #tpu.dot_dimension_numbers<[1], [0], [0], [1], [0, 0, 1, 1], [], []>} : vector<8x32xf32>, vector<32x128xf32>, vector<8x128xf32> -> vector<8x128xf32>
    %143 = arith.addf %141, %142 : vector<8x128xf32>
    %144 = math.tanh %143 : vector<8x128xf32>
    %145 = arith.negf %143 : vector<8x128xf32>
    %146 = math.exp %145 : vector<8x128xf32>
    %cst_51 = arith.constant 1.000000e+00 : f32
    %147 = vector.broadcast %cst_51 : f32 to vector<8x128xf32>
    %148 = arith.addf %147, %146 : vector<8x128xf32>
    %149 = arith.divf %147, %148 : vector<8x128xf32>
    %150 = arith.select %21, %144, %149 : vector<8x128xi1>, vector<8x128xf32>
    %151 = vector.extract_strided_slice %150 {offsets = [0, 0], sizes = [8, 32], strides = [1, 1]} : vector<8x128xf32> to vector<8x32xf32>
    %152 = vector.extract_strided_slice %150 {offsets = [0, 32], sizes = [8, 32], strides = [1, 1]} : vector<8x128xf32> to vector<8x32xf32>
    %153 = vector.extract_strided_slice %150 {offsets = [0, 64], sizes = [8, 32], strides = [1, 1]} : vector<8x128xf32> to vector<8x32xf32>
    %154 = vector.extract_strided_slice %150 {offsets = [0, 96], sizes = [8, 32], strides = [1, 1]} : vector<8x128xf32> to vector<8x32xf32>
    %155 = arith.mulf %152, %129 : vector<8x32xf32>
    %156 = arith.mulf %151, %153 : vector<8x32xf32>
    %157 = arith.addf %155, %156 : vector<8x32xf32>
    %158 = math.tanh %157 : vector<8x32xf32>
    %159 = arith.mulf %154, %158 : vector<8x32xf32>
    %c0_52 = arith.constant 0 : index
    %160 = arith.index_cast %139 : i32 to index
    %c0_53 = arith.constant 0 : index
    %161 = vector.load %arg6[%c0_52, %160, %c0_53] : memref<1x64x32xf32, #tpu.memory_space<vmem>>, vector<1x8x32xf32>
    %162 = vector.shape_cast %161 : vector<1x8x32xf32> to vector<8x32xf32>
    %163 = vector.shape_cast %159 : vector<8x32xf32> to vector<1x8x32xf32>
    tpu.vector_store %arg6[%c0_52, %160, %c0_53], %163 {strides = array<i32>} : memref<1x64x32xf32, #tpu.memory_space<vmem>>, vector<1x8x32xf32>,
    %c5_i32 = arith.constant 5 : i32
    %c7_i32_54 = arith.constant 7 : i32
    %164 = arith.subi %c7_i32_54, %c5_i32 : i32
    %165 = arith.select %0, %164, %c5_i32 : i32
    %c8_i32_55 = arith.constant 8 : i32
    %166 = arith.muli %165, %c8_i32_55 : i32
    %167 = tpu.assume_multiple %166, 8 : i32
    %168 = arith.index_cast %167 : i32 to index
    %c0_56 = arith.constant 0 : index
    %169 = vector.load %arg7[%168, %c0_56] : memref<64x128xf32, #tpu.memory_space<vmem>>, vector<8x128xf32>
    %cst_57 = arith.constant dense<0.000000e+00> : vector<8x128xf32>
    %170 = tpu.matmul %159, %15, %cst_57 {dimension_numbers = #tpu.dot_dimension_numbers<[1], [0], [0], [1], [0, 0, 1, 1], [], []>} : vector<8x32xf32>, vector<32x128xf32>, vector<8x128xf32> -> vector<8x128xf32>
    %171 = arith.addf %169, %170 : vector<8x128xf32>
    %172 = math.tanh %171 : vector<8x128xf32>
    %173 = arith.negf %171 : vector<8x128xf32>
    %174 = math.exp %173 : vector<8x128xf32>
    %cst_58 = arith.constant 1.000000e+00 : f32
    %175 = vector.broadcast %cst_58 : f32 to vector<8x128xf32>
    %176 = arith.addf %175, %174 : vector<8x128xf32>
    %177 = arith.divf %175, %176 : vector<8x128xf32>
    %178 = arith.select %21, %172, %177 : vector<8x128xi1>, vector<8x128xf32>
    %179 = vector.extract_strided_slice %178 {offsets = [0, 0], sizes = [8, 32], strides = [1, 1]} : vector<8x128xf32> to vector<8x32xf32>
    %180 = vector.extract_strided_slice %178 {offsets = [0, 32], sizes = [8, 32], strides = [1, 1]} : vector<8x128xf32> to vector<8x32xf32>
    %181 = vector.extract_strided_slice %178 {offsets = [0, 64], sizes = [8, 32], strides = [1, 1]} : vector<8x128xf32> to vector<8x32xf32>
    %182 = vector.extract_strided_slice %178 {offsets = [0, 96], sizes = [8, 32], strides = [1, 1]} : vector<8x128xf32> to vector<8x32xf32>
    %183 = arith.mulf %180, %157 : vector<8x32xf32>
    %184 = arith.mulf %179, %181 : vector<8x32xf32>
    %185 = arith.addf %183, %184 : vector<8x32xf32>
    %186 = math.tanh %185 : vector<8x32xf32>
    %187 = arith.mulf %182, %186 : vector<8x32xf32>
    %c0_59 = arith.constant 0 : index
    %188 = arith.index_cast %167 : i32 to index
    %c0_60 = arith.constant 0 : index
    %189 = vector.load %arg6[%c0_59, %188, %c0_60] : memref<1x64x32xf32, #tpu.memory_space<vmem>>, vector<1x8x32xf32>
    %190 = vector.shape_cast %189 : vector<1x8x32xf32> to vector<8x32xf32>
    %191 = vector.shape_cast %187 : vector<8x32xf32> to vector<1x8x32xf32>
    tpu.vector_store %arg6[%c0_59, %188, %c0_60], %191 {strides = array<i32>} : memref<1x64x32xf32, #tpu.memory_space<vmem>>, vector<1x8x32xf32>,
    %c6_i32 = arith.constant 6 : i32
    %c7_i32_61 = arith.constant 7 : i32
    %192 = arith.subi %c7_i32_61, %c6_i32 : i32
    %193 = arith.select %0, %192, %c6_i32 : i32
    %c8_i32_62 = arith.constant 8 : i32
    %194 = arith.muli %193, %c8_i32_62 : i32
    %195 = tpu.assume_multiple %194, 8 : i32
    %196 = arith.index_cast %195 : i32 to index
    %c0_63 = arith.constant 0 : index
    %197 = vector.load %arg7[%196, %c0_63] : memref<64x128xf32, #tpu.memory_space<vmem>>, vector<8x128xf32>
    %cst_64 = arith.constant dense<0.000000e+00> : vector<8x128xf32>
    %198 = tpu.matmul %187, %15, %cst_64 {dimension_numbers = #tpu.dot_dimension_numbers<[1], [0], [0], [1], [0, 0, 1, 1], [], []>} : vector<8x32xf32>, vector<32x128xf32>, vector<8x128xf32> -> vector<8x128xf32>
    %199 = arith.addf %197, %198 : vector<8x128xf32>
    %200 = math.tanh %199 : vector<8x128xf32>
    %201 = arith.negf %199 : vector<8x128xf32>
    %202 = math.exp %201 : vector<8x128xf32>
    %cst_65 = arith.constant 1.000000e+00 : f32
    %203 = vector.broadcast %cst_65 : f32 to vector<8x128xf32>
    %204 = arith.addf %203, %202 : vector<8x128xf32>
    %205 = arith.divf %203, %204 : vector<8x128xf32>
    %206 = arith.select %21, %200, %205 : vector<8x128xi1>, vector<8x128xf32>
    %207 = vector.extract_strided_slice %206 {offsets = [0, 0], sizes = [8, 32], strides = [1, 1]} : vector<8x128xf32> to vector<8x32xf32>
    %208 = vector.extract_strided_slice %206 {offsets = [0, 32], sizes = [8, 32], strides = [1, 1]} : vector<8x128xf32> to vector<8x32xf32>
    %209 = vector.extract_strided_slice %206 {offsets = [0, 64], sizes = [8, 32], strides = [1, 1]} : vector<8x128xf32> to vector<8x32xf32>
    %210 = vector.extract_strided_slice %206 {offsets = [0, 96], sizes = [8, 32], strides = [1, 1]} : vector<8x128xf32> to vector<8x32xf32>
    %211 = arith.mulf %208, %185 : vector<8x32xf32>
    %212 = arith.mulf %207, %209 : vector<8x32xf32>
    %213 = arith.addf %211, %212 : vector<8x32xf32>
    %214 = math.tanh %213 : vector<8x32xf32>
    %215 = arith.mulf %210, %214 : vector<8x32xf32>
    %c0_66 = arith.constant 0 : index
    %216 = arith.index_cast %195 : i32 to index
    %c0_67 = arith.constant 0 : index
    %217 = vector.load %arg6[%c0_66, %216, %c0_67] : memref<1x64x32xf32, #tpu.memory_space<vmem>>, vector<1x8x32xf32>
    %218 = vector.shape_cast %217 : vector<1x8x32xf32> to vector<8x32xf32>
    %219 = vector.shape_cast %215 : vector<8x32xf32> to vector<1x8x32xf32>
    tpu.vector_store %arg6[%c0_66, %216, %c0_67], %219 {strides = array<i32>} : memref<1x64x32xf32, #tpu.memory_space<vmem>>, vector<1x8x32xf32>,
    %c7_i32_68 = arith.constant 7 : i32
    %c7_i32_69 = arith.constant 7 : i32
    %220 = arith.subi %c7_i32_69, %c7_i32_68 : i32
    %221 = arith.select %0, %220, %c7_i32_68 : i32
    %c8_i32_70 = arith.constant 8 : i32
    %222 = arith.muli %221, %c8_i32_70 : i32
    %223 = tpu.assume_multiple %222, 8 : i32
    %224 = arith.index_cast %223 : i32 to index
    %c0_71 = arith.constant 0 : index
    %225 = vector.load %arg7[%224, %c0_71] : memref<64x128xf32, #tpu.memory_space<vmem>>, vector<8x128xf32>
    %cst_72 = arith.constant dense<0.000000e+00> : vector<8x128xf32>
    %226 = tpu.matmul %215, %15, %cst_72 {dimension_numbers = #tpu.dot_dimension_numbers<[1], [0], [0], [1], [0, 0, 1, 1], [], []>} : vector<8x32xf32>, vector<32x128xf32>, vector<8x128xf32> -> vector<8x128xf32>
    %227 = arith.addf %225, %226 : vector<8x128xf32>
    %228 = math.tanh %227 : vector<8x128xf32>
    %229 = arith.negf %227 : vector<8x128xf32>
    %230 = math.exp %229 : vector<8x128xf32>
    %cst_73 = arith.constant 1.000000e+00 : f32
    %231 = vector.broadcast %cst_73 : f32 to vector<8x128xf32>
    %232 = arith.addf %231, %230 : vector<8x128xf32>
    %233 = arith.divf %231, %232 : vector<8x128xf32>
    %234 = arith.select %21, %228, %233 : vector<8x128xi1>, vector<8x128xf32>
    %235 = vector.extract_strided_slice %234 {offsets = [0, 0], sizes = [8, 32], strides = [1, 1]} : vector<8x128xf32> to vector<8x32xf32>
    %236 = vector.extract_strided_slice %234 {offsets = [0, 32], sizes = [8, 32], strides = [1, 1]} : vector<8x128xf32> to vector<8x32xf32>
    %237 = vector.extract_strided_slice %234 {offsets = [0, 64], sizes = [8, 32], strides = [1, 1]} : vector<8x128xf32> to vector<8x32xf32>
    %238 = vector.extract_strided_slice %234 {offsets = [0, 96], sizes = [8, 32], strides = [1, 1]} : vector<8x128xf32> to vector<8x32xf32>
    %239 = arith.mulf %236, %213 : vector<8x32xf32>
    %240 = arith.mulf %235, %237 : vector<8x32xf32>
    %241 = arith.addf %239, %240 : vector<8x32xf32>
    %242 = math.tanh %241 : vector<8x32xf32>
    %243 = arith.mulf %238, %242 : vector<8x32xf32>
    %c0_74 = arith.constant 0 : index
    %244 = arith.index_cast %223 : i32 to index
    %c0_75 = arith.constant 0 : index
    %245 = vector.load %arg6[%c0_74, %244, %c0_75] : memref<1x64x32xf32, #tpu.memory_space<vmem>>, vector<1x8x32xf32>
    %246 = vector.shape_cast %245 : vector<1x8x32xf32> to vector<8x32xf32>
    %247 = vector.shape_cast %243 : vector<8x32xf32> to vector<1x8x32xf32>
    tpu.vector_store %arg6[%c0_74, %244, %c0_75], %247 {strides = array<i32>} : memref<1x64x32xf32, #tpu.memory_space<vmem>>, vector<1x8x32xf32>,
    %c8_i32_76 = arith.constant 8 : i32
    %c0_77 = arith.constant 0 : index
    %c0_78 = arith.constant 0 : index
    %248 = vector.load %arg8[%c0_77, %c0_78] : memref<8x32xf32, #tpu.memory_space<vmem>>, vector<8x32xf32>
    tpu.vector_store %arg8[%c0_77, %c0_78], %243 {strides = array<i32>} : memref<8x32xf32, #tpu.memory_space<vmem>>, vector<8x32xf32>,
    %c0_79 = arith.constant 0 : index
    %c0_80 = arith.constant 0 : index
    %249 = vector.load %arg9[%c0_79, %c0_80] : memref<8x32xf32, #tpu.memory_space<vmem>>, vector<8x32xf32>
    tpu.vector_store %arg9[%c0_79, %c0_80], %241 {strides = array<i32>} : memref<8x32xf32, #tpu.memory_space<vmem>>, vector<8x32xf32>,
    return
  }
  func.func @transform_0(%arg0: i32, %arg1: i32) -> (i32, i32, i32) {
    %c2_i32 = arith.constant 2 : i32
    %0 = arith.muli %c2_i32, %arg1 : i32
    %c0_i32 = arith.constant 0 : i32
    %1 = arith.subi %c0_i32, %0 : i32
    %2 = arith.muli %arg0, %1 : i32
    %3 = arith.addi %arg1, %2 : i32
    %c0_i32_0 = arith.constant 0 : i32
    %c0_i32_1 = arith.constant 0 : i32
    %c0_i32_2 = arith.constant 0 : i32
    return %c0_i32_0, %3, %c0_i32_1 : i32, i32, i32
  }
  func.func @transform_1(%arg0: i32, %arg1: i32) -> (i32, i32, i32, i32) {
    %c0_i32 = arith.constant 0 : i32
    %c0_i32_0 = arith.constant 0 : i32
    %c0_i32_1 = arith.constant 0 : i32
    %c0_i32_2 = arith.constant 0 : i32
    return %arg0, %c0_i32, %c0_i32_0, %c0_i32_1 : i32, i32, i32, i32
  }
  func.func @transform_2(%arg0: i32, %arg1: i32) -> (i32, i32, i32) {
    %c0_i32 = arith.constant 0 : i32
    %c0_i32_0 = arith.constant 0 : i32
    %c0_i32_1 = arith.constant 0 : i32
    return %arg0, %c0_i32, %c0_i32_0 : i32, i32, i32
  }
  func.func @transform_3(%arg0: i32, %arg1: i32) -> (i32, i32, i32) {
    %c0_i32 = arith.constant 0 : i32
    %c0_i32_0 = arith.constant 0 : i32
    %c0_i32_1 = arith.constant 0 : i32
    return %arg0, %c0_i32, %c0_i32_0 : i32, i32, i32
  }
  func.func @transform_4(%arg0: i32, %arg1: i32) -> (i32, i32, i32) {
    %c2_i32 = arith.constant 2 : i32
    %0 = arith.muli %c2_i32, %arg1 : i32
    %c0_i32 = arith.constant 0 : i32
    %1 = arith.subi %c0_i32, %0 : i32
    %2 = arith.muli %arg0, %1 : i32
    %3 = arith.addi %arg1, %2 : i32
    %c0_i32_0 = arith.constant 0 : i32
    %c0_i32_1 = arith.constant 0 : i32
    return %arg0, %3, %c0_i32_0 : i32, i32, i32
  }
}

module attributes {stable_mosaic.version = 11 : i64} {
  func.func @_lstm_dir_kernel(%arg0: i32, %arg1: i32, %arg2: memref<2x64x32xf32, #tpu.memory_space<vmem>>, %arg3: memref<1x2x32x128xf32, #tpu.memory_space<vmem>>, %arg4: memref<1x32x128xf32, #tpu.memory_space<vmem>>, %arg5: memref<1x1x128xf32, #tpu.memory_space<vmem>>, %arg6: memref<1x32x8xf32, #tpu.memory_space<vmem>>, %arg7: memref<1x8x8xf32, #tpu.memory_space<vmem>>, %arg8: memref<64x128xf32, #tpu.memory_space<vmem>>, %arg9: memref<8x32xf32, #tpu.memory_space<vmem>>, %arg10: memref<8x32xf32, #tpu.memory_space<vmem>>, %arg11: memref<8x32xf32, #tpu.memory_space<vmem>>) attributes {dimension_semantics = [#tpu.dimension_semantics<parallel>, #tpu.dimension_semantics<arbitrary>], iteration_bounds = array<i64: 2, 1>, scalar_prefetch = 0 : i64, scratch_operands = 4 : i64, tpu.core_type = #tpu.core_type<tc>, window_params = [{transform_indices = @transform_0, window_bounds = array<i64: 2, 64, 32>}, {transform_indices = @transform_1, window_bounds = array<i64: 1, 2, 32, 128>}, {transform_indices = @transform_2, window_bounds = array<i64: 1, 32, 128>}, {transform_indices = @transform_3, window_bounds = array<i64: 1, 1, 128>}, {transform_indices = @transform_4, window_bounds = array<i64: 1, 32, 8>}, {transform_indices = @transform_5, window_bounds = array<i64: 1, 8, 8>}]} {
    %c1_i32 = arith.constant 1 : i32
    %0 = arith.cmpi eq, %arg0, %c1_i32 : i32
    %c0_i32 = arith.constant 0 : i32
    %1 = arith.cmpi eq, %arg1, %c0_i32 : i32
    %2 = arith.extui %1 : i1 to i32
    %c0_i32_0 = arith.constant 0 : i32
    %3 = arith.cmpi ne, %2, %c0_i32_0 : i32
    scf.if %3 {
      %cst_78 = arith.constant 0.000000e+00 : f32
      %237 = vector.broadcast %cst_78 : f32 to vector<8x32xf32>
      %c0_79 = arith.constant 0 : index
      %c0_80 = arith.constant 0 : index
      %238 = vector.load %arg9[%c0_79, %c0_80] : memref<8x32xf32, #tpu.memory_space<vmem>>, vector<8x32xf32>
      tpu.vector_store %arg9[%c0_79, %c0_80], %237 {strides = array<i32>} : memref<8x32xf32, #tpu.memory_space<vmem>>, vector<8x32xf32>,
      %cst_81 = arith.constant 0.000000e+00 : f32
      %239 = vector.broadcast %cst_81 : f32 to vector<8x32xf32>
      %c0_82 = arith.constant 0 : index
      %c0_83 = arith.constant 0 : index
      %240 = vector.load %arg10[%c0_82, %c0_83] : memref<8x32xf32, #tpu.memory_space<vmem>>, vector<8x32xf32>
      tpu.vector_store %arg10[%c0_82, %c0_83], %239 {strides = array<i32>} : memref<8x32xf32, #tpu.memory_space<vmem>>, vector<8x32xf32>,
      %cst_84 = arith.constant 0.000000e+00 : f32
      %241 = vector.broadcast %cst_84 : f32 to vector<8x32xf32>
      %c0_85 = arith.constant 0 : index
      %c0_86 = arith.constant 0 : index
      %242 = vector.load %arg11[%c0_85, %c0_86] : memref<8x32xf32, #tpu.memory_space<vmem>>, vector<8x32xf32>
      tpu.vector_store %arg11[%c0_85, %c0_86], %241 {strides = array<i32>} : memref<8x32xf32, #tpu.memory_space<vmem>>, vector<8x32xf32>,
    } else {
    }
    %c0 = arith.constant 0 : index
    %c0_1 = arith.constant 0 : index
    %c0_2 = arith.constant 0 : index
    %4 = vector.load %arg2[%c0, %c0_1, %c0_2] : memref<2x64x32xf32, #tpu.memory_space<vmem>>, vector<1x64x32xf32>
    %5 = vector.shape_cast %4 : vector<1x64x32xf32> to vector<64x32xf32>
    %c0_3 = arith.constant 0 : index
    %c0_4 = arith.constant 0 : index
    %c0_5 = arith.constant 0 : index
    %c0_6 = arith.constant 0 : index
    %6 = vector.load %arg3[%c0_3, %c0_4, %c0_5, %c0_6] : memref<1x2x32x128xf32, #tpu.memory_space<vmem>>, vector<1x1x32x128xf32>
    %7 = vector.shape_cast %6 : vector<1x1x32x128xf32> to vector<32x128xf32>
    %cst = arith.constant dense<0.000000e+00> : vector<64x128xf32>
    %8 = tpu.matmul %5, %7, %cst {dimension_numbers = #tpu.dot_dimension_numbers<[1], [0], [0], [1], [0, 0, 1, 1], [], []>} : vector<64x32xf32>, vector<32x128xf32>, vector<64x128xf32> -> vector<64x128xf32>
    %c1 = arith.constant 1 : index
    %c0_7 = arith.constant 0 : index
    %c0_8 = arith.constant 0 : index
    %9 = vector.load %arg2[%c1, %c0_7, %c0_8] : memref<2x64x32xf32, #tpu.memory_space<vmem>>, vector<1x64x32xf32>
    %10 = vector.shape_cast %9 : vector<1x64x32xf32> to vector<64x32xf32>
    %c0_9 = arith.constant 0 : index
    %c1_10 = arith.constant 1 : index
    %c0_11 = arith.constant 0 : index
    %c0_12 = arith.constant 0 : index
    %11 = vector.load %arg3[%c0_9, %c1_10, %c0_11, %c0_12] : memref<1x2x32x128xf32, #tpu.memory_space<vmem>>, vector<1x1x32x128xf32>
    %12 = vector.shape_cast %11 : vector<1x1x32x128xf32> to vector<32x128xf32>
    %cst_13 = arith.constant dense<0.000000e+00> : vector<64x128xf32>
    %13 = tpu.matmul %10, %12, %cst_13 {dimension_numbers = #tpu.dot_dimension_numbers<[1], [0], [0], [1], [0, 0, 1, 1], [], []>} : vector<64x32xf32>, vector<32x128xf32>, vector<64x128xf32> -> vector<64x128xf32>
    %14 = arith.addf %8, %13 : vector<64x128xf32>
    %c0_14 = arith.constant 0 : index
    %c0_15 = arith.constant 0 : index
    %c0_16 = arith.constant 0 : index
    %15 = vector.load %arg5[%c0_14, %c0_15, %c0_16] : memref<1x1x128xf32, #tpu.memory_space<vmem>>, vector<1x1x128xf32>
    %16 = vector.shape_cast %15 : vector<1x1x128xf32> to vector<1x128xf32>
    %17 = vector.broadcast %16 : vector<1x128xf32> to vector<64x128xf32>
    %18 = arith.addf %14, %17 : vector<64x128xf32>
    %c0_17 = arith.constant 0 : index
    %c0_18 = arith.constant 0 : index
    %19 = vector.load %arg8[%c0_17, %c0_18] : memref<64x128xf32, #tpu.memory_space<vmem>>, vector<64x128xf32>
    tpu.vector_store %arg8[%c0_17, %c0_18], %18 {strides = array<i32>} : memref<64x128xf32, #tpu.memory_space<vmem>>, vector<64x128xf32>,
    %c0_19 = arith.constant 0 : index
    %c0_20 = arith.constant 0 : index
    %c0_21 = arith.constant 0 : index
    %20 = vector.load %arg4[%c0_19, %c0_20, %c0_21] : memref<1x32x128xf32, #tpu.memory_space<vmem>>, vector<1x32x128xf32>
    %21 = vector.shape_cast %20 : vector<1x32x128xf32> to vector<32x128xf32>
    %22 = tpu.iota {dimensions = array<i32: 1>} : vector<8x128xi32>
    %c64_i32 = arith.constant 64 : i32
    %23 = vector.broadcast %c64_i32 : i32 to vector<8x128xi32>
    %24 = arith.cmpi sge, %22, %23 : vector<8x128xi32>
    %c96_i32 = arith.constant 96 : i32
    %25 = vector.broadcast %c96_i32 : i32 to vector<8x128xi32>
    %26 = arith.cmpi slt, %22, %25 : vector<8x128xi32>
    %27 = arith.andi %24, %26 : vector<8x128xi1>
    %c0_22 = arith.constant 0 : index
    %c0_23 = arith.constant 0 : index
    %28 = vector.load %arg9[%c0_22, %c0_23] : memref<8x32xf32, #tpu.memory_space<vmem>>, vector<8x32xf32>
    %c0_24 = arith.constant 0 : index
    %c0_25 = arith.constant 0 : index
    %29 = vector.load %arg10[%c0_24, %c0_25] : memref<8x32xf32, #tpu.memory_space<vmem>>, vector<8x32xf32>
    %c0_26 = arith.constant 0 : index
    %c0_27 = arith.constant 0 : index
    %30 = vector.load %arg11[%c0_26, %c0_27] : memref<8x32xf32, #tpu.memory_space<vmem>>, vector<8x32xf32>
    %c0_i32_28 = arith.constant 0 : i32
    %c7_i32 = arith.constant 7 : i32
    %31 = arith.subi %c7_i32, %c0_i32_28 : i32
    %32 = arith.select %0, %31, %c0_i32_28 : i32
    %c8_i32 = arith.constant 8 : i32
    %33 = arith.muli %32, %c8_i32 : i32
    %34 = tpu.assume_multiple %33, 8 : i32
    %35 = arith.index_cast %34 : i32 to index
    %c0_29 = arith.constant 0 : index
    %36 = vector.load %arg8[%35, %c0_29] : memref<64x128xf32, #tpu.memory_space<vmem>>, vector<8x128xf32>
    %cst_30 = arith.constant dense<0.000000e+00> : vector<8x128xf32>
    %37 = tpu.matmul %28, %21, %cst_30 {dimension_numbers = #tpu.dot_dimension_numbers<[1], [0], [0], [1], [0, 0, 1, 1], [], []>} : vector<8x32xf32>, vector<32x128xf32>, vector<8x128xf32> -> vector<8x128xf32>
    %38 = arith.addf %36, %37 : vector<8x128xf32>
    %39 = math.tanh %38 : vector<8x128xf32>
    %40 = arith.negf %38 : vector<8x128xf32>
    %41 = math.exp %40 : vector<8x128xf32>
    %cst_31 = arith.constant 1.000000e+00 : f32
    %42 = vector.broadcast %cst_31 : f32 to vector<8x128xf32>
    %43 = arith.addf %42, %41 : vector<8x128xf32>
    %44 = arith.divf %42, %43 : vector<8x128xf32>
    %45 = arith.select %27, %39, %44 : vector<8x128xi1>, vector<8x128xf32>
    %46 = vector.extract_strided_slice %45 {offsets = [0, 0], sizes = [8, 32], strides = [1, 1]} : vector<8x128xf32> to vector<8x32xf32>
    %47 = vector.extract_strided_slice %45 {offsets = [0, 32], sizes = [8, 32], strides = [1, 1]} : vector<8x128xf32> to vector<8x32xf32>
    %48 = vector.extract_strided_slice %45 {offsets = [0, 64], sizes = [8, 32], strides = [1, 1]} : vector<8x128xf32> to vector<8x32xf32>
    %49 = vector.extract_strided_slice %45 {offsets = [0, 96], sizes = [8, 32], strides = [1, 1]} : vector<8x128xf32> to vector<8x32xf32>
    %50 = arith.mulf %47, %29 : vector<8x32xf32>
    %51 = arith.mulf %46, %48 : vector<8x32xf32>
    %52 = arith.addf %50, %51 : vector<8x32xf32>
    %53 = math.tanh %52 : vector<8x32xf32>
    %54 = arith.mulf %49, %53 : vector<8x32xf32>
    %55 = arith.addf %30, %54 : vector<8x32xf32>
    %c1_i32_32 = arith.constant 1 : i32
    %c7_i32_33 = arith.constant 7 : i32
    %56 = arith.subi %c7_i32_33, %c1_i32_32 : i32
    %57 = arith.select %0, %56, %c1_i32_32 : i32
    %c8_i32_34 = arith.constant 8 : i32
    %58 = arith.muli %57, %c8_i32_34 : i32
    %59 = tpu.assume_multiple %58, 8 : i32
    %60 = arith.index_cast %59 : i32 to index
    %c0_35 = arith.constant 0 : index
    %61 = vector.load %arg8[%60, %c0_35] : memref<64x128xf32, #tpu.memory_space<vmem>>, vector<8x128xf32>
    %cst_36 = arith.constant dense<0.000000e+00> : vector<8x128xf32>
    %62 = tpu.matmul %54, %21, %cst_36 {dimension_numbers = #tpu.dot_dimension_numbers<[1], [0], [0], [1], [0, 0, 1, 1], [], []>} : vector<8x32xf32>, vector<32x128xf32>, vector<8x128xf32> -> vector<8x128xf32>
    %63 = arith.addf %61, %62 : vector<8x128xf32>
    %64 = math.tanh %63 : vector<8x128xf32>
    %65 = arith.negf %63 : vector<8x128xf32>
    %66 = math.exp %65 : vector<8x128xf32>
    %cst_37 = arith.constant 1.000000e+00 : f32
    %67 = vector.broadcast %cst_37 : f32 to vector<8x128xf32>
    %68 = arith.addf %67, %66 : vector<8x128xf32>
    %69 = arith.divf %67, %68 : vector<8x128xf32>
    %70 = arith.select %27, %64, %69 : vector<8x128xi1>, vector<8x128xf32>
    %71 = vector.extract_strided_slice %70 {offsets = [0, 0], sizes = [8, 32], strides = [1, 1]} : vector<8x128xf32> to vector<8x32xf32>
    %72 = vector.extract_strided_slice %70 {offsets = [0, 32], sizes = [8, 32], strides = [1, 1]} : vector<8x128xf32> to vector<8x32xf32>
    %73 = vector.extract_strided_slice %70 {offsets = [0, 64], sizes = [8, 32], strides = [1, 1]} : vector<8x128xf32> to vector<8x32xf32>
    %74 = vector.extract_strided_slice %70 {offsets = [0, 96], sizes = [8, 32], strides = [1, 1]} : vector<8x128xf32> to vector<8x32xf32>
    %75 = arith.mulf %72, %52 : vector<8x32xf32>
    %76 = arith.mulf %71, %73 : vector<8x32xf32>
    %77 = arith.addf %75, %76 : vector<8x32xf32>
    %78 = math.tanh %77 : vector<8x32xf32>
    %79 = arith.mulf %74, %78 : vector<8x32xf32>
    %80 = arith.addf %55, %79 : vector<8x32xf32>
    %c2_i32 = arith.constant 2 : i32
    %c7_i32_38 = arith.constant 7 : i32
    %81 = arith.subi %c7_i32_38, %c2_i32 : i32
    %82 = arith.select %0, %81, %c2_i32 : i32
    %c8_i32_39 = arith.constant 8 : i32
    %83 = arith.muli %82, %c8_i32_39 : i32
    %84 = tpu.assume_multiple %83, 8 : i32
    %85 = arith.index_cast %84 : i32 to index
    %c0_40 = arith.constant 0 : index
    %86 = vector.load %arg8[%85, %c0_40] : memref<64x128xf32, #tpu.memory_space<vmem>>, vector<8x128xf32>
    %cst_41 = arith.constant dense<0.000000e+00> : vector<8x128xf32>
    %87 = tpu.matmul %79, %21, %cst_41 {dimension_numbers = #tpu.dot_dimension_numbers<[1], [0], [0], [1], [0, 0, 1, 1], [], []>} : vector<8x32xf32>, vector<32x128xf32>, vector<8x128xf32> -> vector<8x128xf32>
    %88 = arith.addf %86, %87 : vector<8x128xf32>
    %89 = math.tanh %88 : vector<8x128xf32>
    %90 = arith.negf %88 : vector<8x128xf32>
    %91 = math.exp %90 : vector<8x128xf32>
    %cst_42 = arith.constant 1.000000e+00 : f32
    %92 = vector.broadcast %cst_42 : f32 to vector<8x128xf32>
    %93 = arith.addf %92, %91 : vector<8x128xf32>
    %94 = arith.divf %92, %93 : vector<8x128xf32>
    %95 = arith.select %27, %89, %94 : vector<8x128xi1>, vector<8x128xf32>
    %96 = vector.extract_strided_slice %95 {offsets = [0, 0], sizes = [8, 32], strides = [1, 1]} : vector<8x128xf32> to vector<8x32xf32>
    %97 = vector.extract_strided_slice %95 {offsets = [0, 32], sizes = [8, 32], strides = [1, 1]} : vector<8x128xf32> to vector<8x32xf32>
    %98 = vector.extract_strided_slice %95 {offsets = [0, 64], sizes = [8, 32], strides = [1, 1]} : vector<8x128xf32> to vector<8x32xf32>
    %99 = vector.extract_strided_slice %95 {offsets = [0, 96], sizes = [8, 32], strides = [1, 1]} : vector<8x128xf32> to vector<8x32xf32>
    %100 = arith.mulf %97, %77 : vector<8x32xf32>
    %101 = arith.mulf %96, %98 : vector<8x32xf32>
    %102 = arith.addf %100, %101 : vector<8x32xf32>
    %103 = math.tanh %102 : vector<8x32xf32>
    %104 = arith.mulf %99, %103 : vector<8x32xf32>
    %105 = arith.addf %80, %104 : vector<8x32xf32>
    %c3_i32 = arith.constant 3 : i32
    %c7_i32_43 = arith.constant 7 : i32
    %106 = arith.subi %c7_i32_43, %c3_i32 : i32
    %107 = arith.select %0, %106, %c3_i32 : i32
    %c8_i32_44 = arith.constant 8 : i32
    %108 = arith.muli %107, %c8_i32_44 : i32
    %109 = tpu.assume_multiple %108, 8 : i32
    %110 = arith.index_cast %109 : i32 to index
    %c0_45 = arith.constant 0 : index
    %111 = vector.load %arg8[%110, %c0_45] : memref<64x128xf32, #tpu.memory_space<vmem>>, vector<8x128xf32>
    %cst_46 = arith.constant dense<0.000000e+00> : vector<8x128xf32>
    %112 = tpu.matmul %104, %21, %cst_46 {dimension_numbers = #tpu.dot_dimension_numbers<[1], [0], [0], [1], [0, 0, 1, 1], [], []>} : vector<8x32xf32>, vector<32x128xf32>, vector<8x128xf32> -> vector<8x128xf32>
    %113 = arith.addf %111, %112 : vector<8x128xf32>
    %114 = math.tanh %113 : vector<8x128xf32>
    %115 = arith.negf %113 : vector<8x128xf32>
    %116 = math.exp %115 : vector<8x128xf32>
    %cst_47 = arith.constant 1.000000e+00 : f32
    %117 = vector.broadcast %cst_47 : f32 to vector<8x128xf32>
    %118 = arith.addf %117, %116 : vector<8x128xf32>
    %119 = arith.divf %117, %118 : vector<8x128xf32>
    %120 = arith.select %27, %114, %119 : vector<8x128xi1>, vector<8x128xf32>
    %121 = vector.extract_strided_slice %120 {offsets = [0, 0], sizes = [8, 32], strides = [1, 1]} : vector<8x128xf32> to vector<8x32xf32>
    %122 = vector.extract_strided_slice %120 {offsets = [0, 32], sizes = [8, 32], strides = [1, 1]} : vector<8x128xf32> to vector<8x32xf32>
    %123 = vector.extract_strided_slice %120 {offsets = [0, 64], sizes = [8, 32], strides = [1, 1]} : vector<8x128xf32> to vector<8x32xf32>
    %124 = vector.extract_strided_slice %120 {offsets = [0, 96], sizes = [8, 32], strides = [1, 1]} : vector<8x128xf32> to vector<8x32xf32>
    %125 = arith.mulf %122, %102 : vector<8x32xf32>
    %126 = arith.mulf %121, %123 : vector<8x32xf32>
    %127 = arith.addf %125, %126 : vector<8x32xf32>
    %128 = math.tanh %127 : vector<8x32xf32>
    %129 = arith.mulf %124, %128 : vector<8x32xf32>
    %130 = arith.addf %105, %129 : vector<8x32xf32>
    %c4_i32 = arith.constant 4 : i32
    %c7_i32_48 = arith.constant 7 : i32
    %131 = arith.subi %c7_i32_48, %c4_i32 : i32
    %132 = arith.select %0, %131, %c4_i32 : i32
    %c8_i32_49 = arith.constant 8 : i32
    %133 = arith.muli %132, %c8_i32_49 : i32
    %134 = tpu.assume_multiple %133, 8 : i32
    %135 = arith.index_cast %134 : i32 to index
    %c0_50 = arith.constant 0 : index
    %136 = vector.load %arg8[%135, %c0_50] : memref<64x128xf32, #tpu.memory_space<vmem>>, vector<8x128xf32>
    %cst_51 = arith.constant dense<0.000000e+00> : vector<8x128xf32>
    %137 = tpu.matmul %129, %21, %cst_51 {dimension_numbers = #tpu.dot_dimension_numbers<[1], [0], [0], [1], [0, 0, 1, 1], [], []>} : vector<8x32xf32>, vector<32x128xf32>, vector<8x128xf32> -> vector<8x128xf32>
    %138 = arith.addf %136, %137 : vector<8x128xf32>
    %139 = math.tanh %138 : vector<8x128xf32>
    %140 = arith.negf %138 : vector<8x128xf32>
    %141 = math.exp %140 : vector<8x128xf32>
    %cst_52 = arith.constant 1.000000e+00 : f32
    %142 = vector.broadcast %cst_52 : f32 to vector<8x128xf32>
    %143 = arith.addf %142, %141 : vector<8x128xf32>
    %144 = arith.divf %142, %143 : vector<8x128xf32>
    %145 = arith.select %27, %139, %144 : vector<8x128xi1>, vector<8x128xf32>
    %146 = vector.extract_strided_slice %145 {offsets = [0, 0], sizes = [8, 32], strides = [1, 1]} : vector<8x128xf32> to vector<8x32xf32>
    %147 = vector.extract_strided_slice %145 {offsets = [0, 32], sizes = [8, 32], strides = [1, 1]} : vector<8x128xf32> to vector<8x32xf32>
    %148 = vector.extract_strided_slice %145 {offsets = [0, 64], sizes = [8, 32], strides = [1, 1]} : vector<8x128xf32> to vector<8x32xf32>
    %149 = vector.extract_strided_slice %145 {offsets = [0, 96], sizes = [8, 32], strides = [1, 1]} : vector<8x128xf32> to vector<8x32xf32>
    %150 = arith.mulf %147, %127 : vector<8x32xf32>
    %151 = arith.mulf %146, %148 : vector<8x32xf32>
    %152 = arith.addf %150, %151 : vector<8x32xf32>
    %153 = math.tanh %152 : vector<8x32xf32>
    %154 = arith.mulf %149, %153 : vector<8x32xf32>
    %155 = arith.addf %130, %154 : vector<8x32xf32>
    %c5_i32 = arith.constant 5 : i32
    %c7_i32_53 = arith.constant 7 : i32
    %156 = arith.subi %c7_i32_53, %c5_i32 : i32
    %157 = arith.select %0, %156, %c5_i32 : i32
    %c8_i32_54 = arith.constant 8 : i32
    %158 = arith.muli %157, %c8_i32_54 : i32
    %159 = tpu.assume_multiple %158, 8 : i32
    %160 = arith.index_cast %159 : i32 to index
    %c0_55 = arith.constant 0 : index
    %161 = vector.load %arg8[%160, %c0_55] : memref<64x128xf32, #tpu.memory_space<vmem>>, vector<8x128xf32>
    %cst_56 = arith.constant dense<0.000000e+00> : vector<8x128xf32>
    %162 = tpu.matmul %154, %21, %cst_56 {dimension_numbers = #tpu.dot_dimension_numbers<[1], [0], [0], [1], [0, 0, 1, 1], [], []>} : vector<8x32xf32>, vector<32x128xf32>, vector<8x128xf32> -> vector<8x128xf32>
    %163 = arith.addf %161, %162 : vector<8x128xf32>
    %164 = math.tanh %163 : vector<8x128xf32>
    %165 = arith.negf %163 : vector<8x128xf32>
    %166 = math.exp %165 : vector<8x128xf32>
    %cst_57 = arith.constant 1.000000e+00 : f32
    %167 = vector.broadcast %cst_57 : f32 to vector<8x128xf32>
    %168 = arith.addf %167, %166 : vector<8x128xf32>
    %169 = arith.divf %167, %168 : vector<8x128xf32>
    %170 = arith.select %27, %164, %169 : vector<8x128xi1>, vector<8x128xf32>
    %171 = vector.extract_strided_slice %170 {offsets = [0, 0], sizes = [8, 32], strides = [1, 1]} : vector<8x128xf32> to vector<8x32xf32>
    %172 = vector.extract_strided_slice %170 {offsets = [0, 32], sizes = [8, 32], strides = [1, 1]} : vector<8x128xf32> to vector<8x32xf32>
    %173 = vector.extract_strided_slice %170 {offsets = [0, 64], sizes = [8, 32], strides = [1, 1]} : vector<8x128xf32> to vector<8x32xf32>
    %174 = vector.extract_strided_slice %170 {offsets = [0, 96], sizes = [8, 32], strides = [1, 1]} : vector<8x128xf32> to vector<8x32xf32>
    %175 = arith.mulf %172, %152 : vector<8x32xf32>
    %176 = arith.mulf %171, %173 : vector<8x32xf32>
    %177 = arith.addf %175, %176 : vector<8x32xf32>
    %178 = math.tanh %177 : vector<8x32xf32>
    %179 = arith.mulf %174, %178 : vector<8x32xf32>
    %180 = arith.addf %155, %179 : vector<8x32xf32>
    %c6_i32 = arith.constant 6 : i32
    %c7_i32_58 = arith.constant 7 : i32
    %181 = arith.subi %c7_i32_58, %c6_i32 : i32
    %182 = arith.select %0, %181, %c6_i32 : i32
    %c8_i32_59 = arith.constant 8 : i32
    %183 = arith.muli %182, %c8_i32_59 : i32
    %184 = tpu.assume_multiple %183, 8 : i32
    %185 = arith.index_cast %184 : i32 to index
    %c0_60 = arith.constant 0 : index
    %186 = vector.load %arg8[%185, %c0_60] : memref<64x128xf32, #tpu.memory_space<vmem>>, vector<8x128xf32>
    %cst_61 = arith.constant dense<0.000000e+00> : vector<8x128xf32>
    %187 = tpu.matmul %179, %21, %cst_61 {dimension_numbers = #tpu.dot_dimension_numbers<[1], [0], [0], [1], [0, 0, 1, 1], [], []>} : vector<8x32xf32>, vector<32x128xf32>, vector<8x128xf32> -> vector<8x128xf32>
    %188 = arith.addf %186, %187 : vector<8x128xf32>
    %189 = math.tanh %188 : vector<8x128xf32>
    %190 = arith.negf %188 : vector<8x128xf32>
    %191 = math.exp %190 : vector<8x128xf32>
    %cst_62 = arith.constant 1.000000e+00 : f32
    %192 = vector.broadcast %cst_62 : f32 to vector<8x128xf32>
    %193 = arith.addf %192, %191 : vector<8x128xf32>
    %194 = arith.divf %192, %193 : vector<8x128xf32>
    %195 = arith.select %27, %189, %194 : vector<8x128xi1>, vector<8x128xf32>
    %196 = vector.extract_strided_slice %195 {offsets = [0, 0], sizes = [8, 32], strides = [1, 1]} : vector<8x128xf32> to vector<8x32xf32>
    %197 = vector.extract_strided_slice %195 {offsets = [0, 32], sizes = [8, 32], strides = [1, 1]} : vector<8x128xf32> to vector<8x32xf32>
    %198 = vector.extract_strided_slice %195 {offsets = [0, 64], sizes = [8, 32], strides = [1, 1]} : vector<8x128xf32> to vector<8x32xf32>
    %199 = vector.extract_strided_slice %195 {offsets = [0, 96], sizes = [8, 32], strides = [1, 1]} : vector<8x128xf32> to vector<8x32xf32>
    %200 = arith.mulf %197, %177 : vector<8x32xf32>
    %201 = arith.mulf %196, %198 : vector<8x32xf32>
    %202 = arith.addf %200, %201 : vector<8x32xf32>
    %203 = math.tanh %202 : vector<8x32xf32>
    %204 = arith.mulf %199, %203 : vector<8x32xf32>
    %205 = arith.addf %180, %204 : vector<8x32xf32>
    %c7_i32_63 = arith.constant 7 : i32
    %c7_i32_64 = arith.constant 7 : i32
    %206 = arith.subi %c7_i32_64, %c7_i32_63 : i32
    %207 = arith.select %0, %206, %c7_i32_63 : i32
    %c8_i32_65 = arith.constant 8 : i32
    %208 = arith.muli %207, %c8_i32_65 : i32
    %209 = tpu.assume_multiple %208, 8 : i32
    %210 = arith.index_cast %209 : i32 to index
    %c0_66 = arith.constant 0 : index
    %211 = vector.load %arg8[%210, %c0_66] : memref<64x128xf32, #tpu.memory_space<vmem>>, vector<8x128xf32>
    %cst_67 = arith.constant dense<0.000000e+00> : vector<8x128xf32>
    %212 = tpu.matmul %204, %21, %cst_67 {dimension_numbers = #tpu.dot_dimension_numbers<[1], [0], [0], [1], [0, 0, 1, 1], [], []>} : vector<8x32xf32>, vector<32x128xf32>, vector<8x128xf32> -> vector<8x128xf32>
    %213 = arith.addf %211, %212 : vector<8x128xf32>
    %214 = math.tanh %213 : vector<8x128xf32>
    %215 = arith.negf %213 : vector<8x128xf32>
    %216 = math.exp %215 : vector<8x128xf32>
    %cst_68 = arith.constant 1.000000e+00 : f32
    %217 = vector.broadcast %cst_68 : f32 to vector<8x128xf32>
    %218 = arith.addf %217, %216 : vector<8x128xf32>
    %219 = arith.divf %217, %218 : vector<8x128xf32>
    %220 = arith.select %27, %214, %219 : vector<8x128xi1>, vector<8x128xf32>
    %221 = vector.extract_strided_slice %220 {offsets = [0, 0], sizes = [8, 32], strides = [1, 1]} : vector<8x128xf32> to vector<8x32xf32>
    %222 = vector.extract_strided_slice %220 {offsets = [0, 32], sizes = [8, 32], strides = [1, 1]} : vector<8x128xf32> to vector<8x32xf32>
    %223 = vector.extract_strided_slice %220 {offsets = [0, 64], sizes = [8, 32], strides = [1, 1]} : vector<8x128xf32> to vector<8x32xf32>
    %224 = vector.extract_strided_slice %220 {offsets = [0, 96], sizes = [8, 32], strides = [1, 1]} : vector<8x128xf32> to vector<8x32xf32>
    %225 = arith.mulf %222, %202 : vector<8x32xf32>
    %226 = arith.mulf %221, %223 : vector<8x32xf32>
    %227 = arith.addf %225, %226 : vector<8x32xf32>
    %228 = math.tanh %227 : vector<8x32xf32>
    %229 = arith.mulf %224, %228 : vector<8x32xf32>
    %230 = arith.addf %205, %229 : vector<8x32xf32>
    %c8_i32_69 = arith.constant 8 : i32
    %c0_70 = arith.constant 0 : index
    %c0_71 = arith.constant 0 : index
    %231 = vector.load %arg9[%c0_70, %c0_71] : memref<8x32xf32, #tpu.memory_space<vmem>>, vector<8x32xf32>
    tpu.vector_store %arg9[%c0_70, %c0_71], %229 {strides = array<i32>} : memref<8x32xf32, #tpu.memory_space<vmem>>, vector<8x32xf32>,
    %c0_72 = arith.constant 0 : index
    %c0_73 = arith.constant 0 : index
    %232 = vector.load %arg10[%c0_72, %c0_73] : memref<8x32xf32, #tpu.memory_space<vmem>>, vector<8x32xf32>
    tpu.vector_store %arg10[%c0_72, %c0_73], %227 {strides = array<i32>} : memref<8x32xf32, #tpu.memory_space<vmem>>, vector<8x32xf32>,
    %c0_74 = arith.constant 0 : index
    %c0_75 = arith.constant 0 : index
    %233 = vector.load %arg11[%c0_74, %c0_75] : memref<8x32xf32, #tpu.memory_space<vmem>>, vector<8x32xf32>
    tpu.vector_store %arg11[%c0_74, %c0_75], %230 {strides = array<i32>} : memref<8x32xf32, #tpu.memory_space<vmem>>, vector<8x32xf32>,
    %c0_i32_76 = arith.constant 0 : i32
    %234 = arith.cmpi eq, %arg1, %c0_i32_76 : i32
    %235 = arith.extui %234 : i1 to i32
    %c0_i32_77 = arith.constant 0 : i32
    %236 = arith.cmpi ne, %235, %c0_i32_77 : i32
    scf.if %236 {
      %cst_78 = arith.constant 1.250000e-01 : f32
      %237 = vector.broadcast %cst_78 : f32 to vector<8x32xf32>
      %238 = arith.mulf %230, %237 : vector<8x32xf32>
      %c0_79 = arith.constant 0 : index
      %c0_80 = arith.constant 0 : index
      %c0_81 = arith.constant 0 : index
      %239 = vector.load %arg6[%c0_79, %c0_80, %c0_81] : memref<1x32x8xf32, #tpu.memory_space<vmem>>, vector<1x32x8xf32>
      %240 = vector.shape_cast %239 : vector<1x32x8xf32> to vector<32x8xf32>
      %cst_82 = arith.constant dense<0.000000e+00> : vector<8x8xf32>
      %241 = tpu.matmul %238, %240, %cst_82 {dimension_numbers = #tpu.dot_dimension_numbers<[1], [0], [0], [1], [0, 0, 1, 1], [], []>} : vector<8x32xf32>, vector<32x8xf32>, vector<8x8xf32> -> vector<8x8xf32>
      %c0_83 = arith.constant 0 : index
      %c0_84 = arith.constant 0 : index
      %c0_85 = arith.constant 0 : index
      %242 = vector.load %arg7[%c0_83, %c0_84, %c0_85] : memref<1x8x8xf32, #tpu.memory_space<vmem>>, vector<1x8x8xf32>
      %243 = vector.shape_cast %242 : vector<1x8x8xf32> to vector<8x8xf32>
      %244 = vector.shape_cast %241 : vector<8x8xf32> to vector<1x8x8xf32>
      tpu.vector_store %arg7[%c0_83, %c0_84, %c0_85], %244 {strides = array<i32>} : memref<1x8x8xf32, #tpu.memory_space<vmem>>, vector<1x8x8xf32>,
    } else {
    }
    return
  }
  func.func @transform_0(%arg0: i32, %arg1: i32) -> (i32, i32, i32) {
    %c2_i32 = arith.constant 2 : i32
    %0 = arith.muli %c2_i32, %arg1 : i32
    %c0_i32 = arith.constant 0 : i32
    %1 = arith.subi %c0_i32, %0 : i32
    %2 = arith.muli %arg0, %1 : i32
    %3 = arith.addi %arg1, %2 : i32
    %c0_i32_0 = arith.constant 0 : i32
    %c0_i32_1 = arith.constant 0 : i32
    %c0_i32_2 = arith.constant 0 : i32
    return %c0_i32_0, %3, %c0_i32_1 : i32, i32, i32
  }
  func.func @transform_1(%arg0: i32, %arg1: i32) -> (i32, i32, i32, i32) {
    %c0_i32 = arith.constant 0 : i32
    %c0_i32_0 = arith.constant 0 : i32
    %c0_i32_1 = arith.constant 0 : i32
    %c0_i32_2 = arith.constant 0 : i32
    return %arg0, %c0_i32, %c0_i32_0, %c0_i32_1 : i32, i32, i32, i32
  }
  func.func @transform_2(%arg0: i32, %arg1: i32) -> (i32, i32, i32) {
    %c0_i32 = arith.constant 0 : i32
    %c0_i32_0 = arith.constant 0 : i32
    %c0_i32_1 = arith.constant 0 : i32
    return %arg0, %c0_i32, %c0_i32_0 : i32, i32, i32
  }
  func.func @transform_3(%arg0: i32, %arg1: i32) -> (i32, i32, i32) {
    %c0_i32 = arith.constant 0 : i32
    %c0_i32_0 = arith.constant 0 : i32
    %c0_i32_1 = arith.constant 0 : i32
    return %arg0, %c0_i32, %c0_i32_0 : i32, i32, i32
  }
  func.func @transform_4(%arg0: i32, %arg1: i32) -> (i32, i32, i32) {
    %c0_i32 = arith.constant 0 : i32
    %c0_i32_0 = arith.constant 0 : i32
    %c0_i32_1 = arith.constant 0 : i32
    return %arg0, %c0_i32, %c0_i32_0 : i32, i32, i32
  }
  func.func @transform_5(%arg0: i32, %arg1: i32) -> (i32, i32, i32) {
    %c0_i32 = arith.constant 0 : i32
    %c0_i32_0 = arith.constant 0 : i32
    %c0_i32_1 = arith.constant 0 : i32
    return %arg0, %c0_i32, %c0_i32_0 : i32, i32, i32
  }
}

</mosaic_0001>

<llo_original>
// kernel: lstm_forward.2
$region0: #{lstm_forward.2}
  #allocation0 [shape = 'u32[]', space=smem, size = 0x4, offset = 0x4, fixed_abs, tag = 'smem constant byte address 0x4 - core index']
  #allocation1 [shape = 'u32[144,128]{1,0:T(1,128)}', space=vmem, size = 0x12000, scoped, tag = 'internal scratch']
  #allocation2 [shape = 'f32[64,128]{1,0:T(8,128)}', space=vmem, size = 0x8000, scoped, tag = 'scratch operand']
  #allocation3 [shape = 'f32[8,32]{1,0:T(8,128)}', space=vmem, size = 0x1000, scoped, tag = 'scratch operand']
  #allocation4 [shape = 'f32[8,32]{1,0:T(8,128)}', space=vmem, size = 0x1000, scoped, tag = 'scratch operand']
  %s0 = inlined_call_operand.vmem [shape: f32[1,64,16], index: 0, kind: input, shape index: {}]
  %s1 = inlined_call_operand.vmem [shape: f32[2,1,16,128], index: 1, kind: input, shape index: {}]
  %s2 = inlined_call_operand.vmem [shape: f32[2,32,128], index: 2, kind: input, shape index: {}]
  %s3 = inlined_call_operand.vmem [shape: f32[2,1,128], index: 3, kind: input, shape index: {}]
  %s4 = inlined_call_operand.vmem [shape: f32[2,64,32], index: 4, kind: output, shape index: {}]
  %s5 = sld [smem:[#allocation0]]
  $region53: #{lstm_forward.2} parent=0
    _
  %s7 = ssub.s32 1, %s5
  %s8 = scalar_select 0, %s7, %s5
  loop: start=0, step=1, limit=4
  $region2: #{lstm_forward.2} parent=0 // loop_pre_header
    _
  $region3: #{lstm_forward.2} parent=0 // loop_header
    %s10 = sphi 0, %s14
    %p11 = scmp.ge.s32.totalorder %s10, 4
    %s17 = sphi 0, %s29
    %s18 = sphi 0, %s25
    %s19 = sphi 0, %s17
    %s20 = sphi 0, %s18
    %s21 = sphi 0, %s19
    %s22 = sphi 0, %s20
    %s40 = sphi 0, %s42
    %s43 = sphi 0, %s40
    %s44 = sphi 0, %s43
    %s60 = sphi 0, %s44
    %s66 = sphi 0, %s68
    %s69 = sphi 0, %s66
    %s70 = sphi 0, %s69
    %s86 = sphi 0, %s70
    %s92 = sphi 0, %s94
    %s95 = sphi 0, %s92
    %s96 = sphi 0, %s95
    %s112 = sphi 0, %s96
    %s118 = sphi 0, %s120
    %s121 = sphi 0, %s118
    %s122 = sphi 0, %s121
    %s138 = sphi 0, %s122
    %s154 = sphi 0, %s156
    %s157 = sphi 0, %s154
    %s158 = sphi 0, %s157
    %s174 = sphi 0, %s158
  $region4: #{lstm_forward.2} parent=0 // loop_header_branch
    %13 = sbr.rel (%p11) target = $region8
  $region5: #{lstm_forward.2} parent=0 // loop_body
    %s15 = ssub.s32 %s10, 1
    %s16 = ssub.s32 %s10, 2
    %s23 = sadd.s32 1, %s18
    %p24 = scmp.ge.s32.totalorder %s23, 1
    %s25 = scalar_select %p24, 0, %s23
    %s26 = sadd.s32 1, %s17
    %s27 = scalar_select %p24, %s26, %s17
    %p28 = scmp.ge.s32.totalorder %s27, 2
    %s29 = scalar_select %p28, 0, %s27
    %s30 = smul.u32 %s18, 2
    %s31 = ssub.s32 0, %s30
    %s32 = smul.u32 %s17, %s31
    %s33 = sadd.s32 %s18, %s32
    %s34 = smul.u32 %s25, 2
    %s35 = ssub.s32 0, %s34
    %s36 = smul.u32 %s29, %s35
    %s37 = sadd.s32 %s25, %s36
    %s38 = ssub.s32 %s33, %s37
    %p39 = scmp.eq.s32.totalorder %s38, 0
    %s41 = sadd.s32 %s40, 1
    %s42 = scalar_select %p39, %s40, %s41
    %p45 = pneg %p39
    %p46 = scmp.eq.s32.totalorder %s10, 1
    %p47 = por %p45, %p46
    %p48 = scmp.ne.s32.totalorder %s40, %s43
    %p49 = scmp.eq.s32.totalorder %s10, 0
    %p50 = por %p48, %p49
    %p51 = scmp.ne.s32.totalorder %s40, %s43
    %p52 = scmp.eq.s32.totalorder %s15, 1
    %p53 = por %p51, %p52
    %p54 = scmp.ne.s32.totalorder %s43, %s44
    %p55 = scmp.eq.s32.totalorder %s15, 0
    %p56 = por %p54, %p55
    %p57 = scmp.ne.s32.totalorder %s43, %s44
    %p58 = scmp.eq.s32.totalorder %s16, 1
    %p59 = por %p57, %p58
    %p61 = scmp.ne.s32.totalorder %s44, %s60
    %p62 = scmp.eq.s32.totalorder %s16, 0
    %p63 = por %p61, %p62
    %s64 = ssub.s32 %s17, %s29
    %p65 = scmp.eq.s32.totalorder %s64, 0
    %s67 = sadd.s32 %s66, 1
    %s68 = scalar_select %p65, %s66, %s67
    %p71 = pneg %p65
    %p72 = scmp.eq.s32.totalorder %s10, 1
    %p73 = por %p71, %p72
    %p74 = scmp.ne.s32.totalorder %s66, %s69
    %p75 = scmp.eq.s32.totalorder %s10, 0
    %p76 = por %p74, %p75
    %p77 = scmp.ne.s32.totalorder %s66, %s69
    %p78 = scmp.eq.s32.totalorder %s15, 1
    %p79 = por %p77, %p78
    %p80 = scmp.ne.s32.totalorder %s69, %s70
    %p81 = scmp.eq.s32.totalorder %s15, 0
    %p82 = por %p80, %p81
    %p83 = scmp.ne.s32.totalorder %s69, %s70
    %p84 = scmp.eq.s32.totalorder %s16, 1
    %p85 = por %p83, %p84
    %p87 = scmp.ne.s32.totalorder %s70, %s86
    %p88 = scmp.eq.s32.totalorder %s16, 0
    %p89 = por %p87, %p88
    %s90 = ssub.s32 %s17, %s29
    %p91 = scmp.eq.s32.totalorder %s90, 0
    %s93 = sadd.s32 %s92, 1
    %s94 = scalar_select %p91, %s92, %s93
    %p97 = pneg %p91
    %p98 = scmp.eq.s32.totalorder %s10, 1
    %p99 = por %p97, %p98
    %p100 = scmp.ne.s32.totalorder %s92, %s95
    %p101 = scmp.eq.s32.totalorder %s10, 0
    %p102 = por %p100, %p101
    %p103 = scmp.ne.s32.totalorder %s92, %s95
    %p104 = scmp.eq.s32.totalorder %s15, 1
    %p105 = por %p103, %p104
    %p106 = scmp.ne.s32.totalorder %s95, %s96
    %p107 = scmp.eq.s32.totalorder %s15, 0
    %p108 = por %p106, %p107
    %p109 = scmp.ne.s32.totalorder %s95, %s96
    %p110 = scmp.eq.s32.totalorder %s16, 1
    %p111 = por %p109, %p110
    %p113 = scmp.ne.s32.totalorder %s96, %s112
    %p114 = scmp.eq.s32.totalorder %s16, 0
    %p115 = por %p113, %p114
    %s116 = ssub.s32 %s17, %s29
    %p117 = scmp.eq.s32.totalorder %s116, 0
    %s119 = sadd.s32 %s118, 1
    %s120 = scalar_select %p117, %s118, %s119
    %p123 = pneg %p117
    %p124 = scmp.eq.s32.totalorder %s10, 1
    %p125 = por %p123, %p124
    %p126 = scmp.ne.s32.totalorder %s118, %s121
    %p127 = scmp.eq.s32.totalorder %s10, 0
    %p128 = por %p126, %p127
    %p129 = scmp.ne.s32.totalorder %s118, %s121
    %p130 = scmp.eq.s32.totalorder %s15, 1
    %p131 = por %p129, %p130
    %p132 = scmp.ne.s32.totalorder %s121, %s122
    %p133 = scmp.eq.s32.totalorder %s15, 0
    %p134 = por %p132, %p133
    %p135 = scmp.ne.s32.totalorder %s121, %s122
    %p136 = scmp.eq.s32.totalorder %s16, 1
    %p137 = por %p135, %p136
    %p139 = scmp.ne.s32.totalorder %s122, %s138
    %p140 = scmp.eq.s32.totalorder %s16, 0
    %p141 = por %p139, %p140
    %s142 = smul.u32 %s18, 2
    %s143 = ssub.s32 0, %s142
    %s144 = smul.u32 %s17, %s143
    %s145 = sadd.s32 %s18, %s144
    %s146 = smul.u32 %s25, 2
    %s147 = ssub.s32 0, %s146
    %s148 = smul.u32 %s29, %s147
    %s149 = sadd.s32 %s25, %s148
    %s150 = ssub.s32 %s17, %s29
    %s151 = ssub.s32 %s145, %s149
    %s152 = sor.u32 %s150, %s151
    %p153 = scmp.eq.s32.totalorder %s152, 0
    %s155 = sadd.s32 %s154, 1
    %s156 = scalar_select %p153, %s154, %s155
    %p159 = pneg %p153
    %p160 = scmp.eq.s32.totalorder %s10, 1
    %p161 = por %p159, %p160
    %p162 = scmp.ne.s32.totalorder %s154, %s157
    %p163 = scmp.eq.s32.totalorder %s10, 0
    %p164 = por %p162, %p163
    %p165 = scmp.ne.s32.totalorder %s154, %s157
    %p166 = scmp.eq.s32.totalorder %s15, 1
    %p167 = por %p165, %p166
    %p168 = scmp.ne.s32.totalorder %s157, %s158
    %p169 = scmp.eq.s32.totalorder %s15, 0
    %p170 = por %p168, %p169
    %p171 = scmp.ne.s32.totalorder %s157, %s158
    %p172 = scmp.eq.s32.totalorder %s16, 1
    %p173 = por %p171, %p172
    %p175 = scmp.ne.s32.totalorder %s158, %s174
    %p176 = scmp.eq.s32.totalorder %s16, 0
    %p177 = por %p175, %p176
    %p178 = scmp.le.s32.totalorder 1, %s10
    %p179 = scmp.lt.s32.totalorder %s10, 3
    %p180 = pnand %p178, %p179
    %p181 = pneg %p180
    // Predicated region
    $region9: #{lstm_forward.2} parent=5 // pred_check
      _
    $region10: #{lstm_forward.2} parent=5 // pred_check_branch
      %183 = sbr.rel (%p180) target = $region12
    $region11: #{lstm_forward.2} parent=5 // pred_region
      %s184 = ssub.s32 %s10, 1
    $region12: #{lstm_forward.2} parent=5 // pred_fallthru
      _
    %p185 = scmp.lt.s32.totalorder %s10, 2
    // Predicated region
    $region13: #{lstm_forward.2} parent=5 // pred_check
      %p186 = pneg %p185
    $region14: #{lstm_forward.2} parent=5 // pred_check_branch
      %188 = sbr.rel (%p186) target = $region16
    $region15: #{lstm_forward.2} parent=5 // pred_region
      // Predicated region
      $region17: #{lstm_forward.2} parent=15 // pred_check
        %p189 = pneg %p50
      $region18: #{lstm_forward.2} parent=15 // pred_check_branch
        %191 = sbr.rel (%p189) target = $region20
      $region19: #{lstm_forward.2} parent=15 // pred_region
        %s192 = smul.u32 %s18, 2
        %s193 = ssub.s32 0, %s192
        %s194 = smul.u32 %s17, %s193
        %s195 = sadd.s32 %s18, %s194
        %s196 = smul.u32 8, %s195
        %p197 = scmp.lt.s32.totalorder %s196, 7
        %s198 = scalar_select %p197, %s196, 7
        %s199 = smul.addr %s198, 8
        %s200 = scalar_lea.vmem %s0, %s199
        %s201 = smul.u32 %s18, 2
        %s202 = ssub.s32 0, %s201
        %s203 = smul.u32 %s17, %s202
        %s204 = sadd.s32 %s18, %s203
        %s205 = smul.u32 8, %s204
      $region20: #{lstm_forward.2} parent=15 // pred_fallthru
        _
      // Predicated region
      $region21: #{lstm_forward.2} parent=15 // pred_check
        %p206 = pneg %p76
      $region22: #{lstm_forward.2} parent=15 // pred_check_branch
        %208 = sbr.rel (%p206) target = $region24
      $region23: #{lstm_forward.2} parent=15 // pred_region
        %p209 = scmp.lt.s32.totalorder %s17, 1
        %s210 = scalar_select %p209, %s17, 1
        %s211 = smul.addr %s210, 2
        %s212 = smul.addr %s211, 8
        %s213 = scalar_lea.vmem %s1, %s212
      $region24: #{lstm_forward.2} parent=15 // pred_fallthru
        _
      // Predicated region
      $region25: #{lstm_forward.2} parent=15 // pred_check
        %p214 = pneg %p102
      $region26: #{lstm_forward.2} parent=15 // pred_check_branch
        %216 = sbr.rel (%p214) target = $region28
      $region27: #{lstm_forward.2} parent=15 // pred_region
        %p217 = scmp.lt.s32.totalorder %s17, 1
        %s218 = scalar_select %p217, %s17, 1
        %s219 = smul.addr %s218, 4
        %s220 = smul.addr %s219, 8
        %s221 = scalar_lea.vmem %s2, %s220
      $region28: #{lstm_forward.2} parent=15 // pred_fallthru
        _
      // Predicated region
      $region29: #{lstm_forward.2} parent=15 // pred_check
        %p222 = pneg %p128
      $region30: #{lstm_forward.2} parent=15 // pred_check_branch
        %224 = sbr.rel (%p222) target = $region32
      $region31: #{lstm_forward.2} parent=15 // pred_region
        %p225 = scmp.lt.s32.totalorder %s17, 1
        %s226 = scalar_select %p225, %s17, 1
        %s227 = scalar_lea.vmem %s3, %s226
      $region32: #{lstm_forward.2} parent=15 // pred_fallthru
        _
    $region16: #{lstm_forward.2} parent=5 // pred_fallthru
      _
    %p228 = scmp.le.s32.totalorder 1, %s10
    %p229 = scmp.lt.s32.totalorder %s10, 3
    %p230 = pnand %p228, %p229
    %p231 = pneg %p230
    // Predicated region
    $region33: #{lstm_forward.2} parent=5 // pred_check
      _
    $region34: #{lstm_forward.2} parent=5 // pred_check_branch
      %233 = sbr.rel (%p230) target = $region36
    $region35: #{lstm_forward.2} parent=5 // pred_region
      %s234 = ssub.s32 %s10, 1
      %s235 = smul.u32 %s20, 2
      %s236 = ssub.s32 0, %s235
      %s237 = smul.u32 %s19, %s236
      %s238 = sadd.s32 %s20, %s237
      %s239 = smul.u32 8, %s238
      %p240 = scmp.lt.s32.totalorder %s239, 7
      %s241 = scalar_select %p240, %s239, 7
      %s242 = smul.addr %s241, 8
      %s243 = scalar_lea.vmem %s0, %s242
      %p244 = pneg %p56
      %p245 = pneg %p53
      %p246 = scmp.lt.s32.totalorder %s19, 1
      %s247 = scalar_select %p246, %s19, 1
      %s248 = smul.addr %s247, 2
      %s249 = smul.addr %s248, 8
      %s250 = scalar_lea.vmem %s1, %s249
      %p251 = pneg %p82
      %p252 = pneg %p79
      %p253 = scmp.lt.s32.totalorder %s19, 1
      %s254 = scalar_select %p253, %s19, 1
      %s255 = smul.addr %s254, 4
      %s256 = smul.addr %s255, 8
      %s257 = scalar_lea.vmem %s2, %s256
      %p258 = pneg %p108
      %p259 = pneg %p105
      %p260 = scmp.lt.s32.totalorder %s19, 1
      %s261 = scalar_select %p260, %s19, 1
      %s262 = scalar_lea.vmem %s3, %s261
      %p263 = pneg %p134
      %p264 = pneg %p131
      %p265 = pneg %p170
      %p266 = pneg %p167
      %s267 = smul.u32 %s20, 2
      %s268 = ssub.s32 0, %s267
      %s269 = smul.u32 %s19, %s268
      %s270 = sadd.s32 %s20, %s269
      %s271 = smul.u32 8, %s270
      %p272 = scmp.lt.s32.totalorder %s19, 1
      %s273 = scalar_select %p272, %s19, 1
      %p274 = scmp.lt.s32.totalorder %s271, 7
      %s275 = scalar_select %p274, %s271, 7
      %s276 = smul.addr %s273, 8
      %s277 = sadd.s32 %s275, %s276
      %s278 = smul.addr %s277, 8
      %s279 = scalar_lea.vmem %s4, %s278
      %s280 = smul.u32 %s20, 2
      %s281 = ssub.s32 0, %s280
      %s282 = smul.u32 %s19, %s281
      %s283 = sadd.s32 %s20, %s282
      %s284 = smul.u32 8, %s283
      %p285 = scmp.lt.s32.totalorder %s284, 7
      %s286 = scalar_select %p285, %s284, 7
      %s287 = smul.addr %s286, 8
      %s288 = scalar_lea.vmem %s0, %s287
      %s289 = smul.u32 %s20, 2
      %s290 = ssub.s32 0, %s289
      %s291 = smul.u32 %s19, %s290
      %s292 = sadd.s32 %s20, %s291
      %s293 = smul.u32 8, %s292
      %p294 = scmp.lt.s32.totalorder %s19, 1
      %s295 = scalar_select %p294, %s19, 1
      %s296 = smul.addr %s295, 2
      %s297 = smul.addr %s296, 8
      %s298 = scalar_lea.vmem %s1, %s297
      %p299 = scmp.lt.s32.totalorder %s19, 1
      %s300 = scalar_select %p299, %s19, 1
      %s301 = smul.addr %s300, 4
      %s302 = smul.addr %s301, 8
      %s303 = scalar_lea.vmem %s2, %s302
      %p304 = scmp.lt.s32.totalorder %s19, 1
      %s305 = scalar_select %p304, %s19, 1
      %s306 = scalar_lea.vmem %s3, %s305
      %s307 = smul.u32 %s20, 2
      %s308 = ssub.s32 0, %s307
      %s309 = smul.u32 %s19, %s308
      %s310 = sadd.s32 %s20, %s309
      %s311 = smul.u32 8, %s310
      %p312 = scmp.lt.s32.totalorder %s19, 1
      %s313 = scalar_select %p312, %s19, 1
      %p314 = scmp.lt.s32.totalorder %s311, 7
      %s315 = scalar_select %p314, %s311, 7
      %s316 = smul.addr %s313, 8
      %s317 = sadd.s32 %s315, %s316
      %s318 = smul.addr %s317, 8
      %s319 = scalar_lea.vmem %s4, %s318
      %s320 = smul.u32 %s20, 2
      %s321 = ssub.s32 0, %s320
      %s322 = smul.u32 %s19, %s321
      %s323 = sadd.s32 %s20, %s322
      %s324 = smul.u32 8, %s323
      %p325 = scmp.eq.s32.totalorder %s19, 1
      %p326 = scmp.eq.s32.totalorder %s20, 0
      // Predicated region
      $region37: #{lstm_forward.2} parent=35 // pred_check
        %p327 = pneg %p326
      $region38: #{lstm_forward.2} parent=35 // pred_check_branch
        %329 = sbr.rel (%p327) target = $region40
      $region39: #{lstm_forward.2} parent=35 // pred_region
        %vm330 = vcmask 261120
        %331 = vst.msk [vmem:[#allocation3] sm:$0xff] %vm330, 0.0
        %332 = vst.msk [vmem:[#allocation4] sm:$0xff] %vm330, 0.0
      $region40: #{lstm_forward.2} parent=35 // pred_fallthru
        _
      %v333 = vld [vmem:[%s288] sm:$0xff]
      %v334 = vld [vmem:[%s288 + $0x8] sm:$0xff]
      %v335 = vld [vmem:[%s288 + $0x10] sm:$0xff]
      %v336 = vld [vmem:[%s288 + $0x18] sm:$0xff]
      %v337 = vld [vmem:[%s288 + $0x20] sm:$0xff]
      %v338 = vld [vmem:[%s288 + $0x28] sm:$0xff]
      %v339 = vld [vmem:[%s288 + $0x30] sm:$0xff]
      %v340 = vld [vmem:[%s288 + $0x38] sm:$0xff]
      %v341 = vld [vmem:[%s298] sm:$0xff]
      %v342 = vld [vmem:[%s298 + $0x8] sm:$0xff]
      %v343 = vld [vmem:[%s306] sm:$0x1]
      %v345 = vlaneseq
      %v346 = vshrl.u32 %v345, 7
      %v347 = vsub.s32 0, %v346
      %v348 = vrot.slane %v343, %v347
      %vm350 = vcmask 130048
      %v352 = vsel %vm350, %v333, 0
      %v355 = vsel %vm350, %v334, 0
      %v358 = vsel %vm350, %v335, 0
      %v361 = vsel %vm350, %v336, 0
      %v364 = vsel %vm350, %v337, 0
      %v367 = vsel %vm350, %v338, 0
      %v370 = vsel %vm350, %v339, 0
      %v373 = vsel %vm350, %v340, 0
      %375 = vmatprep.subr.mxu0 0.0
      %376 = vmatpush1.msra.mxu0 %v341
      %377 = vmatprep.subr.mxu0 0.0
      %378 = vmatpush1.msra.mxu0 %v342
      %379 = vmatprep.subr.mxu0 0.0
      %380 = vmatpush1.msra.mxu0 0.0
      %381 = vmatprep.subr.mxu0 0.0
      %382 = vmatpush1.msra.mxu0 0.0
      %383 = vmatprep.subr.mxu0 0.0
      %384 = vmatpush1.msra.mxu0 0.0
      %385 = vmatprep.subr.mxu0 0.0
      %386 = vmatpush1.msra.mxu0 0.0
      %387 = vmatprep.subr.mxu0 0.0
      %388 = vmatpush1.msra.mxu0 0.0
      %389 = vmatprep.subr.mxu0 0.0
      %390 = vmatpush1.msra.mxu0 0.0
      %391 = vmatprep.subr.mxu0 0.0
      %392 = vmatpush1.msra.mxu0 0.0
      %393 = vmatprep.subr.mxu0 0.0
      %394 = vmatpush1.msra.mxu0 0.0
      %395 = vmatprep.subr.mxu0 0.0
      %396 = vmatpush1.msra.mxu0 0.0
      %397 = vmatprep.subr.mxu0 0.0
      %398 = vmatpush1.msra.mxu0 0.0
      %399 = vmatprep.subr.mxu0 0.0
      %400 = vmatpush1.msra.mxu0 0.0
      %401 = vmatprep.subr.mxu0 0.0
      %402 = vmatpush1.msra.mxu0 0.0
      %403 = vmatprep.subr.mxu0 0.0
      %404 = vmatpush1.msra.mxu0 0.0
      %405 = vmatprep.subr.mxu0 0.0
      %406 = vmatpush1.msra.mxu0 0.0
      %407 = vmatprep.subr.mxu0 0.0
      %408 = vmatpush1.msra.mxu0 0.0
      %409 = vmatprep.subr.mxu0 0.0
      %410 = vmatpush1.msra.mxu0 0.0
      %411 = vmatprep.subr.mxu0 0.0
      %412 = vmatpush1.msra.mxu0 0.0
      %413 = vmatprep.subr.mxu0 0.0
      %414 = vmatpush1.msra.mxu0 0.0
      %415 = vmatprep.subr.mxu0 0.0
      %416 = vmatpush1.msra.mxu0 0.0
      %417 = vmatprep.subr.mxu0 0.0
      %418 = vmatpush1.msra.mxu0 0.0
      %419 = vmatprep.subr.mxu0 0.0
      %420 = vmatpush1.msra.mxu0 0.0
      %421 = vmatprep.subr.mxu0 0.0
      %422 = vmatpush1.msra.mxu0 0.0
      %423 = vmatprep.subr.mxu0 0.0
      %424 = vmatpush1.msra.mxu0 0.0
      %425 = vmatprep.subr.mxu0 0.0
      %426 = vmatpush1.msra.mxu0 0.0
      %427 = vmatprep.subr.mxu0 0.0
      %428 = vmatpush1.msra.mxu0 0.0
      %429 = vmatprep.subr.mxu0 0.0
      %430 = vmatpush1.msra.mxu0 0.0
      %431 = vmatprep.subr.mxu0 0.0
      %432 = vmatpush1.msra.mxu0 0.0
      %433 = vmatprep.subr.mxu0 0.0
      %434 = vmatpush1.msra.mxu0 0.0
      %435 = vmatprep.subr.mxu0 0.0
      %436 = vmatpush1.msra.mxu0 0.0
      %437 = vmatprep.subr.mxu0 0.0
      %438 = vmatpush1.msra.mxu0 0.0
      %439 = vmatprep.mubr.f32.mxu0 0.0
      %440 = vmatmul.mubr.f32.gmra.mrb[0].mxu0 %v352
      %v441 = vpop.f32.mrb[0].mxu0
      %v442 = vadd.f32 %v348, %v441
      %v443 = vpop.f32.mrb[0].mxu0
      %444 = vmatprep.mubr.f32.mxu0 0.0
      %445 = vmatmul.mubr.f32.gmra.mrb[0].mxu0 %v355
      %v446 = vpop.f32.mrb[0].mxu0
      %v447 = vadd.f32 %v348, %v446
      %v448 = vpop.f32.mrb[0].mxu0
      %449 = vmatprep.mubr.f32.mxu0 0.0
      %450 = vmatmul.mubr.f32.gmra.mrb[0].mxu0 %v358
      %v451 = vpop.f32.mrb[0].mxu0
      %v452 = vadd.f32 %v348, %v451
      %v453 = vpop.f32.mrb[0].mxu0
      %454 = vmatprep.mubr.f32.mxu0 0.0
      %455 = vmatmul.mubr.f32.gmra.mrb[0].mxu0 %v361
      %v456 = vpop.f32.mrb[0].mxu0
      %v457 = vadd.f32 %v348, %v456
      %v458 = vpop.f32.mrb[0].mxu0
      %459 = vmatprep.mubr.f32.mxu0 0.0
      %460 = vmatmul.mubr.f32.gmra.mrb[0].mxu0 %v364
      %v461 = vpop.f32.mrb[0].mxu0
      %v462 = vadd.f32 %v348, %v461
      %v463 = vpop.f32.mrb[0].mxu0
      %464 = vmatprep.mubr.f32.mxu0 0.0
      %465 = vmatmul.mubr.f32.gmra.mrb[0].mxu0 %v367
      %v466 = vpop.f32.mrb[0].mxu0
      %v467 = vadd.f32 %v348, %v466
      %v468 = vpop.f32.mrb[0].mxu0
      %469 = vmatprep.mubr.f32.mxu0 0.0
      %470 = vmatmul.mubr.f32.gmra.mrb[0].mxu0 %v370
      %v471 = vpop.f32.mrb[0].mxu0
      %v472 = vadd.f32 %v348, %v471
      %v473 = vpop.f32.mrb[0].mxu0
      %474 = vmatprep.mubr.f32.mxu0 0.0
      %475 = vmatmul.mubr.f32.gmra.mrb[0].mxu0 %v373
      %v476 = vpop.f32.mrb[0].mxu0
      %v477 = vadd.f32 %v348, %v476
      %v478 = vpop.f32.mrb[0].mxu0
      %479 = vdwg.mxu0
      %480 = vst [vmem:[#allocation2] sm:$0xff] %v442
      %481 = vst [vmem:[#allocation2 + $0x8] sm:$0xff] %v447
      %482 = vst [vmem:[#allocation2 + $0x10] sm:$0xff] %v452
      %483 = vst [vmem:[#allocation2 + $0x18] sm:$0xff] %v457
      %484 = vst [vmem:[#allocation2 + $0x20] sm:$0xff] %v462
      %485 = vst [vmem:[#allocation2 + $0x28] sm:$0xff] %v467
      %486 = vst [vmem:[#allocation2 + $0x30] sm:$0xff] %v472
      %487 = vst [vmem:[#allocation2 + $0x38] sm:$0xff] %v477
      %v488 = vld [vmem:[%s303] sm:$0xff]
      %v489 = vld [vmem:[%s303 + $0x8] sm:$0xff]
      %v490 = vld [vmem:[%s303 + $0x10] sm:$0xff]
      %v491 = vld [vmem:[%s303 + $0x18] sm:$0xff]
      %v492 = vlaneseq
      %v493 = vand.u32 %v492, 127
      %vm494 = vcmp.ge.s32.totalorder %v493, 64
      %vm495 = vcmp.lt.s32.totalorder %v493, 96
      %vm496 = vmand %vm494, %vm495
      %v497 = vld [vmem:[#allocation3] sm:$0xff]
      %v498 = vld [vmem:[#allocation4] sm:$0xff]
      %s499 = scalar_select %p325, 7, 0
      %s500 = smul.u32 %s499, 8
      %s501 = scalar_lea.vmem [#allocation2], %s500
      %v502 = vld [vmem:[%s501] sm:$0xff]
      %vm503 = vcmask 261120
      %v505 = vsel %vm503, %v497, 0
      %507 = vmatprep.subr.mxu0 0.0
      %508 = vmatpush1.msra.mxu0 %v488
      %509 = vmatprep.subr.mxu0 0.0
      %510 = vmatpush1.msra.mxu0 %v489
      %511 = vmatprep.subr.mxu0 0.0
      %512 = vmatpush1.msra.mxu0 %v490
      %513 = vmatprep.subr.mxu0 0.0
      %514 = vmatpush1.msra.mxu0 %v491
      %515 = vmatprep.subr.mxu0 0.0
      %516 = vmatpush1.msra.mxu0 0.0
      %517 = vmatprep.subr.mxu0 0.0
      %518 = vmatpush1.msra.mxu0 0.0
      %519 = vmatprep.subr.mxu0 0.0
      %520 = vmatpush1.msra.mxu0 0.0
      %521 = vmatprep.subr.mxu0 0.0
      %522 = vmatpush1.msra.mxu0 0.0
      %523 = vmatprep.subr.mxu0 0.0
      %524 = vmatpush1.msra.mxu0 0.0
      %525 = vmatprep.subr.mxu0 0.0
      %526 = vmatpush1.msra.mxu0 0.0
      %527 = vmatprep.subr.mxu0 0.0
      %528 = vmatpush1.msra.mxu0 0.0
      %529 = vmatprep.subr.mxu0 0.0
      %530 = vmatpush1.msra.mxu0 0.0
      %531 = vmatprep.subr.mxu0 0.0
      %532 = vmatpush1.msra.mxu0 0.0
      %533 = vmatprep.subr.mxu0 0.0
      %534 = vmatpush1.msra.mxu0 0.0
      %535 = vmatprep.subr.mxu0 0.0
      %536 = vmatpush1.msra.mxu0 0.0
      %537 = vmatprep.subr.mxu0 0.0
      %538 = vmatpush1.msra.mxu0 0.0
      %539 = vmatprep.subr.mxu0 0.0
      %540 = vmatpush1.msra.mxu0 0.0
      %541 = vmatprep.subr.mxu0 0.0
      %542 = vmatpush1.msra.mxu0 0.0
      %543 = vmatprep.subr.mxu0 0.0
      %544 = vmatpush1.msra.mxu0 0.0
      %545 = vmatprep.subr.mxu0 0.0
      %546 = vmatpush1.msra.mxu0 0.0
      %547 = vmatprep.subr.mxu0 0.0
      %548 = vmatpush1.msra.mxu0 0.0
      %549 = vmatprep.subr.mxu0 0.0
      %550 = vmatpush1.msra.mxu0 0.0
      %551 = vmatprep.subr.mxu0 0.0
      %552 = vmatpush1.msra.mxu0 0.0
      %553 = vmatprep.subr.mxu0 0.0
      %554 = vmatpush1.msra.mxu0 0.0
      %555 = vmatprep.subr.mxu0 0.0
      %556 = vmatpush1.msra.mxu0 0.0
      %557 = vmatprep.subr.mxu0 0.0
      %558 = vmatpush1.msra.mxu0 0.0
      %559 = vmatprep.subr.mxu0 0.0
      %560 = vmatpush1.msra.mxu0 0.0
      %561 = vmatprep.subr.mxu0 0.0
      %562 = vmatpush1.msra.mxu0 0.0
      %563 = vmatprep.subr.mxu0 0.0
      %564 = vmatpush1.msra.mxu0 0.0
      %565 = vmatprep.subr.mxu0 0.0
      %566 = vmatpush1.msra.mxu0 0.0
      %567 = vmatprep.subr.mxu0 0.0
      %568 = vmatpush1.msra.mxu0 0.0
      %569 = vmatprep.subr.mxu0 0.0
      %570 = vmatpush1.msra.mxu0 0.0
      %571 = vmatprep.mubr.f32.mxu0 0.0
      %572 = vmatmul.mubr.f32.gmra.mrb[0].mxu0 %v505
      %v573 = vpop.f32.mrb[0].mxu0
      %v574 = vadd.f32 0.0, %v573
      %v575 = vpop.f32.mrb[0].mxu0
      %576 = vdwg.mxu0
      %v577 = vadd.f32 %v502, %v574
      %v578 = vtanh.pop %v577
      %v579 = vxor.u32 %v577, 2147483648
      %v580 = vmul.f32 %v579, 1.442695
      %v581 = vpow.pop %v580
      %v582 = vadd.f32 %v581, 1.0
      %v583 = vrcp.pop %v582
      %v584 = vmul.f32 1.0, %v583
      %v585 = vsel %vm496, %v578, %v584
      %587 = vrot.lane.b32.xlu0 %v498, 32
      %v588 = vpop.permute.xlu0 %587
      %v590 = vmul.f32 %v585, %v588
      %592 = vrot.lane.b32.xlu0 %v585, 64
      %v593 = vpop.permute.xlu0 %592
      %v595 = vmul.f32 %v585, %v593
      %597 = vrot.lane.b32.xlu0 %v595, 32
      %v598 = vpop.permute.xlu0 %597
      %v600 = vadd.f32 %v590, %v598
      %v601 = vtanh.pop %v600
      %603 = vrot.lane.b32.xlu0 %v601, 64
      %v604 = vpop.permute.xlu0 %603
      %v606 = vmul.f32 %v585, %v604
      %608 = vrot.lane.b32.xlu0 %v606, 32
      %v609 = vpop.permute.xlu0 %608
      %s611 = scalar_lea.vmem %s319, %s500
      %612 = vst.msk [vmem:[%s611] sm:$0xff] %vm503, %v609
      %s613 = scalar_select %p325, 6, 1
      %s614 = smul.u32 %s613, 8
      %s615 = scalar_lea.vmem [#allocation2], %s614
      %v616 = vld [vmem:[%s615] sm:$0xff]
      %v617 = vsel %vm503, %v609, 0
      %619 = vmatprep.subr.mxu0 0.0
      %620 = vmatpush1.msra.mxu0 %v488
      %621 = vmatprep.subr.mxu0 0.0
      %622 = vmatpush1.msra.mxu0 %v489
      %623 = vmatprep.subr.mxu0 0.0
      %624 = vmatpush1.msra.mxu0 %v490
      %625 = vmatprep.subr.mxu0 0.0
      %626 = vmatpush1.msra.mxu0 %v491
      %627 = vmatprep.subr.mxu0 0.0
      %628 = vmatpush1.msra.mxu0 0.0
      %629 = vmatprep.subr.mxu0 0.0
      %630 = vmatpush1.msra.mxu0 0.0
      %631 = vmatprep.subr.mxu0 0.0
      %632 = vmatpush1.msra.mxu0 0.0
      %633 = vmatprep.subr.mxu0 0.0
      %634 = vmatpush1.msra.mxu0 0.0
      %635 = vmatprep.subr.mxu0 0.0
      %636 = vmatpush1.msra.mxu0 0.0
      %637 = vmatprep.subr.mxu0 0.0
      %638 = vmatpush1.msra.mxu0 0.0
      %639 = vmatprep.subr.mxu0 0.0
      %640 = vmatpush1.msra.mxu0 0.0
      %641 = vmatprep.subr.mxu0 0.0
      %642 = vmatpush1.msra.mxu0 0.0
      %643 = vmatprep.subr.mxu0 0.0
      %644 = vmatpush1.msra.mxu0 0.0
      %645 = vmatprep.subr.mxu0 0.0
      %646 = vmatpush1.msra.mxu0 0.0
      %647 = vmatprep.subr.mxu0 0.0
      %648 = vmatpush1.msra.mxu0 0.0
      %649 = vmatprep.subr.mxu0 0.0
      %650 = vmatpush1.msra.mxu0 0.0
      %651 = vmatprep.subr.mxu0 0.0
      %652 = vmatpush1.msra.mxu0 0.0
      %653 = vmatprep.subr.mxu0 0.0
      %654 = vmatpush1.msra.mxu0 0.0
      %655 = vmatprep.subr.mxu0 0.0
      %656 = vmatpush1.msra.mxu0 0.0
      %657 = vmatprep.subr.mxu0 0.0
      %658 = vmatpush1.msra.mxu0 0.0
      %659 = vmatprep.subr.mxu0 0.0
      %660 = vmatpush1.msra.mxu0 0.0
      %661 = vmatprep.subr.mxu0 0.0
      %662 = vmatpush1.msra.mxu0 0.0
      %663 = vmatprep.subr.mxu0 0.0
      %664 = vmatpush1.msra.mxu0 0.0
      %665 = vmatprep.subr.mxu0 0.0
      %666 = vmatpush1.msra.mxu0 0.0
      %667 = vmatprep.subr.mxu0 0.0
      %668 = vmatpush1.msra.mxu0 0.0
      %669 = vmatprep.subr.mxu0 0.0
      %670 = vmatpush1.msra.mxu0 0.0
      %671 = vmatprep.subr.mxu0 0.0
      %672 = vmatpush1.msra.mxu0 0.0
      %673 = vmatprep.subr.mxu0 0.0
      %674 = vmatpush1.msra.mxu0 0.0
      %675 = vmatprep.subr.mxu0 0.0
      %676 = vmatpush1.msra.mxu0 0.0
      %677 = vmatprep.subr.mxu0 0.0
      %678 = vmatpush1.msra.mxu0 0.0
      %679 = vmatprep.subr.mxu0 0.0
      %680 = vmatpush1.msra.mxu0 0.0
      %681 = vmatprep.subr.mxu0 0.0
      %682 = vmatpush1.msra.mxu0 0.0
      %683 = vmatprep.mubr.f32.mxu0 0.0
      %684 = vmatmul.mubr.f32.gmra.mrb[0].mxu0 %v617
      %v685 = vpop.f32.mrb[0].mxu0
      %v686 = vadd.f32 0.0, %v685
      %v687 = vpop.f32.mrb[0].mxu0
      %688 = vdwg.mxu0
      %v689 = vadd.f32 %v616, %v686
      %v690 = vtanh.pop %v689
      %v691 = vxor.u32 %v689, 2147483648
      %v692 = vmul.f32 %v691, 1.442695
      %v693 = vpow.pop %v692
      %v694 = vadd.f32 %v693, 1.0
      %v695 = vrcp.pop %v694
      %v696 = vmul.f32 1.0, %v695
      %v697 = vsel %vm496, %v690, %v696
      %v698 = vmul.f32 %v697, %v600
      %700 = vrot.lane.b32.xlu0 %v697, 64
      %v701 = vpop.permute.xlu0 %700
      %v703 = vmul.f32 %v697, %v701
      %705 = vrot.lane.b32.xlu0 %v703, 32
      %v706 = vpop.permute.xlu0 %705
      %v708 = vadd.f32 %v698, %v706
      %v709 = vtanh.pop %v708
      %711 = vrot.lane.b32.xlu0 %v709, 64
      %v712 = vpop.permute.xlu0 %711
      %v714 = vmul.f32 %v697, %v712
      %716 = vrot.lane.b32.xlu0 %v714, 32
      %v717 = vpop.permute.xlu0 %716
      %s719 = scalar_lea.vmem %s319, %s614
      %720 = vst.msk [vmem:[%s719] sm:$0xff] %vm503, %v717
      %s721 = scalar_select %p325, 5, 2
      %s722 = smul.u32 %s721, 8
      %s723 = scalar_lea.vmem [#allocation2], %s722
      %v724 = vld [vmem:[%s723] sm:$0xff]
      %v725 = vsel %vm503, %v717, 0
      %727 = vmatprep.subr.mxu0 0.0
      %728 = vmatpush1.msra.mxu0 %v488
      %729 = vmatprep.subr.mxu0 0.0
      %730 = vmatpush1.msra.mxu0 %v489
      %731 = vmatprep.subr.mxu0 0.0
      %732 = vmatpush1.msra.mxu0 %v490
      %733 = vmatprep.subr.mxu0 0.0
      %734 = vmatpush1.msra.mxu0 %v491
      %735 = vmatprep.subr.mxu0 0.0
      %736 = vmatpush1.msra.mxu0 0.0
      %737 = vmatprep.subr.mxu0 0.0
      %738 = vmatpush1.msra.mxu0 0.0
      %739 = vmatprep.subr.mxu0 0.0
      %740 = vmatpush1.msra.mxu0 0.0
      %741 = vmatprep.subr.mxu0 0.0
      %742 = vmatpush1.msra.mxu0 0.0
      %743 = vmatprep.subr.mxu0 0.0
      %744 = vmatpush1.msra.mxu0 0.0
      %745 = vmatprep.subr.mxu0 0.0
      %746 = vmatpush1.msra.mxu0 0.0
      %747 = vmatprep.subr.mxu0 0.0
      %748 = vmatpush1.msra.mxu0 0.0
      %749 = vmatprep.subr.mxu0 0.0
      %750 = vmatpush1.msra.mxu0 0.0
      %751 = vmatprep.subr.mxu0 0.0
      %752 = vmatpush1.msra.mxu0 0.0
      %753 = vmatprep.subr.mxu0 0.0
      %754 = vmatpush1.msra.mxu0 0.0
      %755 = vmatprep.subr.mxu0 0.0
      %756 = vmatpush1.msra.mxu0 0.0
      %757 = vmatprep.subr.mxu0 0.0
      %758 = vmatpush1.msra.mxu0 0.0
      %759 = vmatprep.subr.mxu0 0.0
      %760 = vmatpush1.msra.mxu0 0.0
      %761 = vmatprep.subr.mxu0 0.0
      %762 = vmatpush1.msra.mxu0 0.0
      %763 = vmatprep.subr.mxu0 0.0
      %764 = vmatpush1.msra.mxu0 0.0
      %765 = vmatprep.subr.mxu0 0.0
      %766 = vmatpush1.msra.mxu0 0.0
      %767 = vmatprep.subr.mxu0 0.0
      %768 = vmatpush1.msra.mxu0 0.0
      %769 = vmatprep.subr.mxu0 0.0
      %770 = vmatpush1.msra.mxu0 0.0
      %771 = vmatprep.subr.mxu0 0.0
      %772 = vmatpush1.msra.mxu0 0.0
      %773 = vmatprep.subr.mxu0 0.0
      %774 = vmatpush1.msra.mxu0 0.0
      %775 = vmatprep.subr.mxu0 0.0
      %776 = vmatpush1.msra.mxu0 0.0
      %777 = vmatprep.subr.mxu0 0.0
      %778 = vmatpush1.msra.mxu0 0.0
      %779 = vmatprep.subr.mxu0 0.0
      %780 = vmatpush1.msra.mxu0 0.0
      %781 = vmatprep.subr.mxu0 0.0
      %782 = vmatpush1.msra.mxu0 0.0
      %783 = vmatprep.subr.mxu0 0.0
      %784 = vmatpush1.msra.mxu0 0.0
      %785 = vmatprep.subr.mxu0 0.0
      %786 = vmatpush1.msra.mxu0 0.0
      %787 = vmatprep.subr.mxu0 0.0
      %788 = vmatpush1.msra.mxu0 0.0
      %789 = vmatprep.subr.mxu0 0.0
      %790 = vmatpush1.msra.mxu0 0.0
      %791 = vmatprep.mubr.f32.mxu0 0.0
      %792 = vmatmul.mubr.f32.gmra.mrb[0].mxu0 %v725
      %v793 = vpop.f32.mrb[0].mxu0
      %v794 = vadd.f32 0.0, %v793
      %v795 = vpop.f32.mrb[0].mxu0
      %796 = vdwg.mxu0
      %v797 = vadd.f32 %v724, %v794
      %v798 = vtanh.pop %v797
      %v799 = vxor.u32 %v797, 2147483648
      %v800 = vmul.f32 %v799, 1.442695
      %v801 = vpow.pop %v800
      %v802 = vadd.f32 %v801, 1.0
      %v803 = vrcp.pop %v802
      %v804 = vmul.f32 1.0, %v803
      %v805 = vsel %vm496, %v798, %v804
      %v806 = vmul.f32 %v805, %v708
      %808 = vrot.lane.b32.xlu0 %v805, 64
      %v809 = vpop.permute.xlu0 %808
      %v811 = vmul.f32 %v805, %v809
      %813 = vrot.lane.b32.xlu0 %v811, 32
      %v814 = vpop.permute.xlu0 %813
      %v816 = vadd.f32 %v806, %v814
      %v817 = vtanh.pop %v816
      %819 = vrot.lane.b32.xlu0 %v817, 64
      %v820 = vpop.permute.xlu0 %819
      %v822 = vmul.f32 %v805, %v820
      %824 = vrot.lane.b32.xlu0 %v822, 32
      %v825 = vpop.permute.xlu0 %824
      %s827 = scalar_lea.vmem %s319, %s722
      %828 = vst.msk [vmem:[%s827] sm:$0xff] %vm503, %v825
      %s829 = scalar_select %p325, 4, 3
      %s830 = smul.u32 %s829, 8
      %s831 = scalar_lea.vmem [#allocation2], %s830
      %v832 = vld [vmem:[%s831] sm:$0xff]
      %v833 = vsel %vm503, %v825, 0
      %835 = vmatprep.subr.mxu0 0.0
      %836 = vmatpush1.msra.mxu0 %v488
      %837 = vmatprep.subr.mxu0 0.0
      %838 = vmatpush1.msra.mxu0 %v489
      %839 = vmatprep.subr.mxu0 0.0
      %840 = vmatpush1.msra.mxu0 %v490
      %841 = vmatprep.subr.mxu0 0.0
      %842 = vmatpush1.msra.mxu0 %v491
      %843 = vmatprep.subr.mxu0 0.0
      %844 = vmatpush1.msra.mxu0 0.0
      %845 = vmatprep.subr.mxu0 0.0
      %846 = vmatpush1.msra.mxu0 0.0
      %847 = vmatprep.subr.mxu0 0.0
      %848 = vmatpush1.msra.mxu0 0.0
      %849 = vmatprep.subr.mxu0 0.0
      %850 = vmatpush1.msra.mxu0 0.0
      %851 = vmatprep.subr.mxu0 0.0
      %852 = vmatpush1.msra.mxu0 0.0
      %853 = vmatprep.subr.mxu0 0.0
      %854 = vmatpush1.msra.mxu0 0.0
      %855 = vmatprep.subr.mxu0 0.0
      %856 = vmatpush1.msra.mxu0 0.0
      %857 = vmatprep.subr.mxu0 0.0
      %858 = vmatpush1.msra.mxu0 0.0
      %859 = vmatprep.subr.mxu0 0.0
      %860 = vmatpush1.msra.mxu0 0.0
      %861 = vmatprep.subr.mxu0 0.0
      %862 = vmatpush1.msra.mxu0 0.0
      %863 = vmatprep.subr.mxu0 0.0
      %864 = vmatpush1.msra.mxu0 0.0
      %865 = vmatprep.subr.mxu0 0.0
      %866 = vmatpush1.msra.mxu0 0.0
      %867 = vmatprep.subr.mxu0 0.0
      %868 = vmatpush1.msra.mxu0 0.0
      %869 = vmatprep.subr.mxu0 0.0
      %870 = vmatpush1.msra.mxu0 0.0
      %871 = vmatprep.subr.mxu0 0.0
      %872 = vmatpush1.msra.mxu0 0.0
      %873 = vmatprep.subr.mxu0 0.0
      %874 = vmatpush1.msra.mxu0 0.0
      %875 = vmatprep.subr.mxu0 0.0
      %876 = vmatpush1.msra.mxu0 0.0
      %877 = vmatprep.subr.mxu0 0.0
      %878 = vmatpush1.msra.mxu0 0.0
      %879 = vmatprep.subr.mxu0 0.0
      %880 = vmatpush1.msra.mxu0 0.0
      %881 = vmatprep.subr.mxu0 0.0
      %882 = vmatpush1.msra.mxu0 0.0
      %883 = vmatprep.subr.mxu0 0.0
      %884 = vmatpush1.msra.mxu0 0.0
      %885 = vmatprep.subr.mxu0 0.0
      %886 = vmatpush1.msra.mxu0 0.0
      %887 = vmatprep.subr.mxu0 0.0
      %888 = vmatpush1.msra.mxu0 0.0
      %889 = vmatprep.subr.mxu0 0.0
      %890 = vmatpush1.msra.mxu0 0.0
      %891 = vmatprep.subr.mxu0 0.0
      %892 = vmatpush1.msra.mxu0 0.0
      %893 = vmatprep.subr.mxu0 0.0
      %894 = vmatpush1.msra.mxu0 0.0
      %895 = vmatprep.subr.mxu0 0.0
      %896 = vmatpush1.msra.mxu0 0.0
      %897 = vmatprep.subr.mxu0 0.0
      %898 = vmatpush1.msra.mxu0 0.0
      %899 = vmatprep.mubr.f32.mxu0 0.0
      %900 = vmatmul.mubr.f32.gmra.mrb[0].mxu0 %v833
      %v901 = vpop.f32.mrb[0].mxu0
      %v902 = vadd.f32 0.0, %v901
      %v903 = vpop.f32.mrb[0].mxu0
      %904 = vdwg.mxu0
      %v905 = vadd.f32 %v832, %v902
      %v906 = vtanh.pop %v905
      %v907 = vxor.u32 %v905, 2147483648
      %v908 = vmul.f32 %v907, 1.442695
      %v909 = vpow.pop %v908
      %v910 = vadd.f32 %v909, 1.0
      %v911 = vrcp.pop %v910
      %v912 = vmul.f32 1.0, %v911
      %v913 = vsel %vm496, %v906, %v912
      %v914 = vmul.f32 %v913, %v816
      %916 = vrot.lane.b32.xlu0 %v913, 64
      %v917 = vpop.permute.xlu0 %916
      %v919 = vmul.f32 %v913, %v917
      %921 = vrot.lane.b32.xlu0 %v919, 32
      %v922 = vpop.permute.xlu0 %921
      %v924 = vadd.f32 %v914, %v922
      %v925 = vtanh.pop %v924
      %927 = vrot.lane.b32.xlu0 %v925, 64
      %v928 = vpop.permute.xlu0 %927
      %v930 = vmul.f32 %v913, %v928
      %932 = vrot.lane.b32.xlu0 %v930, 32
      %v933 = vpop.permute.xlu0 %932
      %s935 = scalar_lea.vmem %s319, %s830
      %936 = vst.msk [vmem:[%s935] sm:$0xff] %vm503, %v933
      %s937 = scalar_select %p325, 3, 4
      %s938 = smul.u32 %s937, 8
      %s939 = scalar_lea.vmem [#allocation2], %s938
      %v940 = vld [vmem:[%s939] sm:$0xff]
      %v941 = vsel %vm503, %v933, 0
      %943 = vmatprep.subr.mxu0 0.0
      %944 = vmatpush1.msra.mxu0 %v488
      %945 = vmatprep.subr.mxu0 0.0
      %946 = vmatpush1.msra.mxu0 %v489
      %947 = vmatprep.subr.mxu0 0.0
      %948 = vmatpush1.msra.mxu0 %v490
      %949 = vmatprep.subr.mxu0 0.0
      %950 = vmatpush1.msra.mxu0 %v491
      %951 = vmatprep.subr.mxu0 0.0
      %952 = vmatpush1.msra.mxu0 0.0
      %953 = vmatprep.subr.mxu0 0.0
      %954 = vmatpush1.msra.mxu0 0.0
      %955 = vmatprep.subr.mxu0 0.0
      %956 = vmatpush1.msra.mxu0 0.0
      %957 = vmatprep.subr.mxu0 0.0
      %958 = vmatpush1.msra.mxu0 0.0
      %959 = vmatprep.subr.mxu0 0.0
      %960 = vmatpush1.msra.mxu0 0.0
      %961 = vmatprep.subr.mxu0 0.0
      %962 = vmatpush1.msra.mxu0 0.0
      %963 = vmatprep.subr.mxu0 0.0
      %964 = vmatpush1.msra.mxu0 0.0
      %965 = vmatprep.subr.mxu0 0.0
      %966 = vmatpush1.msra.mxu0 0.0
      %967 = vmatprep.subr.mxu0 0.0
      %968 = vmatpush1.msra.mxu0 0.0
      %969 = vmatprep.subr.mxu0 0.0
      %970 = vmatpush1.msra.mxu0 0.0
      %971 = vmatprep.subr.mxu0 0.0
      %972 = vmatpush1.msra.mxu0 0.0
      %973 = vmatprep.subr.mxu0 0.0
      %974 = vmatpush1.msra.mxu0 0.0
      %975 = vmatprep.subr.mxu0 0.0
      %976 = vmatpush1.msra.mxu0 0.0
      %977 = vmatprep.subr.mxu0 0.0
      %978 = vmatpush1.msra.mxu0 0.0
      %979 = vmatprep.subr.mxu0 0.0
      %980 = vmatpush1.msra.mxu0 0.0
      %981 = vmatprep.subr.mxu0 0.0
      %982 = vmatpush1.msra.mxu0 0.0
      %983 = vmatprep.subr.mxu0 0.0
      %984 = vmatpush1.msra.mxu0 0.0
      %985 = vmatprep.subr.mxu0 0.0
      %986 = vmatpush1.msra.mxu0 0.0
      %987 = vmatprep.subr.mxu0 0.0
      %988 = vmatpush1.msra.mxu0 0.0
      %989 = vmatprep.subr.mxu0 0.0
      %990 = vmatpush1.msra.mxu0 0.0
      %991 = vmatprep.subr.mxu0 0.0
      %992 = vmatpush1.msra.mxu0 0.0
      %993 = vmatprep.subr.mxu0 0.0
      %994 = vmatpush1.msra.mxu0 0.0
      %995 = vmatprep.subr.mxu0 0.0
      %996 = vmatpush1.msra.mxu0 0.0
      %997 = vmatprep.subr.mxu0 0.0
      %998 = vmatpush1.msra.mxu0 0.0
      %999 = vmatprep.subr.mxu0 0.0
      %1000 = vmatpush1.msra.mxu0 0.0
      %1001 = vmatprep.subr.mxu0 0.0
      %1002 = vmatpush1.msra.mxu0 0.0
      %1003 = vmatprep.subr.mxu0 0.0
      %1004 = vmatpush1.msra.mxu0 0.0
      %1005 = vmatprep.subr.mxu0 0.0
      %1006 = vmatpush1.msra.mxu0 0.0
      %1007 = vmatprep.mubr.f32.mxu0 0.0
      %1008 = vmatmul.mubr.f32.gmra.mrb[0].mxu0 %v941
      %v1009 = vpop.f32.mrb[0].mxu0
      %v1010 = vadd.f32 0.0, %v1009
      %v1011 = vpop.f32.mrb[0].mxu0
      %1012 = vdwg.mxu0
      %v1013 = vadd.f32 %v940, %v1010
      %v1014 = vtanh.pop %v1013
      %v1015 = vxor.u32 %v1013, 2147483648
      %v1016 = vmul.f32 %v1015, 1.442695
      %v1017 = vpow.pop %v1016
      %v1018 = vadd.f32 %v1017, 1.0
      %v1019 = vrcp.pop %v1018
      %v1020 = vmul.f32 1.0, %v1019
      %v1021 = vsel %vm496, %v1014, %v1020
      %v1022 = vmul.f32 %v1021, %v924
      %1024 = vrot.lane.b32.xlu0 %v1021, 64
      %v1025 = vpop.permute.xlu0 %1024
      %v1027 = vmul.f32 %v1021, %v1025
      %1029 = vrot.lane.b32.xlu0 %v1027, 32
      %v1030 = vpop.permute.xlu0 %1029
      %v1032 = vadd.f32 %v1022, %v1030
      %v1033 = vtanh.pop %v1032
      %1035 = vrot.lane.b32.xlu0 %v1033, 64
      %v1036 = vpop.permute.xlu0 %1035
      %v1038 = vmul.f32 %v1021, %v1036
      %1040 = vrot.lane.b32.xlu0 %v1038, 32
      %v1041 = vpop.permute.xlu0 %1040
      %s1043 = scalar_lea.vmem %s319, %s938
      %1044 = vst.msk [vmem:[%s1043] sm:$0xff] %vm503, %v1041
      %s1045 = scalar_select %p325, 2, 5
      %s1046 = smul.u32 %s1045, 8
      %s1047 = scalar_lea.vmem [#allocation2], %s1046
      %v1048 = vld [vmem:[%s1047] sm:$0xff]
      %v1049 = vsel %vm503, %v1041, 0
      %1051 = vmatprep.subr.mxu0 0.0
      %1052 = vmatpush1.msra.mxu0 %v488
      %1053 = vmatprep.subr.mxu0 0.0
      %1054 = vmatpush1.msra.mxu0 %v489
      %1055 = vmatprep.subr.mxu0 0.0
      %1056 = vmatpush1.msra.mxu0 %v490
      %1057 = vmatprep.subr.mxu0 0.0
      %1058 = vmatpush1.msra.mxu0 %v491
      %1059 = vmatprep.subr.mxu0 0.0
      %1060 = vmatpush1.msra.mxu0 0.0
      %1061 = vmatprep.subr.mxu0 0.0
      %1062 = vmatpush1.msra.mxu0 0.0
      %1063 = vmatprep.subr.mxu0 0.0
      %1064 = vmatpush1.msra.mxu0 0.0
      %1065 = vmatprep.subr.mxu0 0.0
      %1066 = vmatpush1.msra.mxu0 0.0
      %1067 = vmatprep.subr.mxu0 0.0
      %1068 = vmatpush1.msra.mxu0 0.0
      %1069 = vmatprep.subr.mxu0 0.0
      %1070 = vmatpush1.msra.mxu0 0.0
      %1071 = vmatprep.subr.mxu0 0.0
      %1072 = vmatpush1.msra.mxu0 0.0
      %1073 = vmatprep.subr.mxu0 0.0
      %1074 = vmatpush1.msra.mxu0 0.0
      %1075 = vmatprep.subr.mxu0 0.0
      %1076 = vmatpush1.msra.mxu0 0.0
      %1077 = vmatprep.subr.mxu0 0.0
      %1078 = vmatpush1.msra.mxu0 0.0
      %1079 = vmatprep.subr.mxu0 0.0
      %1080 = vmatpush1.msra.mxu0 0.0
      %1081 = vmatprep.subr.mxu0 0.0
      %1082 = vmatpush1.msra.mxu0 0.0
      %1083 = vmatprep.subr.mxu0 0.0
      %1084 = vmatpush1.msra.mxu0 0.0
      %1085 = vmatprep.subr.mxu0 0.0
      %1086 = vmatpush1.msra.mxu0 0.0
      %1087 = vmatprep.subr.mxu0 0.0
      %1088 = vmatpush1.msra.mxu0 0.0
      %1089 = vmatprep.subr.mxu0 0.0
      %1090 = vmatpush1.msra.mxu0 0.0
      %1091 = vmatprep.subr.mxu0 0.0
      %1092 = vmatpush1.msra.mxu0 0.0
      %1093 = vmatprep.subr.mxu0 0.0
      %1094 = vmatpush1.msra.mxu0 0.0
      %1095 = vmatprep.subr.mxu0 0.0
      %1096 = vmatpush1.msra.mxu0 0.0
      %1097 = vmatprep.subr.mxu0 0.0
      %1098 = vmatpush1.msra.mxu0 0.0
      %1099 = vmatprep.subr.mxu0 0.0
      %1100 = vmatpush1.msra.mxu0 0.0
      %1101 = vmatprep.subr.mxu0 0.0
      %1102 = vmatpush1.msra.mxu0 0.0
      %1103 = vmatprep.subr.mxu0 0.0
      %1104 = vmatpush1.msra.mxu0 0.0
      %1105 = vmatprep.subr.mxu0 0.0
      %1106 = vmatpush1.msra.mxu0 0.0
      %1107 = vmatprep.subr.mxu0 0.0
      %1108 = vmatpush1.msra.mxu0 0.0
      %1109 = vmatprep.subr.mxu0 0.0
      %1110 = vmatpush1.msra.mxu0 0.0
      %1111 = vmatprep.subr.mxu0 0.0
      %1112 = vmatpush1.msra.mxu0 0.0
      %1113 = vmatprep.subr.mxu0 0.0
      %1114 = vmatpush1.msra.mxu0 0.0
      %1115 = vmatprep.mubr.f32.mxu0 0.0
      %1116 = vmatmul.mubr.f32.gmra.mrb[0].mxu0 %v1049
      %v1117 = vpop.f32.mrb[0].mxu0
      %v1118 = vadd.f32 0.0, %v1117
      %v1119 = vpop.f32.mrb[0].mxu0
      %1120 = vdwg.mxu0
      %v1121 = vadd.f32 %v1048, %v1118
      %v1122 = vtanh.pop %v1121
      %v1123 = vxor.u32 %v1121, 2147483648
      %v1124 = vmul.f32 %v1123, 1.442695
      %v1125 = vpow.pop %v1124
      %v1126 = vadd.f32 %v1125, 1.0
      %v1127 = vrcp.pop %v1126
      %v1128 = vmul.f32 1.0, %v1127
      %v1129 = vsel %vm496, %v1122, %v1128
      %v1130 = vmul.f32 %v1129, %v1032
      %1132 = vrot.lane.b32.xlu0 %v1129, 64
      %v1133 = vpop.permute.xlu0 %1132
      %v1135 = vmul.f32 %v1129, %v1133
      %1137 = vrot.lane.b32.xlu0 %v1135, 32
      %v1138 = vpop.permute.xlu0 %1137
      %v1140 = vadd.f32 %v1130, %v1138
      %v1141 = vtanh.pop %v1140
      %1143 = vrot.lane.b32.xlu0 %v1141, 64
      %v1144 = vpop.permute.xlu0 %1143
      %v1146 = vmul.f32 %v1129, %v1144
      %1148 = vrot.lane.b32.xlu0 %v1146, 32
      %v1149 = vpop.permute.xlu0 %1148
      %s1151 = scalar_lea.vmem %s319, %s1046
      %1152 = vst.msk [vmem:[%s1151] sm:$0xff] %vm503, %v1149
      %s1153 = scalar_select %p325, 1, 6
      %s1154 = smul.u32 %s1153, 8
      %s1155 = scalar_lea.vmem [#allocation2], %s1154
      %v1156 = vld [vmem:[%s1155] sm:$0xff]
      %v1157 = vsel %vm503, %v1149, 0
      %1159 = vmatprep.subr.mxu0 0.0
      %1160 = vmatpush1.msra.mxu0 %v488
      %1161 = vmatprep.subr.mxu0 0.0
      %1162 = vmatpush1.msra.mxu0 %v489
      %1163 = vmatprep.subr.mxu0 0.0
      %1164 = vmatpush1.msra.mxu0 %v490
      %1165 = vmatprep.subr.mxu0 0.0
      %1166 = vmatpush1.msra.mxu0 %v491
      %1167 = vmatprep.subr.mxu0 0.0
      %1168 = vmatpush1.msra.mxu0 0.0
      %1169 = vmatprep.subr.mxu0 0.0
      %1170 = vmatpush1.msra.mxu0 0.0
      %1171 = vmatprep.subr.mxu0 0.0
      %1172 = vmatpush1.msra.mxu0 0.0
      %1173 = vmatprep.subr.mxu0 0.0
      %1174 = vmatpush1.msra.mxu0 0.0
      %1175 = vmatprep.subr.mxu0 0.0
      %1176 = vmatpush1.msra.mxu0 0.0
      %1177 = vmatprep.subr.mxu0 0.0
      %1178 = vmatpush1.msra.mxu0 0.0
      %1179 = vmatprep.subr.mxu0 0.0
      %1180 = vmatpush1.msra.mxu0 0.0
      %1181 = vmatprep.subr.mxu0 0.0
      %1182 = vmatpush1.msra.mxu0 0.0
      %1183 = vmatprep.subr.mxu0 0.0
      %1184 = vmatpush1.msra.mxu0 0.0
      %1185 = vmatprep.subr.mxu0 0.0
      %1186 = vmatpush1.msra.mxu0 0.0
      %1187 = vmatprep.subr.mxu0 0.0
      %1188 = vmatpush1.msra.mxu0 0.0
      %1189 = vmatprep.subr.mxu0 0.0
      %1190 = vmatpush1.msra.mxu0 0.0
      %1191 = vmatprep.subr.mxu0 0.0
      %1192 = vmatpush1.msra.mxu0 0.0
      %1193 = vmatprep.subr.mxu0 0.0
      %1194 = vmatpush1.msra.mxu0 0.0
      %1195 = vmatprep.subr.mxu0 0.0
      %1196 = vmatpush1.msra.mxu0 0.0
      %1197 = vmatprep.subr.mxu0 0.0
      %1198 = vmatpush1.msra.mxu0 0.0
      %1199 = vmatprep.subr.mxu0 0.0
      %1200 = vmatpush1.msra.mxu0 0.0
      %1201 = vmatprep.subr.mxu0 0.0
      %1202 = vmatpush1.msra.mxu0 0.0
      %1203 = vmatprep.subr.mxu0 0.0
      %1204 = vmatpush1.msra.mxu0 0.0
      %1205 = vmatprep.subr.mxu0 0.0
      %1206 = vmatpush1.msra.mxu0 0.0
      %1207 = vmatprep.subr.mxu0 0.0
      %1208 = vmatpush1.msra.mxu0 0.0
      %1209 = vmatprep.subr.mxu0 0.0
      %1210 = vmatpush1.msra.mxu0 0.0
      %1211 = vmatprep.subr.mxu0 0.0
      %1212 = vmatpush1.msra.mxu0 0.0
      %1213 = vmatprep.subr.mxu0 0.0
      %1214 = vmatpush1.msra.mxu0 0.0
      %1215 = vmatprep.subr.mxu0 0.0
      %1216 = vmatpush1.msra.mxu0 0.0
      %1217 = vmatprep.subr.mxu0 0.0
      %1218 = vmatpush1.msra.mxu0 0.0
      %1219 = vmatprep.subr.mxu0 0.0
      %1220 = vmatpush1.msra.mxu0 0.0
      %1221 = vmatprep.subr.mxu0 0.0
      %1222 = vmatpush1.msra.mxu0 0.0
      %1223 = vmatprep.mubr.f32.mxu0 0.0
      %1224 = vmatmul.mubr.f32.gmra.mrb[0].mxu0 %v1157
      %v1225 = vpop.f32.mrb[0].mxu0
      %v1226 = vadd.f32 0.0, %v1225
      %v1227 = vpop.f32.mrb[0].mxu0
      %1228 = vdwg.mxu0
      %v1229 = vadd.f32 %v1156, %v1226
      %v1230 = vtanh.pop %v1229
      %v1231 = vxor.u32 %v1229, 2147483648
      %v1232 = vmul.f32 %v1231, 1.442695
      %v1233 = vpow.pop %v1232
      %v1234 = vadd.f32 %v1233, 1.0
      %v1235 = vrcp.pop %v1234
      %v1236 = vmul.f32 1.0, %v1235
      %v1237 = vsel %vm496, %v1230, %v1236
      %v1238 = vmul.f32 %v1237, %v1140
      %1240 = vrot.lane.b32.xlu0 %v1237, 64
      %v1241 = vpop.permute.xlu0 %1240
      %v1243 = vmul.f32 %v1237, %v1241
      %1245 = vrot.lane.b32.xlu0 %v1243, 32
      %v1246 = vpop.permute.xlu0 %1245
      %v1248 = vadd.f32 %v1238, %v1246
      %v1249 = vtanh.pop %v1248
      %1251 = vrot.lane.b32.xlu0 %v1249, 64
      %v1252 = vpop.permute.xlu0 %1251
      %v1254 = vmul.f32 %v1237, %v1252
      %1256 = vrot.lane.b32.xlu0 %v1254, 32
      %v1257 = vpop.permute.xlu0 %1256
      %s1259 = scalar_lea.vmem %s319, %s1154
      %1260 = vst.msk [vmem:[%s1259] sm:$0xff] %vm503, %v1257
      %s1261 = scalar_select %p325, 0, 7
      %s1262 = smul.u32 %s1261, 8
      %s1263 = scalar_lea.vmem [#allocation2], %s1262
      %v1264 = vld [vmem:[%s1263] sm:$0xff]
      %v1265 = vsel %vm503, %v1257, 0
      %1267 = vmatprep.subr.mxu0 0.0
      %1268 = vmatpush1.msra.mxu0 %v488
      %1269 = vmatprep.subr.mxu0 0.0
      %1270 = vmatpush1.msra.mxu0 %v489
      %1271 = vmatprep.subr.mxu0 0.0
      %1272 = vmatpush1.msra.mxu0 %v490
      %1273 = vmatprep.subr.mxu0 0.0
      %1274 = vmatpush1.msra.mxu0 %v491
      %1275 = vmatprep.subr.mxu0 0.0
      %1276 = vmatpush1.msra.mxu0 0.0
      %1277 = vmatprep.subr.mxu0 0.0
      %1278 = vmatpush1.msra.mxu0 0.0
      %1279 = vmatprep.subr.mxu0 0.0
      %1280 = vmatpush1.msra.mxu0 0.0
      %1281 = vmatprep.subr.mxu0 0.0
      %1282 = vmatpush1.msra.mxu0 0.0
      %1283 = vmatprep.subr.mxu0 0.0
      %1284 = vmatpush1.msra.mxu0 0.0
      %1285 = vmatprep.subr.mxu0 0.0
      %1286 = vmatpush1.msra.mxu0 0.0
      %1287 = vmatprep.subr.mxu0 0.0
      %1288 = vmatpush1.msra.mxu0 0.0
      %1289 = vmatprep.subr.mxu0 0.0
      %1290 = vmatpush1.msra.mxu0 0.0
      %1291 = vmatprep.subr.mxu0 0.0
      %1292 = vmatpush1.msra.mxu0 0.0
      %1293 = vmatprep.subr.mxu0 0.0
      %1294 = vmatpush1.msra.mxu0 0.0
      %1295 = vmatprep.subr.mxu0 0.0
      %1296 = vmatpush1.msra.mxu0 0.0
      %1297 = vmatprep.subr.mxu0 0.0
      %1298 = vmatpush1.msra.mxu0 0.0
      %1299 = vmatprep.subr.mxu0 0.0
      %1300 = vmatpush1.msra.mxu0 0.0
      %1301 = vmatprep.subr.mxu0 0.0
      %1302 = vmatpush1.msra.mxu0 0.0
      %1303 = vmatprep.subr.mxu0 0.0
      %1304 = vmatpush1.msra.mxu0 0.0
      %1305 = vmatprep.subr.mxu0 0.0
      %1306 = vmatpush1.msra.mxu0 0.0
      %1307 = vmatprep.subr.mxu0 0.0
      %1308 = vmatpush1.msra.mxu0 0.0
      %1309 = vmatprep.subr.mxu0 0.0
      %1310 = vmatpush1.msra.mxu0 0.0
      %1311 = vmatprep.subr.mxu0 0.0
      %1312 = vmatpush1.msra.mxu0 0.0
      %1313 = vmatprep.subr.mxu0 0.0
      %1314 = vmatpush1.msra.mxu0 0.0
      %1315 = vmatprep.subr.mxu0 0.0
      %1316 = vmatpush1.msra.mxu0 0.0
      %1317 = vmatprep.subr.mxu0 0.0
      %1318 = vmatpush1.msra.mxu0 0.0
      %1319 = vmatprep.subr.mxu0 0.0
      %1320 = vmatpush1.msra.mxu0 0.0
      %1321 = vmatprep.subr.mxu0 0.0
      %1322 = vmatpush1.msra.mxu0 0.0
      %1323 = vmatprep.subr.mxu0 0.0
      %1324 = vmatpush1.msra.mxu0 0.0
      %1325 = vmatprep.subr.mxu0 0.0
      %1326 = vmatpush1.msra.mxu0 0.0
      %1327 = vmatprep.subr.mxu0 0.0
      %1328 = vmatpush1.msra.mxu0 0.0
      %1329 = vmatprep.subr.mxu0 0.0
      %1330 = vmatpush1.msra.mxu0 0.0
      %1331 = vmatprep.mubr.f32.mxu0 0.0
      %1332 = vmatmul.mubr.f32.gmra.mrb[0].mxu0 %v1265
      %v1333 = vpop.f32.mrb[0].mxu0
      %v1334 = vadd.f32 0.0, %v1333
      %v1335 = vpop.f32.mrb[0].mxu0
      %1336 = vdwg.mxu0
      %v1337 = vadd.f32 %v1264, %v1334
      %v1338 = vtanh.pop %v1337
      %v1339 = vxor.u32 %v1337, 2147483648
      %v1340 = vmul.f32 %v1339, 1.442695
      %v1341 = vpow.pop %v1340
      %v1342 = vadd.f32 %v1341, 1.0
      %v1343 = vrcp.pop %v1342
      %v1344 = vmul.f32 1.0, %v1343
      %v1345 = vsel %vm496, %v1338, %v1344
      %v1346 = vmul.f32 %v1345, %v1248
      %1348 = vrot.lane.b32.xlu0 %v1345, 64
      %v1349 = vpop.permute.xlu0 %1348
      %v1351 = vmul.f32 %v1345, %v1349
      %1353 = vrot.lane.b32.xlu0 %v1351, 32
      %v1354 = vpop.permute.xlu0 %1353
      %v1356 = vadd.f32 %v1346, %v1354
      %v1357 = vtanh.pop %v1356
      %1359 = vrot.lane.b32.xlu0 %v1357, 64
      %v1360 = vpop.permute.xlu0 %1359
      %v1362 = vmul.f32 %v1345, %v1360
      %1364 = vrot.lane.b32.xlu0 %v1362, 32
      %v1365 = vpop.permute.xlu0 %1364
      %s1367 = scalar_lea.vmem %s319, %s1262
      %1368 = vst.msk [vmem:[%s1367] sm:$0xff] %vm503, %v1365
      %1369 = vst.msk [vmem:[#allocation3] sm:$0xff] %vm503, %v1365
      %1371 = vrot.lane.b32.xlu0 %v1356, 96
      %v1372 = vpop.permute.xlu0 %1371
      %1374 = vst.msk [vmem:[#allocation4] sm:$0xff] %vm503, %v1372
      %s1375 = smul.u32 %s20, 2
      %s1376 = ssub.s32 0, %s1375
      %s1377 = smul.u32 %s19, %s1376
      %s1378 = sadd.s32 %s20, %s1377
      %s1379 = smul.u32 8, %s1378
      %p1380 = scmp.lt.s32.totalorder %s19, 1
      %s1381 = scalar_select %p1380, %s19, 1
      %p1382 = scmp.lt.s32.totalorder %s1379, 7
      %s1383 = scalar_select %p1382, %s1379, 7
      %s1384 = smul.addr %s1381, 8
      %s1385 = sadd.s32 %s1383, %s1384
      %s1386 = smul.addr %s1385, 8
      %s1387 = scalar_lea.vmem %s4, %s1386
      // Predicated region
      $region41: #{lstm_forward.2} parent=35 // pred_check
        %p1388 = pneg %p167
      $region42: #{lstm_forward.2} parent=35 // pred_check_branch
        %1390 = sbr.rel (%p1388) target = $region44
      $region43: #{lstm_forward.2} parent=35 // pred_region
        %s1391 = smul.u32 %s20, 2
        %s1392 = ssub.s32 0, %s1391
        %s1393 = smul.u32 %s19, %s1392
        %s1394 = sadd.s32 %s20, %s1393
        %s1395 = smul.u32 8, %s1394
      $region44: #{lstm_forward.2} parent=35 // pred_fallthru
        _
    $region36: #{lstm_forward.2} parent=5 // pred_fallthru
      _
    %p1396 = scmp.le.s32.totalorder 2, %s10
    // Predicated region
    $region45: #{lstm_forward.2} parent=5 // pred_check
      %p1397 = pneg %p1396
    $region46: #{lstm_forward.2} parent=5 // pred_check_branch
      %1399 = sbr.rel (%p1397) target = $region48
    $region47: #{lstm_forward.2} parent=5 // pred_region
      %s1400 = ssub.s32 %s10, 2
      // Predicated region
      $region49: #{lstm_forward.2} parent=47 // pred_check
        %p1401 = pneg %p173
      $region50: #{lstm_forward.2} parent=47 // pred_check_branch
        %1403 = sbr.rel (%p1401) target = $region52
      $region51: #{lstm_forward.2} parent=47 // pred_region
        %s1404 = smul.u32 %s22, 2
        %s1405 = ssub.s32 0, %s1404
        %s1406 = smul.u32 %s21, %s1405
        %s1407 = sadd.s32 %s22, %s1406
        %s1408 = smul.u32 8, %s1407
        %p1409 = scmp.lt.s32.totalorder %s21, 1
        %s1410 = scalar_select %p1409, %s21, 1
        %p1411 = scmp.lt.s32.totalorder %s1408, 7
        %s1412 = scalar_select %p1411, %s1408, 7
        %s1413 = smul.addr %s1410, 8
        %s1414 = sadd.s32 %s1412, %s1413
        %s1415 = smul.addr %s1414, 8
        %s1416 = scalar_lea.vmem %s4, %s1415
      $region52: #{lstm_forward.2} parent=47 // pred_fallthru
        _
    $region48: #{lstm_forward.2} parent=5 // pred_fallthru
      _
  $region6: #{lstm_forward.2} parent=0 // loop_footer
    %s14 = sadd.s32 1, %s10
  $region7: #{lstm_forward.2} parent=0 // loop_footer_branch
    %9 = sbr.rel target = $region3
  $region8: #{lstm_forward.2} parent=0 // loop_exit
    _

// kernel: lstm_forward.3
$region0: #{lstm_forward.3}
  #allocation0 [shape = 'u32[]', space=smem, size = 0x4, offset = 0x4, fixed_abs, tag = 'smem constant byte address 0x4 - core index']
  #allocation1 [shape = 'u32[144,128]{1,0:T(1,128)}', space=vmem, size = 0x12000, scoped, tag = 'internal scratch']
  #allocation2 [shape = 'f32[64,128]{1,0:T(8,128)}', space=vmem, size = 0x8000, scoped, tag = 'scratch operand']
  #allocation3 [shape = 'f32[8,32]{1,0:T(8,128)}', space=vmem, size = 0x1000, scoped, tag = 'scratch operand']
  #allocation4 [shape = 'f32[8,32]{1,0:T(8,128)}', space=vmem, size = 0x1000, scoped, tag = 'scratch operand']
  #allocation5 [shape = 'f32[8,32]{1,0:T(8,128)}', space=vmem, size = 0x1000, scoped, tag = 'scratch operand']
  %s0 = inlined_call_operand.vmem [shape: f32[2,64,32], index: 0, kind: input, shape index: {}]
  %s1 = inlined_call_operand.vmem [shape: f32[2,2,32,128], index: 1, kind: input, shape index: {}]
  %s2 = inlined_call_operand.vmem [shape: f32[2,32,128], index: 2, kind: input, shape index: {}]
  %s3 = inlined_call_operand.vmem [shape: f32[2,1,128], index: 3, kind: input, shape index: {}]
  %s4 = inlined_call_operand.vmem [shape: f32[2,32,8], index: 4, kind: input, shape index: {}]
  %s5 = inlined_call_operand.vmem [shape: f32[2,8,8], index: 5, kind: output, shape index: {}]
  %s6 = sld [smem:[#allocation0]]
  $region61: #{lstm_forward.3} parent=0
    _
  %s8 = ssub.s32 1, %s6
  %s9 = scalar_select 0, %s8, %s6
  loop: start=0, step=1, limit=4
  $region2: #{lstm_forward.3} parent=0 // loop_pre_header
    _
  $region3: #{lstm_forward.3} parent=0 // loop_header
    %s11 = sphi 0, %s15
    %p12 = scmp.ge.s32.totalorder %s11, 4
    %s18 = sphi 0, %s30
    %s19 = sphi 0, %s26
    %s20 = sphi 0, %s18
    %s21 = sphi 0, %s19
    %s22 = sphi 0, %s20
    %s23 = sphi 0, %s21
    %s41 = sphi 0, %s43
    %s44 = sphi 0, %s41
    %s45 = sphi 0, %s44
    %s61 = sphi 0, %s45
    %s67 = sphi 0, %s69
    %s70 = sphi 0, %s67
    %s71 = sphi 0, %s70
    %s87 = sphi 0, %s71
    %s93 = sphi 0, %s95
    %s96 = sphi 0, %s93
    %s97 = sphi 0, %s96
    %s113 = sphi 0, %s97
    %s119 = sphi 0, %s121
    %s122 = sphi 0, %s119
    %s123 = sphi 0, %s122
    %s139 = sphi 0, %s123
    %s145 = sphi 0, %s147
    %s148 = sphi 0, %s145
    %s149 = sphi 0, %s148
    %s165 = sphi 0, %s149
    %s171 = sphi 0, %s173
    %s174 = sphi 0, %s171
    %s175 = sphi 0, %s174
    %s191 = sphi 0, %s175
  $region4: #{lstm_forward.3} parent=0 // loop_header_branch
    %14 = sbr.rel (%p12) target = $region8
  $region5: #{lstm_forward.3} parent=0 // loop_body
    %s16 = ssub.s32 %s11, 1
    %s17 = ssub.s32 %s11, 2
    %s24 = sadd.s32 1, %s19
    %p25 = scmp.ge.s32.totalorder %s24, 1
    %s26 = scalar_select %p25, 0, %s24
    %s27 = sadd.s32 1, %s18
    %s28 = scalar_select %p25, %s27, %s18
    %p29 = scmp.ge.s32.totalorder %s28, 2
    %s30 = scalar_select %p29, 0, %s28
    %s31 = smul.u32 %s19, 2
    %s32 = ssub.s32 0, %s31
    %s33 = smul.u32 %s18, %s32
    %s34 = sadd.s32 %s19, %s33
    %s35 = smul.u32 %s26, 2
    %s36 = ssub.s32 0, %s35
    %s37 = smul.u32 %s30, %s36
    %s38 = sadd.s32 %s26, %s37
    %s39 = ssub.s32 %s34, %s38
    %p40 = scmp.eq.s32.totalorder %s39, 0
    %s42 = sadd.s32 %s41, 1
    %s43 = scalar_select %p40, %s41, %s42
    %p46 = pneg %p40
    %p47 = scmp.eq.s32.totalorder %s11, 1
    %p48 = por %p46, %p47
    %p49 = scmp.ne.s32.totalorder %s41, %s44
    %p50 = scmp.eq.s32.totalorder %s11, 0
    %p51 = por %p49, %p50
    %p52 = scmp.ne.s32.totalorder %s41, %s44
    %p53 = scmp.eq.s32.totalorder %s16, 1
    %p54 = por %p52, %p53
    %p55 = scmp.ne.s32.totalorder %s44, %s45
    %p56 = scmp.eq.s32.totalorder %s16, 0
    %p57 = por %p55, %p56
    %p58 = scmp.ne.s32.totalorder %s44, %s45
    %p59 = scmp.eq.s32.totalorder %s17, 1
    %p60 = por %p58, %p59
    %p62 = scmp.ne.s32.totalorder %s45, %s61
    %p63 = scmp.eq.s32.totalorder %s17, 0
    %p64 = por %p62, %p63
    %s65 = ssub.s32 %s18, %s30
    %p66 = scmp.eq.s32.totalorder %s65, 0
    %s68 = sadd.s32 %s67, 1
    %s69 = scalar_select %p66, %s67, %s68
    %p72 = pneg %p66
    %p73 = scmp.eq.s32.totalorder %s11, 1
    %p74 = por %p72, %p73
    %p75 = scmp.ne.s32.totalorder %s67, %s70
    %p76 = scmp.eq.s32.totalorder %s11, 0
    %p77 = por %p75, %p76
    %p78 = scmp.ne.s32.totalorder %s67, %s70
    %p79 = scmp.eq.s32.totalorder %s16, 1
    %p80 = por %p78, %p79
    %p81 = scmp.ne.s32.totalorder %s70, %s71
    %p82 = scmp.eq.s32.totalorder %s16, 0
    %p83 = por %p81, %p82
    %p84 = scmp.ne.s32.totalorder %s70, %s71
    %p85 = scmp.eq.s32.totalorder %s17, 1
    %p86 = por %p84, %p85
    %p88 = scmp.ne.s32.totalorder %s71, %s87
    %p89 = scmp.eq.s32.totalorder %s17, 0
    %p90 = por %p88, %p89
    %s91 = ssub.s32 %s18, %s30
    %p92 = scmp.eq.s32.totalorder %s91, 0
    %s94 = sadd.s32 %s93, 1
    %s95 = scalar_select %p92, %s93, %s94
    %p98 = pneg %p92
    %p99 = scmp.eq.s32.totalorder %s11, 1
    %p100 = por %p98, %p99
    %p101 = scmp.ne.s32.totalorder %s93, %s96
    %p102 = scmp.eq.s32.totalorder %s11, 0
    %p103 = por %p101, %p102
    %p104 = scmp.ne.s32.totalorder %s93, %s96
    %p105 = scmp.eq.s32.totalorder %s16, 1
    %p106 = por %p104, %p105
    %p107 = scmp.ne.s32.totalorder %s96, %s97
    %p108 = scmp.eq.s32.totalorder %s16, 0
    %p109 = por %p107, %p108
    %p110 = scmp.ne.s32.totalorder %s96, %s97
    %p111 = scmp.eq.s32.totalorder %s17, 1
    %p112 = por %p110, %p111
    %p114 = scmp.ne.s32.totalorder %s97, %s113
    %p115 = scmp.eq.s32.totalorder %s17, 0
    %p116 = por %p114, %p115
    %s117 = ssub.s32 %s18, %s30
    %p118 = scmp.eq.s32.totalorder %s117, 0
    %s120 = sadd.s32 %s119, 1
    %s121 = scalar_select %p118, %s119, %s120
    %p124 = pneg %p118
    %p125 = scmp.eq.s32.totalorder %s11, 1
    %p126 = por %p124, %p125
    %p127 = scmp.ne.s32.totalorder %s119, %s122
    %p128 = scmp.eq.s32.totalorder %s11, 0
    %p129 = por %p127, %p128
    %p130 = scmp.ne.s32.totalorder %s119, %s122
    %p131 = scmp.eq.s32.totalorder %s16, 1
    %p132 = por %p130, %p131
    %p133 = scmp.ne.s32.totalorder %s122, %s123
    %p134 = scmp.eq.s32.totalorder %s16, 0
    %p135 = por %p133, %p134
    %p136 = scmp.ne.s32.totalorder %s122, %s123
    %p137 = scmp.eq.s32.totalorder %s17, 1
    %p138 = por %p136, %p137
    %p140 = scmp.ne.s32.totalorder %s123, %s139
    %p141 = scmp.eq.s32.totalorder %s17, 0
    %p142 = por %p140, %p141
    %s143 = ssub.s32 %s18, %s30
    %p144 = scmp.eq.s32.totalorder %s143, 0
    %s146 = sadd.s32 %s145, 1
    %s147 = scalar_select %p144, %s145, %s146
    %p150 = pneg %p144
    %p151 = scmp.eq.s32.totalorder %s11, 1
    %p152 = por %p150, %p151
    %p153 = scmp.ne.s32.totalorder %s145, %s148
    %p154 = scmp.eq.s32.totalorder %s11, 0
    %p155 = por %p153, %p154
    %p156 = scmp.ne.s32.totalorder %s145, %s148
    %p157 = scmp.eq.s32.totalorder %s16, 1
    %p158 = por %p156, %p157
    %p159 = scmp.ne.s32.totalorder %s148, %s149
    %p160 = scmp.eq.s32.totalorder %s16, 0
    %p161 = por %p159, %p160
    %p162 = scmp.ne.s32.totalorder %s148, %s149
    %p163 = scmp.eq.s32.totalorder %s17, 1
    %p164 = por %p162, %p163
    %p166 = scmp.ne.s32.totalorder %s149, %s165
    %p167 = scmp.eq.s32.totalorder %s17, 0
    %p168 = por %p166, %p167
    %s169 = ssub.s32 %s18, %s30
    %p170 = scmp.eq.s32.totalorder %s169, 0
    %s172 = sadd.s32 %s171, 1
    %s173 = scalar_select %p170, %s171, %s172
    %p176 = pneg %p170
    %p177 = scmp.eq.s32.totalorder %s11, 1
    %p178 = por %p176, %p177
    %p179 = scmp.ne.s32.totalorder %s171, %s174
    %p180 = scmp.eq.s32.totalorder %s11, 0
    %p181 = por %p179, %p180
    %p182 = scmp.ne.s32.totalorder %s171, %s174
    %p183 = scmp.eq.s32.totalorder %s16, 1
    %p184 = por %p182, %p183
    %p185 = scmp.ne.s32.totalorder %s174, %s175
    %p186 = scmp.eq.s32.totalorder %s16, 0
    %p187 = por %p185, %p186
    %p188 = scmp.ne.s32.totalorder %s174, %s175
    %p189 = scmp.eq.s32.totalorder %s17, 1
    %p190 = por %p188, %p189
    %p192 = scmp.ne.s32.totalorder %s175, %s191
    %p193 = scmp.eq.s32.totalorder %s17, 0
    %p194 = por %p192, %p193
    %p195 = scmp.le.s32.totalorder 1, %s11
    %p196 = scmp.lt.s32.totalorder %s11, 3
    %p197 = pnand %p195, %p196
    %p198 = pneg %p197
    // Predicated region
    $region9: #{lstm_forward.3} parent=5 // pred_check
      _
    $region10: #{lstm_forward.3} parent=5 // pred_check_branch
      %200 = sbr.rel (%p197) target = $region12
    $region11: #{lstm_forward.3} parent=5 // pred_region
      %s201 = ssub.s32 %s11, 1
    $region12: #{lstm_forward.3} parent=5 // pred_fallthru
      _
    %p202 = scmp.lt.s32.totalorder %s11, 2
    // Predicated region
    $region13: #{lstm_forward.3} parent=5 // pred_check
      %p203 = pneg %p202
    $region14: #{lstm_forward.3} parent=5 // pred_check_branch
      %205 = sbr.rel (%p203) target = $region16
    $region15: #{lstm_forward.3} parent=5 // pred_region
      // Predicated region
      $region17: #{lstm_forward.3} parent=15 // pred_check
        %p206 = pneg %p51
      $region18: #{lstm_forward.3} parent=15 // pred_check_branch
        %208 = sbr.rel (%p206) target = $region20
      $region19: #{lstm_forward.3} parent=15 // pred_region
        %s209 = smul.u32 %s19, 2
        %s210 = ssub.s32 0, %s209
        %s211 = smul.u32 %s18, %s210
        %s212 = sadd.s32 %s19, %s211
        %s213 = smul.u32 8, %s212
        %p214 = scmp.lt.s32.totalorder %s213, 7
        %s215 = scalar_select %p214, %s213, 7
        %s216 = smul.addr %s215, 8
        %s217 = scalar_lea.vmem %s0, %s216
        %s218 = smul.u32 %s19, 2
        %s219 = ssub.s32 0, %s218
        %s220 = smul.u32 %s18, %s219
        %s221 = sadd.s32 %s19, %s220
        %s222 = smul.u32 8, %s221
      $region20: #{lstm_forward.3} parent=15 // pred_fallthru
        _
      // Predicated region
      $region21: #{lstm_forward.3} parent=15 // pred_check
        %p223 = pneg %p77
      $region22: #{lstm_forward.3} parent=15 // pred_check_branch
        %225 = sbr.rel (%p223) target = $region24
      $region23: #{lstm_forward.3} parent=15 // pred_region
        %p226 = scmp.lt.s32.totalorder %s18, 1
        %s227 = scalar_select %p226, %s18, 1
        %s228 = smul.addr %s227, 8
        %s229 = smul.addr %s228, 8
        %s230 = scalar_lea.vmem %s1, %s229
      $region24: #{lstm_forward.3} parent=15 // pred_fallthru
        _
      // Predicated region
      $region25: #{lstm_forward.3} parent=15 // pred_check
        %p231 = pneg %p103
      $region26: #{lstm_forward.3} parent=15 // pred_check_branch
        %233 = sbr.rel (%p231) target = $region28
      $region27: #{lstm_forward.3} parent=15 // pred_region
        %p234 = scmp.lt.s32.totalorder %s18, 1
        %s235 = scalar_select %p234, %s18, 1
        %s236 = smul.addr %s235, 4
        %s237 = smul.addr %s236, 8
        %s238 = scalar_lea.vmem %s2, %s237
      $region28: #{lstm_forward.3} parent=15 // pred_fallthru
        _
      // Predicated region
      $region29: #{lstm_forward.3} parent=15 // pred_check
        %p239 = pneg %p129
      $region30: #{lstm_forward.3} parent=15 // pred_check_branch
        %241 = sbr.rel (%p239) target = $region32
      $region31: #{lstm_forward.3} parent=15 // pred_region
        %p242 = scmp.lt.s32.totalorder %s18, 1
        %s243 = scalar_select %p242, %s18, 1
        %s244 = scalar_lea.vmem %s3, %s243
      $region32: #{lstm_forward.3} parent=15 // pred_fallthru
        _
      // Predicated region
      $region33: #{lstm_forward.3} parent=15 // pred_check
        %p245 = pneg %p155
      $region34: #{lstm_forward.3} parent=15 // pred_check_branch
        %247 = sbr.rel (%p245) target = $region36
      $region35: #{lstm_forward.3} parent=15 // pred_region
        %p248 = scmp.lt.s32.totalorder %s18, 1
        %s249 = scalar_select %p248, %s18, 1
        %s250 = smul.addr %s249, 4
        %s251 = smul.addr %s250, 8
        %s252 = scalar_lea.vmem %s4, %s251
      $region36: #{lstm_forward.3} parent=15 // pred_fallthru
        _
    $region16: #{lstm_forward.3} parent=5 // pred_fallthru
      _
    %p253 = scmp.le.s32.totalorder 1, %s11
    %p254 = scmp.lt.s32.totalorder %s11, 3
    %p255 = pnand %p253, %p254
    %p256 = pneg %p255
    // Predicated region
    $region37: #{lstm_forward.3} parent=5 // pred_check
      _
    $region38: #{lstm_forward.3} parent=5 // pred_check_branch
      %258 = sbr.rel (%p255) target = $region40
    $region39: #{lstm_forward.3} parent=5 // pred_region
      %s259 = ssub.s32 %s11, 1
      %s260 = smul.u32 %s21, 2
      %s261 = ssub.s32 0, %s260
      %s262 = smul.u32 %s20, %s261
      %s263 = sadd.s32 %s21, %s262
      %s264 = smul.u32 8, %s263
      %p265 = scmp.lt.s32.totalorder %s264, 7
      %s266 = scalar_select %p265, %s264, 7
      %s267 = smul.addr %s266, 8
      %s268 = scalar_lea.vmem %s0, %s267
      %p269 = pneg %p57
      %p270 = pneg %p54
      %p271 = scmp.lt.s32.totalorder %s20, 1
      %s272 = scalar_select %p271, %s20, 1
      %s273 = smul.addr %s272, 8
      %s274 = smul.addr %s273, 8
      %s275 = scalar_lea.vmem %s1, %s274
      %p276 = pneg %p83
      %p277 = pneg %p80
      %p278 = scmp.lt.s32.totalorder %s20, 1
      %s279 = scalar_select %p278, %s20, 1
      %s280 = smul.addr %s279, 4
      %s281 = smul.addr %s280, 8
      %s282 = scalar_lea.vmem %s2, %s281
      %p283 = pneg %p109
      %p284 = pneg %p106
      %p285 = scmp.lt.s32.totalorder %s20, 1
      %s286 = scalar_select %p285, %s20, 1
      %s287 = scalar_lea.vmem %s3, %s286
      %p288 = pneg %p135
      %p289 = pneg %p132
      %p290 = scmp.lt.s32.totalorder %s20, 1
      %s291 = scalar_select %p290, %s20, 1
      %s292 = smul.addr %s291, 4
      %s293 = smul.addr %s292, 8
      %s294 = scalar_lea.vmem %s4, %s293
      %p295 = pneg %p161
      %p296 = pneg %p158
      %p297 = pneg %p187
      %p298 = pneg %p184
      %p299 = scmp.lt.s32.totalorder %s20, 1
      %s300 = scalar_select %p299, %s20, 1
      %s301 = smul.addr %s300, 8
      %s302 = scalar_lea.vmem %s5, %s301
      %s303 = smul.u32 %s21, 2
      %s304 = ssub.s32 0, %s303
      %s305 = smul.u32 %s20, %s304
      %s306 = sadd.s32 %s21, %s305
      %s307 = smul.u32 8, %s306
      %p308 = scmp.lt.s32.totalorder %s307, 7
      %s309 = scalar_select %p308, %s307, 7
      %s310 = smul.addr %s309, 8
      %s311 = scalar_lea.vmem %s0, %s310
      %s312 = smul.u32 %s21, 2
      %s313 = ssub.s32 0, %s312
      %s314 = smul.u32 %s20, %s313
      %s315 = sadd.s32 %s21, %s314
      %s316 = smul.u32 8, %s315
      %p317 = scmp.lt.s32.totalorder %s20, 1
      %s318 = scalar_select %p317, %s20, 1
      %s319 = smul.addr %s318, 8
      %s320 = smul.addr %s319, 8
      %s321 = scalar_lea.vmem %s1, %s320
      %p322 = scmp.lt.s32.totalorder %s20, 1
      %s323 = scalar_select %p322, %s20, 1
      %s324 = smul.addr %s323, 4
      %s325 = smul.addr %s324, 8
      %s326 = scalar_lea.vmem %s2, %s325
      %p327 = scmp.lt.s32.totalorder %s20, 1
      %s328 = scalar_select %p327, %s20, 1
      %s329 = scalar_lea.vmem %s3, %s328
      %p330 = scmp.lt.s32.totalorder %s20, 1
      %s331 = scalar_select %p330, %s20, 1
      %s332 = smul.addr %s331, 4
      %s333 = smul.addr %s332, 8
      %s334 = scalar_lea.vmem %s4, %s333
      %p335 = scmp.lt.s32.totalorder %s20, 1
      %s336 = scalar_select %p335, %s20, 1
      %s337 = smul.addr %s336, 8
      %s338 = scalar_lea.vmem %s5, %s337
      %p339 = scmp.eq.s32.totalorder %s20, 1
      %p340 = scmp.eq.s32.totalorder %s21, 0
      // Predicated region
      $region41: #{lstm_forward.3} parent=39 // pred_check
        %p341 = pneg %p340
      $region42: #{lstm_forward.3} parent=39 // pred_check_branch
        %343 = sbr.rel (%p341) target = $region44
      $region43: #{lstm_forward.3} parent=39 // pred_region
        %vm344 = vcmask 261120
        %345 = vst.msk [vmem:[#allocation3] sm:$0xff] %vm344, 0.0
        %346 = vst.msk [vmem:[#allocation4] sm:$0xff] %vm344, 0.0
        %347 = vst.msk [vmem:[#allocation5] sm:$0xff] %vm344, 0.0
      $region44: #{lstm_forward.3} parent=39 // pred_fallthru
        _
      %v348 = vld [vmem:[%s311] sm:$0xff]
      %v349 = vld [vmem:[%s311 + $0x8] sm:$0xff]
      %v350 = vld [vmem:[%s311 + $0x10] sm:$0xff]
      %v351 = vld [vmem:[%s311 + $0x18] sm:$0xff]
      %v352 = vld [vmem:[%s311 + $0x20] sm:$0xff]
      %v353 = vld [vmem:[%s311 + $0x28] sm:$0xff]
      %v354 = vld [vmem:[%s311 + $0x30] sm:$0xff]
      %v355 = vld [vmem:[%s311 + $0x38] sm:$0xff]
      %v356 = vld [vmem:[%s321] sm:$0xff]
      %v357 = vld [vmem:[%s321 + $0x8] sm:$0xff]
      %v358 = vld [vmem:[%s321 + $0x10] sm:$0xff]
      %v359 = vld [vmem:[%s321 + $0x18] sm:$0xff]
      %s360 = scalar_lea.vmem %s311, 64
      %v361 = vld [vmem:[%s360] sm:$0xff]
      %v362 = vld [vmem:[%s360 + $0x8] sm:$0xff]
      %v363 = vld [vmem:[%s360 + $0x10] sm:$0xff]
      %v364 = vld [vmem:[%s360 + $0x18] sm:$0xff]
      %v365 = vld [vmem:[%s360 + $0x20] sm:$0xff]
      %v366 = vld [vmem:[%s360 + $0x28] sm:$0xff]
      %v367 = vld [vmem:[%s360 + $0x30] sm:$0xff]
      %v368 = vld [vmem:[%s360 + $0x38] sm:$0xff]
      %s369 = scalar_lea.vmem %s321, 32
      %v370 = vld [vmem:[%s369] sm:$0xff]
      %v371 = vld [vmem:[%s369 + $0x8] sm:$0xff]
      %v372 = vld [vmem:[%s369 + $0x10] sm:$0xff]
      %v373 = vld [vmem:[%s369 + $0x18] sm:$0xff]
      %vm374 = vcmask 261120
      %v376 = vsel %vm374, %v361, 0
      %v379 = vsel %vm374, %v362, 0
      %v382 = vsel %vm374, %v363, 0
      %v385 = vsel %vm374, %v364, 0
      %v388 = vsel %vm374, %v365, 0
      %v391 = vsel %vm374, %v366, 0
      %v394 = vsel %vm374, %v367, 0
      %v397 = vsel %vm374, %v368, 0
      %399 = vmatprep.subr.mxu0 0.0
      %400 = vmatpush1.msra.mxu0 %v370
      %401 = vmatprep.subr.mxu0 0.0
      %402 = vmatpush1.msra.mxu0 %v371
      %403 = vmatprep.subr.mxu0 0.0
      %404 = vmatpush1.msra.mxu0 %v372
      %405 = vmatprep.subr.mxu0 0.0
      %406 = vmatpush1.msra.mxu0 %v373
      %407 = vmatprep.subr.mxu0 0.0
      %408 = vmatpush1.msra.mxu0 0.0
      %409 = vmatprep.subr.mxu0 0.0
      %410 = vmatpush1.msra.mxu0 0.0
      %411 = vmatprep.subr.mxu0 0.0
      %412 = vmatpush1.msra.mxu0 0.0
      %413 = vmatprep.subr.mxu0 0.0
      %414 = vmatpush1.msra.mxu0 0.0
      %415 = vmatprep.subr.mxu0 0.0
      %416 = vmatpush1.msra.mxu0 0.0
      %417 = vmatprep.subr.mxu0 0.0
      %418 = vmatpush1.msra.mxu0 0.0
      %419 = vmatprep.subr.mxu0 0.0
      %420 = vmatpush1.msra.mxu0 0.0
      %421 = vmatprep.subr.mxu0 0.0
      %422 = vmatpush1.msra.mxu0 0.0
      %423 = vmatprep.subr.mxu0 0.0
      %424 = vmatpush1.msra.mxu0 0.0
      %425 = vmatprep.subr.mxu0 0.0
      %426 = vmatpush1.msra.mxu0 0.0
      %427 = vmatprep.subr.mxu0 0.0
      %428 = vmatpush1.msra.mxu0 0.0
      %429 = vmatprep.subr.mxu0 0.0
      %430 = vmatpush1.msra.mxu0 0.0
      %431 = vmatprep.subr.mxu0 0.0
      %432 = vmatpush1.msra.mxu0 0.0
      %433 = vmatprep.subr.mxu0 0.0
      %434 = vmatpush1.msra.mxu0 0.0
      %435 = vmatprep.subr.mxu0 0.0
      %436 = vmatpush1.msra.mxu0 0.0
      %437 = vmatprep.subr.mxu0 0.0
      %438 = vmatpush1.msra.mxu0 0.0
      %439 = vmatprep.subr.mxu0 0.0
      %440 = vmatpush1.msra.mxu0 0.0
      %441 = vmatprep.subr.mxu0 0.0
      %442 = vmatpush1.msra.mxu0 0.0
      %443 = vmatprep.subr.mxu0 0.0
      %444 = vmatpush1.msra.mxu0 0.0
      %445 = vmatprep.subr.mxu0 0.0
      %446 = vmatpush1.msra.mxu0 0.0
      %447 = vmatprep.subr.mxu0 0.0
      %448 = vmatpush1.msra.mxu0 0.0
      %449 = vmatprep.subr.mxu0 0.0
      %450 = vmatpush1.msra.mxu0 0.0
      %451 = vmatprep.subr.mxu0 0.0
      %452 = vmatpush1.msra.mxu0 0.0
      %453 = vmatprep.subr.mxu0 0.0
      %454 = vmatpush1.msra.mxu0 0.0
      %455 = vmatprep.subr.mxu0 0.0
      %456 = vmatpush1.msra.mxu0 0.0
      %457 = vmatprep.subr.mxu0 0.0
      %458 = vmatpush1.msra.mxu0 0.0
      %459 = vmatprep.subr.mxu0 0.0
      %460 = vmatpush1.msra.mxu0 0.0
      %461 = vmatprep.subr.mxu0 0.0
      %462 = vmatpush1.msra.mxu0 0.0
      %463 = vmatprep.mubr.f32.mxu0 0.0
      %464 = vmatmul.mubr.f32.gmra.mrb[0].mxu0 %v376
      %v465 = vpop.f32.mrb[0].mxu0
      %v466 = vadd.f32 0.0, %v465
      %v467 = vpop.f32.mrb[0].mxu0
      %468 = vmatprep.mubr.f32.mxu0 0.0
      %469 = vmatmul.mubr.f32.gmra.mrb[0].mxu0 %v379
      %v470 = vpop.f32.mrb[0].mxu0
      %v471 = vadd.f32 0.0, %v470
      %v472 = vpop.f32.mrb[0].mxu0
      %473 = vmatprep.mubr.f32.mxu0 0.0
      %474 = vmatmul.mubr.f32.gmra.mrb[0].mxu0 %v382
      %v475 = vpop.f32.mrb[0].mxu0
      %v476 = vadd.f32 0.0, %v475
      %v477 = vpop.f32.mrb[0].mxu0
      %478 = vmatprep.mubr.f32.mxu0 0.0
      %479 = vmatmul.mubr.f32.gmra.mrb[0].mxu0 %v385
      %v480 = vpop.f32.mrb[0].mxu0
      %v481 = vadd.f32 0.0, %v480
      %v482 = vpop.f32.mrb[0].mxu0
      %483 = vmatprep.mubr.f32.mxu0 0.0
      %484 = vmatmul.mubr.f32.gmra.mrb[0].mxu0 %v388
      %v485 = vpop.f32.mrb[0].mxu0
      %v486 = vadd.f32 0.0, %v485
      %v487 = vpop.f32.mrb[0].mxu0
      %488 = vmatprep.mubr.f32.mxu0 0.0
      %489 = vmatmul.mubr.f32.gmra.mrb[0].mxu0 %v391
      %v490 = vpop.f32.mrb[0].mxu0
      %v491 = vadd.f32 0.0, %v490
      %v492 = vpop.f32.mrb[0].mxu0
      %493 = vmatprep.mubr.f32.mxu0 0.0
      %494 = vmatmul.mubr.f32.gmra.mrb[0].mxu0 %v394
      %v495 = vpop.f32.mrb[0].mxu0
      %v496 = vadd.f32 0.0, %v495
      %v497 = vpop.f32.mrb[0].mxu0
      %498 = vmatprep.mubr.f32.mxu0 0.0
      %499 = vmatmul.mubr.f32.gmra.mrb[0].mxu0 %v397
      %v500 = vpop.f32.mrb[0].mxu0
      %v501 = vadd.f32 0.0, %v500
      %v502 = vpop.f32.mrb[0].mxu0
      %503 = vdwg.mxu0
      %v505 = vsel %vm374, %v348, 0
      %v508 = vsel %vm374, %v349, 0
      %v511 = vsel %vm374, %v350, 0
      %v514 = vsel %vm374, %v351, 0
      %v517 = vsel %vm374, %v352, 0
      %v520 = vsel %vm374, %v353, 0
      %v523 = vsel %vm374, %v354, 0
      %v526 = vsel %vm374, %v355, 0
      %528 = vmatprep.subr.mxu0 0.0
      %529 = vmatpush1.msra.mxu0 %v356
      %530 = vmatprep.subr.mxu0 0.0
      %531 = vmatpush1.msra.mxu0 %v357
      %532 = vmatprep.subr.mxu0 0.0
      %533 = vmatpush1.msra.mxu0 %v358
      %534 = vmatprep.subr.mxu0 0.0
      %535 = vmatpush1.msra.mxu0 %v359
      %536 = vmatprep.subr.mxu0 0.0
      %537 = vmatpush1.msra.mxu0 0.0
      %538 = vmatprep.subr.mxu0 0.0
      %539 = vmatpush1.msra.mxu0 0.0
      %540 = vmatprep.subr.mxu0 0.0
      %541 = vmatpush1.msra.mxu0 0.0
      %542 = vmatprep.subr.mxu0 0.0
      %543 = vmatpush1.msra.mxu0 0.0
      %544 = vmatprep.subr.mxu0 0.0
      %545 = vmatpush1.msra.mxu0 0.0
      %546 = vmatprep.subr.mxu0 0.0
      %547 = vmatpush1.msra.mxu0 0.0
      %548 = vmatprep.subr.mxu0 0.0
      %549 = vmatpush1.msra.mxu0 0.0
      %550 = vmatprep.subr.mxu0 0.0
      %551 = vmatpush1.msra.mxu0 0.0
      %552 = vmatprep.subr.mxu0 0.0
      %553 = vmatpush1.msra.mxu0 0.0
      %554 = vmatprep.subr.mxu0 0.0
      %555 = vmatpush1.msra.mxu0 0.0
      %556 = vmatprep.subr.mxu0 0.0
      %557 = vmatpush1.msra.mxu0 0.0
      %558 = vmatprep.subr.mxu0 0.0
      %559 = vmatpush1.msra.mxu0 0.0
      %560 = vmatprep.subr.mxu0 0.0
      %561 = vmatpush1.msra.mxu0 0.0
      %562 = vmatprep.subr.mxu0 0.0
      %563 = vmatpush1.msra.mxu0 0.0
      %564 = vmatprep.subr.mxu0 0.0
      %565 = vmatpush1.msra.mxu0 0.0
      %566 = vmatprep.subr.mxu0 0.0
      %567 = vmatpush1.msra.mxu0 0.0
      %568 = vmatprep.subr.mxu0 0.0
      %569 = vmatpush1.msra.mxu0 0.0
      %570 = vmatprep.subr.mxu0 0.0
      %571 = vmatpush1.msra.mxu0 0.0
      %572 = vmatprep.subr.mxu0 0.0
      %573 = vmatpush1.msra.mxu0 0.0
      %574 = vmatprep.subr.mxu0 0.0
      %575 = vmatpush1.msra.mxu0 0.0
      %576 = vmatprep.subr.mxu0 0.0
      %577 = vmatpush1.msra.mxu0 0.0
      %578 = vmatprep.subr.mxu0 0.0
      %579 = vmatpush1.msra.mxu0 0.0
      %580 = vmatprep.subr.mxu0 0.0
      %581 = vmatpush1.msra.mxu0 0.0
      %582 = vmatprep.subr.mxu0 0.0
      %583 = vmatpush1.msra.mxu0 0.0
      %584 = vmatprep.subr.mxu0 0.0
      %585 = vmatpush1.msra.mxu0 0.0
      %586 = vmatprep.subr.mxu0 0.0
      %587 = vmatpush1.msra.mxu0 0.0
      %588 = vmatprep.subr.mxu0 0.0
      %589 = vmatpush1.msra.mxu0 0.0
      %590 = vmatprep.subr.mxu0 0.0
      %591 = vmatpush1.msra.mxu0 0.0
      %592 = vmatprep.mubr.f32.mxu0 0.0
      %593 = vmatmul.mubr.f32.gmra.mrb[0].mxu0 %v505
      %v594 = vpop.f32.mrb[0].mxu0
      %v595 = vadd.f32 %v466, %v594
      %v596 = vpop.f32.mrb[0].mxu0
      %597 = vmatprep.mubr.f32.mxu0 0.0
      %598 = vmatmul.mubr.f32.gmra.mrb[0].mxu0 %v508
      %v599 = vpop.f32.mrb[0].mxu0
      %v600 = vadd.f32 %v471, %v599
      %v601 = vpop.f32.mrb[0].mxu0
      %602 = vmatprep.mubr.f32.mxu0 0.0
      %603 = vmatmul.mubr.f32.gmra.mrb[0].mxu0 %v511
      %v604 = vpop.f32.mrb[0].mxu0
      %v605 = vadd.f32 %v476, %v604
      %v606 = vpop.f32.mrb[0].mxu0
      %607 = vmatprep.mubr.f32.mxu0 0.0
      %608 = vmatmul.mubr.f32.gmra.mrb[0].mxu0 %v514
      %v609 = vpop.f32.mrb[0].mxu0
      %v610 = vadd.f32 %v481, %v609
      %v611 = vpop.f32.mrb[0].mxu0
      %612 = vmatprep.mubr.f32.mxu0 0.0
      %613 = vmatmul.mubr.f32.gmra.mrb[0].mxu0 %v517
      %v614 = vpop.f32.mrb[0].mxu0
      %v615 = vadd.f32 %v486, %v614
      %v616 = vpop.f32.mrb[0].mxu0
      %617 = vmatprep.mubr.f32.mxu0 0.0
      %618 = vmatmul.mubr.f32.gmra.mrb[0].mxu0 %v520
      %v619 = vpop.f32.mrb[0].mxu0
      %v620 = vadd.f32 %v491, %v619
      %v621 = vpop.f32.mrb[0].mxu0
      %622 = vmatprep.mubr.f32.mxu0 0.0
      %623 = vmatmul.mubr.f32.gmra.mrb[0].mxu0 %v523
      %v624 = vpop.f32.mrb[0].mxu0
      %v625 = vadd.f32 %v496, %v624
      %v626 = vpop.f32.mrb[0].mxu0
      %627 = vmatprep.mubr.f32.mxu0 0.0
      %628 = vmatmul.mubr.f32.gmra.mrb[0].mxu0 %v526
      %v629 = vpop.f32.mrb[0].mxu0
      %v630 = vadd.f32 %v501, %v629
      %v631 = vpop.f32.mrb[0].mxu0
      %632 = vdwg.mxu0
      %v633 = vld [vmem:[%s329] sm:$0x1]
      %v635 = vlaneseq
      %v636 = vshrl.u32 %v635, 7
      %v637 = vsub.s32 0, %v636
      %v638 = vrot.slane %v633, %v637
      %v640 = vadd.f32 %v595, %v638
      %v641 = vadd.f32 %v600, %v638
      %v642 = vadd.f32 %v605, %v638
      %v643 = vadd.f32 %v610, %v638
      %v644 = vadd.f32 %v615, %v638
      %v645 = vadd.f32 %v620, %v638
      %v646 = vadd.f32 %v625, %v638
      %v647 = vadd.f32 %v630, %v638
      %648 = vst [vmem:[#allocation2] sm:$0xff] %v640
      %649 = vst [vmem:[#allocation2 + $0x8] sm:$0xff] %v641
      %650 = vst [vmem:[#allocation2 + $0x10] sm:$0xff] %v642
      %651 = vst [vmem:[#allocation2 + $0x18] sm:$0xff] %v643
      %652 = vst [vmem:[#allocation2 + $0x20] sm:$0xff] %v644
      %653 = vst [vmem:[#allocation2 + $0x28] sm:$0xff] %v645
      %654 = vst [vmem:[#allocation2 + $0x30] sm:$0xff] %v646
      %655 = vst [vmem:[#allocation2 + $0x38] sm:$0xff] %v647
      %v656 = vld [vmem:[%s326] sm:$0xff]
      %v657 = vld [vmem:[%s326 + $0x8] sm:$0xff]
      %v658 = vld [vmem:[%s326 + $0x10] sm:$0xff]
      %v659 = vld [vmem:[%s326 + $0x18] sm:$0xff]
      %v660 = vlaneseq
      %v661 = vand.u32 %v660, 127
      %vm662 = vcmp.ge.s32.totalorder %v661, 64
      %vm663 = vcmp.lt.s32.totalorder %v661, 96
      %vm664 = vmand %vm662, %vm663
      %v665 = vld [vmem:[#allocation3] sm:$0xff]
      %v666 = vld [vmem:[#allocation4] sm:$0xff]
      %v667 = vld [vmem:[#allocation5] sm:$0xff]
      %s668 = scalar_select %p339, 7, 0
      %s669 = smul.u32 %s668, 8
      %s670 = scalar_lea.vmem [#allocation2], %s669
      %v671 = vld [vmem:[%s670] sm:$0xff]
      %v673 = vsel %vm374, %v665, 0
      %675 = vmatprep.subr.mxu0 0.0
      %676 = vmatpush1.msra.mxu0 %v656
      %677 = vmatprep.subr.mxu0 0.0
      %678 = vmatpush1.msra.mxu0 %v657
      %679 = vmatprep.subr.mxu0 0.0
      %680 = vmatpush1.msra.mxu0 %v658
      %681 = vmatprep.subr.mxu0 0.0
      %682 = vmatpush1.msra.mxu0 %v659
      %683 = vmatprep.subr.mxu0 0.0
      %684 = vmatpush1.msra.mxu0 0.0
      %685 = vmatprep.subr.mxu0 0.0
      %686 = vmatpush1.msra.mxu0 0.0
      %687 = vmatprep.subr.mxu0 0.0
      %688 = vmatpush1.msra.mxu0 0.0
      %689 = vmatprep.subr.mxu0 0.0
      %690 = vmatpush1.msra.mxu0 0.0
      %691 = vmatprep.subr.mxu0 0.0
      %692 = vmatpush1.msra.mxu0 0.0
      %693 = vmatprep.subr.mxu0 0.0
      %694 = vmatpush1.msra.mxu0 0.0
      %695 = vmatprep.subr.mxu0 0.0
      %696 = vmatpush1.msra.mxu0 0.0
      %697 = vmatprep.subr.mxu0 0.0
      %698 = vmatpush1.msra.mxu0 0.0
      %699 = vmatprep.subr.mxu0 0.0
      %700 = vmatpush1.msra.mxu0 0.0
      %701 = vmatprep.subr.mxu0 0.0
      %702 = vmatpush1.msra.mxu0 0.0
      %703 = vmatprep.subr.mxu0 0.0
      %704 = vmatpush1.msra.mxu0 0.0
      %705 = vmatprep.subr.mxu0 0.0
      %706 = vmatpush1.msra.mxu0 0.0
      %707 = vmatprep.subr.mxu0 0.0
      %708 = vmatpush1.msra.mxu0 0.0
      %709 = vmatprep.subr.mxu0 0.0
      %710 = vmatpush1.msra.mxu0 0.0
      %711 = vmatprep.subr.mxu0 0.0
      %712 = vmatpush1.msra.mxu0 0.0
      %713 = vmatprep.subr.mxu0 0.0
      %714 = vmatpush1.msra.mxu0 0.0
      %715 = vmatprep.subr.mxu0 0.0
      %716 = vmatpush1.msra.mxu0 0.0
      %717 = vmatprep.subr.mxu0 0.0
      %718 = vmatpush1.msra.mxu0 0.0
      %719 = vmatprep.subr.mxu0 0.0
      %720 = vmatpush1.msra.mxu0 0.0
      %721 = vmatprep.subr.mxu0 0.0
      %722 = vmatpush1.msra.mxu0 0.0
      %723 = vmatprep.subr.mxu0 0.0
      %724 = vmatpush1.msra.mxu0 0.0
      %725 = vmatprep.subr.mxu0 0.0
      %726 = vmatpush1.msra.mxu0 0.0
      %727 = vmatprep.subr.mxu0 0.0
      %728 = vmatpush1.msra.mxu0 0.0
      %729 = vmatprep.subr.mxu0 0.0
      %730 = vmatpush1.msra.mxu0 0.0
      %731 = vmatprep.subr.mxu0 0.0
      %732 = vmatpush1.msra.mxu0 0.0
      %733 = vmatprep.subr.mxu0 0.0
      %734 = vmatpush1.msra.mxu0 0.0
      %735 = vmatprep.subr.mxu0 0.0
      %736 = vmatpush1.msra.mxu0 0.0
      %737 = vmatprep.subr.mxu0 0.0
      %738 = vmatpush1.msra.mxu0 0.0
      %739 = vmatprep.mubr.f32.mxu0 0.0
      %740 = vmatmul.mubr.f32.gmra.mrb[0].mxu0 %v673
      %v741 = vpop.f32.mrb[0].mxu0
      %v742 = vadd.f32 0.0, %v741
      %v743 = vpop.f32.mrb[0].mxu0
      %744 = vdwg.mxu0
      %v745 = vadd.f32 %v671, %v742
      %v746 = vtanh.pop %v745
      %v747 = vxor.u32 %v745, 2147483648
      %v748 = vmul.f32 %v747, 1.442695
      %v749 = vpow.pop %v748
      %v750 = vadd.f32 %v749, 1.0
      %v751 = vrcp.pop %v750
      %v752 = vmul.f32 1.0, %v751
      %v753 = vsel %vm664, %v746, %v752
      %755 = vrot.lane.b32.xlu0 %v666, 32
      %v756 = vpop.permute.xlu0 %755
      %v758 = vmul.f32 %v753, %v756
      %760 = vrot.lane.b32.xlu0 %v753, 64
      %v761 = vpop.permute.xlu0 %760
      %v763 = vmul.f32 %v753, %v761
      %765 = vrot.lane.b32.xlu0 %v763, 32
      %v766 = vpop.permute.xlu0 %765
      %v768 = vadd.f32 %v758, %v766
      %v769 = vtanh.pop %v768
      %771 = vrot.lane.b32.xlu0 %v769, 64
      %v772 = vpop.permute.xlu0 %771
      %v774 = vmul.f32 %v753, %v772
      %776 = vrot.lane.b32.xlu0 %v774, 32
      %v777 = vpop.permute.xlu0 %776
      %v779 = vadd.f32 %v667, %v777
      %s780 = scalar_select %p339, 6, 1
      %s781 = smul.u32 %s780, 8
      %s782 = scalar_lea.vmem [#allocation2], %s781
      %v783 = vld [vmem:[%s782] sm:$0xff]
      %v784 = vsel %vm374, %v777, 0
      %786 = vmatprep.subr.mxu0 0.0
      %787 = vmatpush1.msra.mxu0 %v656
      %788 = vmatprep.subr.mxu0 0.0
      %789 = vmatpush1.msra.mxu0 %v657
      %790 = vmatprep.subr.mxu0 0.0
      %791 = vmatpush1.msra.mxu0 %v658
      %792 = vmatprep.subr.mxu0 0.0
      %793 = vmatpush1.msra.mxu0 %v659
      %794 = vmatprep.subr.mxu0 0.0
      %795 = vmatpush1.msra.mxu0 0.0
      %796 = vmatprep.subr.mxu0 0.0
      %797 = vmatpush1.msra.mxu0 0.0
      %798 = vmatprep.subr.mxu0 0.0
      %799 = vmatpush1.msra.mxu0 0.0
      %800 = vmatprep.subr.mxu0 0.0
      %801 = vmatpush1.msra.mxu0 0.0
      %802 = vmatprep.subr.mxu0 0.0
      %803 = vmatpush1.msra.mxu0 0.0
      %804 = vmatprep.subr.mxu0 0.0
      %805 = vmatpush1.msra.mxu0 0.0
      %806 = vmatprep.subr.mxu0 0.0
      %807 = vmatpush1.msra.mxu0 0.0
      %808 = vmatprep.subr.mxu0 0.0
      %809 = vmatpush1.msra.mxu0 0.0
      %810 = vmatprep.subr.mxu0 0.0
      %811 = vmatpush1.msra.mxu0 0.0
      %812 = vmatprep.subr.mxu0 0.0
      %813 = vmatpush1.msra.mxu0 0.0
      %814 = vmatprep.subr.mxu0 0.0
      %815 = vmatpush1.msra.mxu0 0.0
      %816 = vmatprep.subr.mxu0 0.0
      %817 = vmatpush1.msra.mxu0 0.0
      %818 = vmatprep.subr.mxu0 0.0
      %819 = vmatpush1.msra.mxu0 0.0
      %820 = vmatprep.subr.mxu0 0.0
      %821 = vmatpush1.msra.mxu0 0.0
      %822 = vmatprep.subr.mxu0 0.0
      %823 = vmatpush1.msra.mxu0 0.0
      %824 = vmatprep.subr.mxu0 0.0
      %825 = vmatpush1.msra.mxu0 0.0
      %826 = vmatprep.subr.mxu0 0.0
      %827 = vmatpush1.msra.mxu0 0.0
      %828 = vmatprep.subr.mxu0 0.0
      %829 = vmatpush1.msra.mxu0 0.0
      %830 = vmatprep.subr.mxu0 0.0
      %831 = vmatpush1.msra.mxu0 0.0
      %832 = vmatprep.subr.mxu0 0.0
      %833 = vmatpush1.msra.mxu0 0.0
      %834 = vmatprep.subr.mxu0 0.0
      %835 = vmatpush1.msra.mxu0 0.0
      %836 = vmatprep.subr.mxu0 0.0
      %837 = vmatpush1.msra.mxu0 0.0
      %838 = vmatprep.subr.mxu0 0.0
      %839 = vmatpush1.msra.mxu0 0.0
      %840 = vmatprep.subr.mxu0 0.0
      %841 = vmatpush1.msra.mxu0 0.0
      %842 = vmatprep.subr.mxu0 0.0
      %843 = vmatpush1.msra.mxu0 0.0
      %844 = vmatprep.subr.mxu0 0.0
      %845 = vmatpush1.msra.mxu0 0.0
      %846 = vmatprep.subr.mxu0 0.0
      %847 = vmatpush1.msra.mxu0 0.0
      %848 = vmatprep.subr.mxu0 0.0
      %849 = vmatpush1.msra.mxu0 0.0
      %850 = vmatprep.mubr.f32.mxu0 0.0
      %851 = vmatmul.mubr.f32.gmra.mrb[0].mxu0 %v784
      %v852 = vpop.f32.mrb[0].mxu0
      %v853 = vadd.f32 0.0, %v852
      %v854 = vpop.f32.mrb[0].mxu0
      %855 = vdwg.mxu0
      %v856 = vadd.f32 %v783, %v853
      %v857 = vtanh.pop %v856
      %v858 = vxor.u32 %v856, 2147483648
      %v859 = vmul.f32 %v858, 1.442695
      %v860 = vpow.pop %v859
      %v861 = vadd.f32 %v860, 1.0
      %v862 = vrcp.pop %v861
      %v863 = vmul.f32 1.0, %v862
      %v864 = vsel %vm664, %v857, %v863
      %v865 = vmul.f32 %v864, %v768
      %867 = vrot.lane.b32.xlu0 %v864, 64
      %v868 = vpop.permute.xlu0 %867
      %v870 = vmul.f32 %v864, %v868
      %872 = vrot.lane.b32.xlu0 %v870, 32
      %v873 = vpop.permute.xlu0 %872
      %v875 = vadd.f32 %v865, %v873
      %v876 = vtanh.pop %v875
      %878 = vrot.lane.b32.xlu0 %v876, 64
      %v879 = vpop.permute.xlu0 %878
      %v881 = vmul.f32 %v864, %v879
      %883 = vrot.lane.b32.xlu0 %v881, 32
      %v884 = vpop.permute.xlu0 %883
      %v886 = vadd.f32 %v779, %v884
      %s887 = scalar_select %p339, 5, 2
      %s888 = smul.u32 %s887, 8
      %s889 = scalar_lea.vmem [#allocation2], %s888
      %v890 = vld [vmem:[%s889] sm:$0xff]
      %v891 = vsel %vm374, %v884, 0
      %893 = vmatprep.subr.mxu0 0.0
      %894 = vmatpush1.msra.mxu0 %v656
      %895 = vmatprep.subr.mxu0 0.0
      %896 = vmatpush1.msra.mxu0 %v657
      %897 = vmatprep.subr.mxu0 0.0
      %898 = vmatpush1.msra.mxu0 %v658
      %899 = vmatprep.subr.mxu0 0.0
      %900 = vmatpush1.msra.mxu0 %v659
      %901 = vmatprep.subr.mxu0 0.0
      %902 = vmatpush1.msra.mxu0 0.0
      %903 = vmatprep.subr.mxu0 0.0
      %904 = vmatpush1.msra.mxu0 0.0
      %905 = vmatprep.subr.mxu0 0.0
      %906 = vmatpush1.msra.mxu0 0.0
      %907 = vmatprep.subr.mxu0 0.0
      %908 = vmatpush1.msra.mxu0 0.0
      %909 = vmatprep.subr.mxu0 0.0
      %910 = vmatpush1.msra.mxu0 0.0
      %911 = vmatprep.subr.mxu0 0.0
      %912 = vmatpush1.msra.mxu0 0.0
      %913 = vmatprep.subr.mxu0 0.0
      %914 = vmatpush1.msra.mxu0 0.0
      %915 = vmatprep.subr.mxu0 0.0
      %916 = vmatpush1.msra.mxu0 0.0
      %917 = vmatprep.subr.mxu0 0.0
      %918 = vmatpush1.msra.mxu0 0.0
      %919 = vmatprep.subr.mxu0 0.0
      %920 = vmatpush1.msra.mxu0 0.0
      %921 = vmatprep.subr.mxu0 0.0
      %922 = vmatpush1.msra.mxu0 0.0
      %923 = vmatprep.subr.mxu0 0.0
      %924 = vmatpush1.msra.mxu0 0.0
      %925 = vmatprep.subr.mxu0 0.0
      %926 = vmatpush1.msra.mxu0 0.0
      %927 = vmatprep.subr.mxu0 0.0
      %928 = vmatpush1.msra.mxu0 0.0
      %929 = vmatprep.subr.mxu0 0.0
      %930 = vmatpush1.msra.mxu0 0.0
      %931 = vmatprep.subr.mxu0 0.0
      %932 = vmatpush1.msra.mxu0 0.0
      %933 = vmatprep.subr.mxu0 0.0
      %934 = vmatpush1.msra.mxu0 0.0
      %935 = vmatprep.subr.mxu0 0.0
      %936 = vmatpush1.msra.mxu0 0.0
      %937 = vmatprep.subr.mxu0 0.0
      %938 = vmatpush1.msra.mxu0 0.0
      %939 = vmatprep.subr.mxu0 0.0
      %940 = vmatpush1.msra.mxu0 0.0
      %941 = vmatprep.subr.mxu0 0.0
      %942 = vmatpush1.msra.mxu0 0.0
      %943 = vmatprep.subr.mxu0 0.0
      %944 = vmatpush1.msra.mxu0 0.0
      %945 = vmatprep.subr.mxu0 0.0
      %946 = vmatpush1.msra.mxu0 0.0
      %947 = vmatprep.subr.mxu0 0.0
      %948 = vmatpush1.msra.mxu0 0.0
      %949 = vmatprep.subr.mxu0 0.0
      %950 = vmatpush1.msra.mxu0 0.0
      %951 = vmatprep.subr.mxu0 0.0
      %952 = vmatpush1.msra.mxu0 0.0
      %953 = vmatprep.subr.mxu0 0.0
      %954 = vmatpush1.msra.mxu0 0.0
      %955 = vmatprep.subr.mxu0 0.0
      %956 = vmatpush1.msra.mxu0 0.0
      %957 = vmatprep.mubr.f32.mxu0 0.0
      %958 = vmatmul.mubr.f32.gmra.mrb[0].mxu0 %v891
      %v959 = vpop.f32.mrb[0].mxu0
      %v960 = vadd.f32 0.0, %v959
      %v961 = vpop.f32.mrb[0].mxu0
      %962 = vdwg.mxu0
      %v963 = vadd.f32 %v890, %v960
      %v964 = vtanh.pop %v963
      %v965 = vxor.u32 %v963, 2147483648
      %v966 = vmul.f32 %v965, 1.442695
      %v967 = vpow.pop %v966
      %v968 = vadd.f32 %v967, 1.0
      %v969 = vrcp.pop %v968
      %v970 = vmul.f32 1.0, %v969
      %v971 = vsel %vm664, %v964, %v970
      %v972 = vmul.f32 %v971, %v875
      %974 = vrot.lane.b32.xlu0 %v971, 64
      %v975 = vpop.permute.xlu0 %974
      %v977 = vmul.f32 %v971, %v975
      %979 = vrot.lane.b32.xlu0 %v977, 32
      %v980 = vpop.permute.xlu0 %979
      %v982 = vadd.f32 %v972, %v980
      %v983 = vtanh.pop %v982
      %985 = vrot.lane.b32.xlu0 %v983, 64
      %v986 = vpop.permute.xlu0 %985
      %v988 = vmul.f32 %v971, %v986
      %990 = vrot.lane.b32.xlu0 %v988, 32
      %v991 = vpop.permute.xlu0 %990
      %v993 = vadd.f32 %v886, %v991
      %s994 = scalar_select %p339, 4, 3
      %s995 = smul.u32 %s994, 8
      %s996 = scalar_lea.vmem [#allocation2], %s995
      %v997 = vld [vmem:[%s996] sm:$0xff]
      %v998 = vsel %vm374, %v991, 0
      %1000 = vmatprep.subr.mxu0 0.0
      %1001 = vmatpush1.msra.mxu0 %v656
      %1002 = vmatprep.subr.mxu0 0.0
      %1003 = vmatpush1.msra.mxu0 %v657
      %1004 = vmatprep.subr.mxu0 0.0
      %1005 = vmatpush1.msra.mxu0 %v658
      %1006 = vmatprep.subr.mxu0 0.0
      %1007 = vmatpush1.msra.mxu0 %v659
      %1008 = vmatprep.subr.mxu0 0.0
      %1009 = vmatpush1.msra.mxu0 0.0
      %1010 = vmatprep.subr.mxu0 0.0
      %1011 = vmatpush1.msra.mxu0 0.0
      %1012 = vmatprep.subr.mxu0 0.0
      %1013 = vmatpush1.msra.mxu0 0.0
      %1014 = vmatprep.subr.mxu0 0.0
      %1015 = vmatpush1.msra.mxu0 0.0
      %1016 = vmatprep.subr.mxu0 0.0
      %1017 = vmatpush1.msra.mxu0 0.0
      %1018 = vmatprep.subr.mxu0 0.0
      %1019 = vmatpush1.msra.mxu0 0.0
      %1020 = vmatprep.subr.mxu0 0.0
      %1021 = vmatpush1.msra.mxu0 0.0
      %1022 = vmatprep.subr.mxu0 0.0
      %1023 = vmatpush1.msra.mxu0 0.0
      %1024 = vmatprep.subr.mxu0 0.0
      %1025 = vmatpush1.msra.mxu0 0.0
      %1026 = vmatprep.subr.mxu0 0.0
      %1027 = vmatpush1.msra.mxu0 0.0
      %1028 = vmatprep.subr.mxu0 0.0
      %1029 = vmatpush1.msra.mxu0 0.0
      %1030 = vmatprep.subr.mxu0 0.0
      %1031 = vmatpush1.msra.mxu0 0.0
      %1032 = vmatprep.subr.mxu0 0.0
      %1033 = vmatpush1.msra.mxu0 0.0
      %1034 = vmatprep.subr.mxu0 0.0
      %1035 = vmatpush1.msra.mxu0 0.0
      %1036 = vmatprep.subr.mxu0 0.0
      %1037 = vmatpush1.msra.mxu0 0.0
      %1038 = vmatprep.subr.mxu0 0.0
      %1039 = vmatpush1.msra.mxu0 0.0
      %1040 = vmatprep.subr.mxu0 0.0
      %1041 = vmatpush1.msra.mxu0 0.0
      %1042 = vmatprep.subr.mxu0 0.0
      %1043 = vmatpush1.msra.mxu0 0.0
      %1044 = vmatprep.subr.mxu0 0.0
      %1045 = vmatpush1.msra.mxu0 0.0
      %1046 = vmatprep.subr.mxu0 0.0
      %1047 = vmatpush1.msra.mxu0 0.0
      %1048 = vmatprep.subr.mxu0 0.0
      %1049 = vmatpush1.msra.mxu0 0.0
      %1050 = vmatprep.subr.mxu0 0.0
      %1051 = vmatpush1.msra.mxu0 0.0
      %1052 = vmatprep.subr.mxu0 0.0
      %1053 = vmatpush1.msra.mxu0 0.0
      %1054 = vmatprep.subr.mxu0 0.0
      %1055 = vmatpush1.msra.mxu0 0.0
      %1056 = vmatprep.subr.mxu0 0.0
      %1057 = vmatpush1.msra.mxu0 0.0
      %1058 = vmatprep.subr.mxu0 0.0
      %1059 = vmatpush1.msra.mxu0 0.0
      %1060 = vmatprep.subr.mxu0 0.0
      %1061 = vmatpush1.msra.mxu0 0.0
      %1062 = vmatprep.subr.mxu0 0.0
      %1063 = vmatpush1.msra.mxu0 0.0
      %1064 = vmatprep.mubr.f32.mxu0 0.0
      %1065 = vmatmul.mubr.f32.gmra.mrb[0].mxu0 %v998
      %v1066 = vpop.f32.mrb[0].mxu0
      %v1067 = vadd.f32 0.0, %v1066
      %v1068 = vpop.f32.mrb[0].mxu0
      %1069 = vdwg.mxu0
      %v1070 = vadd.f32 %v997, %v1067
      %v1071 = vtanh.pop %v1070
      %v1072 = vxor.u32 %v1070, 2147483648
      %v1073 = vmul.f32 %v1072, 1.442695
      %v1074 = vpow.pop %v1073
      %v1075 = vadd.f32 %v1074, 1.0
      %v1076 = vrcp.pop %v1075
      %v1077 = vmul.f32 1.0, %v1076
      %v1078 = vsel %vm664, %v1071, %v1077
      %v1079 = vmul.f32 %v1078, %v982
      %1081 = vrot.lane.b32.xlu0 %v1078, 64
      %v1082 = vpop.permute.xlu0 %1081
      %v1084 = vmul.f32 %v1078, %v1082
      %1086 = vrot.lane.b32.xlu0 %v1084, 32
      %v1087 = vpop.permute.xlu0 %1086
      %v1089 = vadd.f32 %v1079, %v1087
      %v1090 = vtanh.pop %v1089
      %1092 = vrot.lane.b32.xlu0 %v1090, 64
      %v1093 = vpop.permute.xlu0 %1092
      %v1095 = vmul.f32 %v1078, %v1093
      %1097 = vrot.lane.b32.xlu0 %v1095, 32
      %v1098 = vpop.permute.xlu0 %1097
      %v1100 = vadd.f32 %v993, %v1098
      %s1101 = scalar_select %p339, 3, 4
      %s1102 = smul.u32 %s1101, 8
      %s1103 = scalar_lea.vmem [#allocation2], %s1102
      %v1104 = vld [vmem:[%s1103] sm:$0xff]
      %v1105 = vsel %vm374, %v1098, 0
      %1107 = vmatprep.subr.mxu0 0.0
      %1108 = vmatpush1.msra.mxu0 %v656
      %1109 = vmatprep.subr.mxu0 0.0
      %1110 = vmatpush1.msra.mxu0 %v657
      %1111 = vmatprep.subr.mxu0 0.0
      %1112 = vmatpush1.msra.mxu0 %v658
      %1113 = vmatprep.subr.mxu0 0.0
      %1114 = vmatpush1.msra.mxu0 %v659
      %1115 = vmatprep.subr.mxu0 0.0
      %1116 = vmatpush1.msra.mxu0 0.0
      %1117 = vmatprep.subr.mxu0 0.0
      %1118 = vmatpush1.msra.mxu0 0.0
      %1119 = vmatprep.subr.mxu0 0.0
      %1120 = vmatpush1.msra.mxu0 0.0
      %1121 = vmatprep.subr.mxu0 0.0
      %1122 = vmatpush1.msra.mxu0 0.0
      %1123 = vmatprep.subr.mxu0 0.0
      %1124 = vmatpush1.msra.mxu0 0.0
      %1125 = vmatprep.subr.mxu0 0.0
      %1126 = vmatpush1.msra.mxu0 0.0
      %1127 = vmatprep.subr.mxu0 0.0
      %1128 = vmatpush1.msra.mxu0 0.0
      %1129 = vmatprep.subr.mxu0 0.0
      %1130 = vmatpush1.msra.mxu0 0.0
      %1131 = vmatprep.subr.mxu0 0.0
      %1132 = vmatpush1.msra.mxu0 0.0
      %1133 = vmatprep.subr.mxu0 0.0
      %1134 = vmatpush1.msra.mxu0 0.0
      %1135 = vmatprep.subr.mxu0 0.0
      %1136 = vmatpush1.msra.mxu0 0.0
      %1137 = vmatprep.subr.mxu0 0.0
      %1138 = vmatpush1.msra.mxu0 0.0
      %1139 = vmatprep.subr.mxu0 0.0
      %1140 = vmatpush1.msra.mxu0 0.0
      %1141 = vmatprep.subr.mxu0 0.0
      %1142 = vmatpush1.msra.mxu0 0.0
      %1143 = vmatprep.subr.mxu0 0.0
      %1144 = vmatpush1.msra.mxu0 0.0
      %1145 = vmatprep.subr.mxu0 0.0
      %1146 = vmatpush1.msra.mxu0 0.0
      %1147 = vmatprep.subr.mxu0 0.0
      %1148 = vmatpush1.msra.mxu0 0.0
      %1149 = vmatprep.subr.mxu0 0.0
      %1150 = vmatpush1.msra.mxu0 0.0
      %1151 = vmatprep.subr.mxu0 0.0
      %1152 = vmatpush1.msra.mxu0 0.0
      %1153 = vmatprep.subr.mxu0 0.0
      %1154 = vmatpush1.msra.mxu0 0.0
      %1155 = vmatprep.subr.mxu0 0.0
      %1156 = vmatpush1.msra.mxu0 0.0
      %1157 = vmatprep.subr.mxu0 0.0
      %1158 = vmatpush1.msra.mxu0 0.0
      %1159 = vmatprep.subr.mxu0 0.0
      %1160 = vmatpush1.msra.mxu0 0.0
      %1161 = vmatprep.subr.mxu0 0.0
      %1162 = vmatpush1.msra.mxu0 0.0
      %1163 = vmatprep.subr.mxu0 0.0
      %1164 = vmatpush1.msra.mxu0 0.0
      %1165 = vmatprep.subr.mxu0 0.0
      %1166 = vmatpush1.msra.mxu0 0.0
      %1167 = vmatprep.subr.mxu0 0.0
      %1168 = vmatpush1.msra.mxu0 0.0
      %1169 = vmatprep.subr.mxu0 0.0
      %1170 = vmatpush1.msra.mxu0 0.0
      %1171 = vmatprep.mubr.f32.mxu0 0.0
      %1172 = vmatmul.mubr.f32.gmra.mrb[0].mxu0 %v1105
      %v1173 = vpop.f32.mrb[0].mxu0
      %v1174 = vadd.f32 0.0, %v1173
      %v1175 = vpop.f32.mrb[0].mxu0
      %1176 = vdwg.mxu0
      %v1177 = vadd.f32 %v1104, %v1174
      %v1178 = vtanh.pop %v1177
      %v1179 = vxor.u32 %v1177, 2147483648
      %v1180 = vmul.f32 %v1179, 1.442695
      %v1181 = vpow.pop %v1180
      %v1182 = vadd.f32 %v1181, 1.0
      %v1183 = vrcp.pop %v1182
      %v1184 = vmul.f32 1.0, %v1183
      %v1185 = vsel %vm664, %v1178, %v1184
      %v1186 = vmul.f32 %v1185, %v1089
      %1188 = vrot.lane.b32.xlu0 %v1185, 64
      %v1189 = vpop.permute.xlu0 %1188
      %v1191 = vmul.f32 %v1185, %v1189
      %1193 = vrot.lane.b32.xlu0 %v1191, 32
      %v1194 = vpop.permute.xlu0 %1193
      %v1196 = vadd.f32 %v1186, %v1194
      %v1197 = vtanh.pop %v1196
      %1199 = vrot.lane.b32.xlu0 %v1197, 64
      %v1200 = vpop.permute.xlu0 %1199
      %v1202 = vmul.f32 %v1185, %v1200
      %1204 = vrot.lane.b32.xlu0 %v1202, 32
      %v1205 = vpop.permute.xlu0 %1204
      %v1207 = vadd.f32 %v1100, %v1205
      %s1208 = scalar_select %p339, 2, 5
      %s1209 = smul.u32 %s1208, 8
      %s1210 = scalar_lea.vmem [#allocation2], %s1209
      %v1211 = vld [vmem:[%s1210] sm:$0xff]
      %v1212 = vsel %vm374, %v1205, 0
      %1214 = vmatprep.subr.mxu0 0.0
      %1215 = vmatpush1.msra.mxu0 %v656
      %1216 = vmatprep.subr.mxu0 0.0
      %1217 = vmatpush1.msra.mxu0 %v657
      %1218 = vmatprep.subr.mxu0 0.0
      %1219 = vmatpush1.msra.mxu0 %v658
      %1220 = vmatprep.subr.mxu0 0.0
      %1221 = vmatpush1.msra.mxu0 %v659
      %1222 = vmatprep.subr.mxu0 0.0
      %1223 = vmatpush1.msra.mxu0 0.0
      %1224 = vmatprep.subr.mxu0 0.0
      %1225 = vmatpush1.msra.mxu0 0.0
      %1226 = vmatprep.subr.mxu0 0.0
      %1227 = vmatpush1.msra.mxu0 0.0
      %1228 = vmatprep.subr.mxu0 0.0
      %1229 = vmatpush1.msra.mxu0 0.0
      %1230 = vmatprep.subr.mxu0 0.0
      %1231 = vmatpush1.msra.mxu0 0.0
      %1232 = vmatprep.subr.mxu0 0.0
      %1233 = vmatpush1.msra.mxu0 0.0
      %1234 = vmatprep.subr.mxu0 0.0
      %1235 = vmatpush1.msra.mxu0 0.0
      %1236 = vmatprep.subr.mxu0 0.0
      %1237 = vmatpush1.msra.mxu0 0.0
      %1238 = vmatprep.subr.mxu0 0.0
      %1239 = vmatpush1.msra.mxu0 0.0
      %1240 = vmatprep.subr.mxu0 0.0
      %1241 = vmatpush1.msra.mxu0 0.0
      %1242 = vmatprep.subr.mxu0 0.0
      %1243 = vmatpush1.msra.mxu0 0.0
      %1244 = vmatprep.subr.mxu0 0.0
      %1245 = vmatpush1.msra.mxu0 0.0
      %1246 = vmatprep.subr.mxu0 0.0
      %1247 = vmatpush1.msra.mxu0 0.0
      %1248 = vmatprep.subr.mxu0 0.0
      %1249 = vmatpush1.msra.mxu0 0.0
      %1250 = vmatprep.subr.mxu0 0.0
      %1251 = vmatpush1.msra.mxu0 0.0
      %1252 = vmatprep.subr.mxu0 0.0
      %1253 = vmatpush1.msra.mxu0 0.0
      %1254 = vmatprep.subr.mxu0 0.0
      %1255 = vmatpush1.msra.mxu0 0.0
      %1256 = vmatprep.subr.mxu0 0.0
      %1257 = vmatpush1.msra.mxu0 0.0
      %1258 = vmatprep.subr.mxu0 0.0
      %1259 = vmatpush1.msra.mxu0 0.0
      %1260 = vmatprep.subr.mxu0 0.0
      %1261 = vmatpush1.msra.mxu0 0.0
      %1262 = vmatprep.subr.mxu0 0.0
      %1263 = vmatpush1.msra.mxu0 0.0
      %1264 = vmatprep.subr.mxu0 0.0
      %1265 = vmatpush1.msra.mxu0 0.0
      %1266 = vmatprep.subr.mxu0 0.0
      %1267 = vmatpush1.msra.mxu0 0.0
      %1268 = vmatprep.subr.mxu0 0.0
      %1269 = vmatpush1.msra.mxu0 0.0
      %1270 = vmatprep.subr.mxu0 0.0
      %1271 = vmatpush1.msra.mxu0 0.0
      %1272 = vmatprep.subr.mxu0 0.0
      %1273 = vmatpush1.msra.mxu0 0.0
      %1274 = vmatprep.subr.mxu0 0.0
      %1275 = vmatpush1.msra.mxu0 0.0
      %1276 = vmatprep.subr.mxu0 0.0
      %1277 = vmatpush1.msra.mxu0 0.0
      %1278 = vmatprep.mubr.f32.mxu0 0.0
      %1279 = vmatmul.mubr.f32.gmra.mrb[0].mxu0 %v1212
      %v1280 = vpop.f32.mrb[0].mxu0
      %v1281 = vadd.f32 0.0, %v1280
      %v1282 = vpop.f32.mrb[0].mxu0
      %1283 = vdwg.mxu0
      %v1284 = vadd.f32 %v1211, %v1281
      %v1285 = vtanh.pop %v1284
      %v1286 = vxor.u32 %v1284, 2147483648
      %v1287 = vmul.f32 %v1286, 1.442695
      %v1288 = vpow.pop %v1287
      %v1289 = vadd.f32 %v1288, 1.0
      %v1290 = vrcp.pop %v1289
      %v1291 = vmul.f32 1.0, %v1290
      %v1292 = vsel %vm664, %v1285, %v1291
      %v1293 = vmul.f32 %v1292, %v1196
      %1295 = vrot.lane.b32.xlu0 %v1292, 64
      %v1296 = vpop.permute.xlu0 %1295
      %v1298 = vmul.f32 %v1292, %v1296
      %1300 = vrot.lane.b32.xlu0 %v1298, 32
      %v1301 = vpop.permute.xlu0 %1300
      %v1303 = vadd.f32 %v1293, %v1301
      %v1304 = vtanh.pop %v1303
      %1306 = vrot.lane.b32.xlu0 %v1304, 64
      %v1307 = vpop.permute.xlu0 %1306
      %v1309 = vmul.f32 %v1292, %v1307
      %1311 = vrot.lane.b32.xlu0 %v1309, 32
      %v1312 = vpop.permute.xlu0 %1311
      %v1314 = vadd.f32 %v1207, %v1312
      %s1315 = scalar_select %p339, 1, 6
      %s1316 = smul.u32 %s1315, 8
      %s1317 = scalar_lea.vmem [#allocation2], %s1316
      %v1318 = vld [vmem:[%s1317] sm:$0xff]
      %v1319 = vsel %vm374, %v1312, 0
      %1321 = vmatprep.subr.mxu0 0.0
      %1322 = vmatpush1.msra.mxu0 %v656
      %1323 = vmatprep.subr.mxu0 0.0
      %1324 = vmatpush1.msra.mxu0 %v657
      %1325 = vmatprep.subr.mxu0 0.0
      %1326 = vmatpush1.msra.mxu0 %v658
      %1327 = vmatprep.subr.mxu0 0.0
      %1328 = vmatpush1.msra.mxu0 %v659
      %1329 = vmatprep.subr.mxu0 0.0
      %1330 = vmatpush1.msra.mxu0 0.0
      %1331 = vmatprep.subr.mxu0 0.0
      %1332 = vmatpush1.msra.mxu0 0.0
      %1333 = vmatprep.subr.mxu0 0.0
      %1334 = vmatpush1.msra.mxu0 0.0
      %1335 = vmatprep.subr.mxu0 0.0
      %1336 = vmatpush1.msra.mxu0 0.0
      %1337 = vmatprep.subr.mxu0 0.0
      %1338 = vmatpush1.msra.mxu0 0.0
      %1339 = vmatprep.subr.mxu0 0.0
      %1340 = vmatpush1.msra.mxu0 0.0
      %1341 = vmatprep.subr.mxu0 0.0
      %1342 = vmatpush1.msra.mxu0 0.0
      %1343 = vmatprep.subr.mxu0 0.0
      %1344 = vmatpush1.msra.mxu0 0.0
      %1345 = vmatprep.subr.mxu0 0.0
      %1346 = vmatpush1.msra.mxu0 0.0
      %1347 = vmatprep.subr.mxu0 0.0
      %1348 = vmatpush1.msra.mxu0 0.0
      %1349 = vmatprep.subr.mxu0 0.0
      %1350 = vmatpush1.msra.mxu0 0.0
      %1351 = vmatprep.subr.mxu0 0.0
      %1352 = vmatpush1.msra.mxu0 0.0
      %1353 = vmatprep.subr.mxu0 0.0
      %1354 = vmatpush1.msra.mxu0 0.0
      %1355 = vmatprep.subr.mxu0 0.0
      %1356 = vmatpush1.msra.mxu0 0.0
      %1357 = vmatprep.subr.mxu0 0.0
      %1358 = vmatpush1.msra.mxu0 0.0
      %1359 = vmatprep.subr.mxu0 0.0
      %1360 = vmatpush1.msra.mxu0 0.0
      %1361 = vmatprep.subr.mxu0 0.0
      %1362 = vmatpush1.msra.mxu0 0.0
      %1363 = vmatprep.subr.mxu0 0.0
      %1364 = vmatpush1.msra.mxu0 0.0
      %1365 = vmatprep.subr.mxu0 0.0
      %1366 = vmatpush1.msra.mxu0 0.0
      %1367 = vmatprep.subr.mxu0 0.0
      %1368 = vmatpush1.msra.mxu0 0.0
      %1369 = vmatprep.subr.mxu0 0.0
      %1370 = vmatpush1.msra.mxu0 0.0
      %1371 = vmatprep.subr.mxu0 0.0
      %1372 = vmatpush1.msra.mxu0 0.0
      %1373 = vmatprep.subr.mxu0 0.0
      %1374 = vmatpush1.msra.mxu0 0.0
      %1375 = vmatprep.subr.mxu0 0.0
      %1376 = vmatpush1.msra.mxu0 0.0
      %1377 = vmatprep.subr.mxu0 0.0
      %1378 = vmatpush1.msra.mxu0 0.0
      %1379 = vmatprep.subr.mxu0 0.0
      %1380 = vmatpush1.msra.mxu0 0.0
      %1381 = vmatprep.subr.mxu0 0.0
      %1382 = vmatpush1.msra.mxu0 0.0
      %1383 = vmatprep.subr.mxu0 0.0
      %1384 = vmatpush1.msra.mxu0 0.0
      %1385 = vmatprep.mubr.f32.mxu0 0.0
      %1386 = vmatmul.mubr.f32.gmra.mrb[0].mxu0 %v1319
      %v1387 = vpop.f32.mrb[0].mxu0
      %v1388 = vadd.f32 0.0, %v1387
      %v1389 = vpop.f32.mrb[0].mxu0
      %1390 = vdwg.mxu0
      %v1391 = vadd.f32 %v1318, %v1388
      %v1392 = vtanh.pop %v1391
      %v1393 = vxor.u32 %v1391, 2147483648
      %v1394 = vmul.f32 %v1393, 1.442695
      %v1395 = vpow.pop %v1394
      %v1396 = vadd.f32 %v1395, 1.0
      %v1397 = vrcp.pop %v1396
      %v1398 = vmul.f32 1.0, %v1397
      %v1399 = vsel %vm664, %v1392, %v1398
      %v1400 = vmul.f32 %v1399, %v1303
      %1402 = vrot.lane.b32.xlu0 %v1399, 64
      %v1403 = vpop.permute.xlu0 %1402
      %v1405 = vmul.f32 %v1399, %v1403
      %1407 = vrot.lane.b32.xlu0 %v1405, 32
      %v1408 = vpop.permute.xlu0 %1407
      %v1410 = vadd.f32 %v1400, %v1408
      %v1411 = vtanh.pop %v1410
      %1413 = vrot.lane.b32.xlu0 %v1411, 64
      %v1414 = vpop.permute.xlu0 %1413
      %v1416 = vmul.f32 %v1399, %v1414
      %1418 = vrot.lane.b32.xlu0 %v1416, 32
      %v1419 = vpop.permute.xlu0 %1418
      %v1421 = vadd.f32 %v1314, %v1419
      %s1422 = scalar_select %p339, 0, 7
      %s1423 = smul.u32 %s1422, 8
      %s1424 = scalar_lea.vmem [#allocation2], %s1423
      %v1425 = vld [vmem:[%s1424] sm:$0xff]
      %v1426 = vsel %vm374, %v1419, 0
      %1428 = vmatprep.subr.mxu0 0.0
      %1429 = vmatpush1.msra.mxu0 %v656
      %1430 = vmatprep.subr.mxu0 0.0
      %1431 = vmatpush1.msra.mxu0 %v657
      %1432 = vmatprep.subr.mxu0 0.0
      %1433 = vmatpush1.msra.mxu0 %v658
      %1434 = vmatprep.subr.mxu0 0.0
      %1435 = vmatpush1.msra.mxu0 %v659
      %1436 = vmatprep.subr.mxu0 0.0
      %1437 = vmatpush1.msra.mxu0 0.0
      %1438 = vmatprep.subr.mxu0 0.0
      %1439 = vmatpush1.msra.mxu0 0.0
      %1440 = vmatprep.subr.mxu0 0.0
      %1441 = vmatpush1.msra.mxu0 0.0
      %1442 = vmatprep.subr.mxu0 0.0
      %1443 = vmatpush1.msra.mxu0 0.0
      %1444 = vmatprep.subr.mxu0 0.0
      %1445 = vmatpush1.msra.mxu0 0.0
      %1446 = vmatprep.subr.mxu0 0.0
      %1447 = vmatpush1.msra.mxu0 0.0
      %1448 = vmatprep.subr.mxu0 0.0
      %1449 = vmatpush1.msra.mxu0 0.0
      %1450 = vmatprep.subr.mxu0 0.0
      %1451 = vmatpush1.msra.mxu0 0.0
      %1452 = vmatprep.subr.mxu0 0.0
      %1453 = vmatpush1.msra.mxu0 0.0
      %1454 = vmatprep.subr.mxu0 0.0
      %1455 = vmatpush1.msra.mxu0 0.0
      %1456 = vmatprep.subr.mxu0 0.0
      %1457 = vmatpush1.msra.mxu0 0.0
      %1458 = vmatprep.subr.mxu0 0.0
      %1459 = vmatpush1.msra.mxu0 0.0
      %1460 = vmatprep.subr.mxu0 0.0
      %1461 = vmatpush1.msra.mxu0 0.0
      %1462 = vmatprep.subr.mxu0 0.0
      %1463 = vmatpush1.msra.mxu0 0.0
      %1464 = vmatprep.subr.mxu0 0.0
      %1465 = vmatpush1.msra.mxu0 0.0
      %1466 = vmatprep.subr.mxu0 0.0
      %1467 = vmatpush1.msra.mxu0 0.0
      %1468 = vmatprep.subr.mxu0 0.0
      %1469 = vmatpush1.msra.mxu0 0.0
      %1470 = vmatprep.subr.mxu0 0.0
      %1471 = vmatpush1.msra.mxu0 0.0
      %1472 = vmatprep.subr.mxu0 0.0
      %1473 = vmatpush1.msra.mxu0 0.0
      %1474 = vmatprep.subr.mxu0 0.0
      %1475 = vmatpush1.msra.mxu0 0.0
      %1476 = vmatprep.subr.mxu0 0.0
      %1477 = vmatpush1.msra.mxu0 0.0
      %1478 = vmatprep.subr.mxu0 0.0
      %1479 = vmatpush1.msra.mxu0 0.0
      %1480 = vmatprep.subr.mxu0 0.0
      %1481 = vmatpush1.msra.mxu0 0.0
      %1482 = vmatprep.subr.mxu0 0.0
      %1483 = vmatpush1.msra.mxu0 0.0
      %1484 = vmatprep.subr.mxu0 0.0
      %1485 = vmatpush1.msra.mxu0 0.0
      %1486 = vmatprep.subr.mxu0 0.0
      %1487 = vmatpush1.msra.mxu0 0.0
      %1488 = vmatprep.subr.mxu0 0.0
      %1489 = vmatpush1.msra.mxu0 0.0
      %1490 = vmatprep.subr.mxu0 0.0
      %1491 = vmatpush1.msra.mxu0 0.0
      %1492 = vmatprep.mubr.f32.mxu0 0.0
      %1493 = vmatmul.mubr.f32.gmra.mrb[0].mxu0 %v1426
      %v1494 = vpop.f32.mrb[0].mxu0
      %v1495 = vadd.f32 0.0, %v1494
      %v1496 = vpop.f32.mrb[0].mxu0
      %1497 = vdwg.mxu0
      %v1498 = vadd.f32 %v1425, %v1495
      %v1499 = vtanh.pop %v1498
      %v1500 = vxor.u32 %v1498, 2147483648
      %v1501 = vmul.f32 %v1500, 1.442695
      %v1502 = vpow.pop %v1501
      %v1503 = vadd.f32 %v1502, 1.0
      %v1504 = vrcp.pop %v1503
      %v1505 = vmul.f32 1.0, %v1504
      %v1506 = vsel %vm664, %v1499, %v1505
      %v1507 = vmul.f32 %v1506, %v1410
      %1509 = vrot.lane.b32.xlu0 %v1506, 64
      %v1510 = vpop.permute.xlu0 %1509
      %v1512 = vmul.f32 %v1506, %v1510
      %1514 = vrot.lane.b32.xlu0 %v1512, 32
      %v1515 = vpop.permute.xlu0 %1514
      %v1517 = vadd.f32 %v1507, %v1515
      %v1518 = vtanh.pop %v1517
      %1520 = vrot.lane.b32.xlu0 %v1518, 64
      %v1521 = vpop.permute.xlu0 %1520
      %v1523 = vmul.f32 %v1506, %v1521
      %1525 = vrot.lane.b32.xlu0 %v1523, 32
      %v1526 = vpop.permute.xlu0 %1525
      %v1528 = vadd.f32 %v1421, %v1526
      %1529 = vst.msk [vmem:[#allocation3] sm:$0xff] %vm374, %v1526
      %1531 = vrot.lane.b32.xlu0 %v1517, 96
      %v1532 = vpop.permute.xlu0 %1531
      %1534 = vst.msk [vmem:[#allocation4] sm:$0xff] %vm374, %v1532
      %1535 = vst.msk [vmem:[#allocation5] sm:$0xff] %vm374, %v1528
      // Predicated region
      $region45: #{lstm_forward.3} parent=39 // pred_check
        %p1536 = pneg %p340
      $region46: #{lstm_forward.3} parent=39 // pred_check_branch
        %1538 = sbr.rel (%p1536) target = $region48
      $region47: #{lstm_forward.3} parent=39 // pred_region
        %v1539 = vmul.f32 %v1528, 0.125
        %v1540 = vld [vmem:[%s334] sm:$0xff]
        %v1541 = vld [vmem:[%s334 + $0x8] sm:$0xff]
        %v1542 = vld [vmem:[%s334 + $0x10] sm:$0xff]
        %v1543 = vld [vmem:[%s334 + $0x18] sm:$0xff]
        %v1545 = vsel %vm374, %v1539, 0
        %1547 = vmatprep.subr.mxu0 0.0
        %1548 = vmatpush1.msra.mxu0 %v1540
        %1549 = vmatprep.subr.mxu0 0.0
        %1550 = vmatpush1.msra.mxu0 %v1541
        %1551 = vmatprep.subr.mxu0 0.0
        %1552 = vmatpush1.msra.mxu0 %v1542
        %1553 = vmatprep.subr.mxu0 0.0
        %1554 = vmatpush1.msra.mxu0 %v1543
        %1555 = vmatprep.subr.mxu0 0.0
        %1556 = vmatpush1.msra.mxu0 0.0
        %1557 = vmatprep.subr.mxu0 0.0
        %1558 = vmatpush1.msra.mxu0 0.0
        %1559 = vmatprep.subr.mxu0 0.0
        %1560 = vmatpush1.msra.mxu0 0.0
        %1561 = vmatprep.subr.mxu0 0.0
        %1562 = vmatpush1.msra.mxu0 0.0
        %1563 = vmatprep.subr.mxu0 0.0
        %1564 = vmatpush1.msra.mxu0 0.0
        %1565 = vmatprep.subr.mxu0 0.0
        %1566 = vmatpush1.msra.mxu0 0.0
        %1567 = vmatprep.subr.mxu0 0.0
        %1568 = vmatpush1.msra.mxu0 0.0
        %1569 = vmatprep.subr.mxu0 0.0
        %1570 = vmatpush1.msra.mxu0 0.0
        %1571 = vmatprep.subr.mxu0 0.0
        %1572 = vmatpush1.msra.mxu0 0.0
        %1573 = vmatprep.subr.mxu0 0.0
        %1574 = vmatpush1.msra.mxu0 0.0
        %1575 = vmatprep.subr.mxu0 0.0
        %1576 = vmatpush1.msra.mxu0 0.0
        %1577 = vmatprep.subr.mxu0 0.0
        %1578 = vmatpush1.msra.mxu0 0.0
        %1579 = vmatprep.subr.mxu0 0.0
        %1580 = vmatpush1.msra.mxu0 0.0
        %1581 = vmatprep.subr.mxu0 0.0
        %1582 = vmatpush1.msra.mxu0 0.0
        %1583 = vmatprep.subr.mxu0 0.0
        %1584 = vmatpush1.msra.mxu0 0.0
        %1585 = vmatprep.subr.mxu0 0.0
        %1586 = vmatpush1.msra.mxu0 0.0
        %1587 = vmatprep.subr.mxu0 0.0
        %1588 = vmatpush1.msra.mxu0 0.0
        %1589 = vmatprep.subr.mxu0 0.0
        %1590 = vmatpush1.msra.mxu0 0.0
        %1591 = vmatprep.subr.mxu0 0.0
        %1592 = vmatpush1.msra.mxu0 0.0
        %1593 = vmatprep.subr.mxu0 0.0
        %1594 = vmatpush1.msra.mxu0 0.0
        %1595 = vmatprep.subr.mxu0 0.0
        %1596 = vmatpush1.msra.mxu0 0.0
        %1597 = vmatprep.subr.mxu0 0.0
        %1598 = vmatpush1.msra.mxu0 0.0
        %1599 = vmatprep.subr.mxu0 0.0
        %1600 = vmatpush1.msra.mxu0 0.0
        %1601 = vmatprep.subr.mxu0 0.0
        %1602 = vmatpush1.msra.mxu0 0.0
        %1603 = vmatprep.subr.mxu0 0.0
        %1604 = vmatpush1.msra.mxu0 0.0
        %1605 = vmatprep.subr.mxu0 0.0
        %1606 = vmatpush1.msra.mxu0 0.0
        %1607 = vmatprep.subr.mxu0 0.0
        %1608 = vmatpush1.msra.mxu0 0.0
        %1609 = vmatprep.subr.mxu0 0.0
        %1610 = vmatpush1.msra.mxu0 0.0
        %1611 = vmatprep.mubr.f32.mxu0 0.0
        %1612 = vmatmul.mubr.f32.gmra.mrb[0].mxu0 %v1545
        %v1613 = vpop.f32.mrb[0].mxu0
        %v1614 = vadd.f32 0.0, %v1613
        %v1615 = vpop.f32.mrb[0].mxu0
        %1616 = vdwg.mxu0
        %vm1617 = vcmask 64512
        %1618 = vst.msk [vmem:[%s338] sm:$0xff] %vm1617, %v1614
      $region48: #{lstm_forward.3} parent=39 // pred_fallthru
        _
      %p1619 = scmp.lt.s32.totalorder %s20, 1
      %s1620 = scalar_select %p1619, %s20, 1
      %s1621 = smul.addr %s1620, 8
      %s1622 = scalar_lea.vmem %s5, %s1621
      // Predicated region
      $region49: #{lstm_forward.3} parent=39 // pred_check
        %p1623 = pneg %p184
      $region50: #{lstm_forward.3} parent=39 // pred_check_branch
        %1625 = sbr.rel (%p1623) target = $region52
      $region51: #{lstm_forward.3} parent=39 // pred_region
        _
      $region52: #{lstm_forward.3} parent=39 // pred_fallthru
        _
    $region40: #{lstm_forward.3} parent=5 // pred_fallthru
      _
    %p1626 = scmp.le.s32.totalorder 2, %s11
    // Predicated region
    $region53: #{lstm_forward.3} parent=5 // pred_check
      %p1627 = pneg %p1626
    $region54: #{lstm_forward.3} parent=5 // pred_check_branch
      %1629 = sbr.rel (%p1627) target = $region56
    $region55: #{lstm_forward.3} parent=5 // pred_region
      %s1630 = ssub.s32 %s11, 2
      // Predicated region
      $region57: #{lstm_forward.3} parent=55 // pred_check
        %p1631 = pneg %p190
      $region58: #{lstm_forward.3} parent=55 // pred_check_branch
        %1633 = sbr.rel (%p1631) target = $region60
      $region59: #{lstm_forward.3} parent=55 // pred_region
        %p1634 = scmp.lt.s32.totalorder %s22, 1
        %s1635 = scalar_select %p1634, %s22, 1
        %s1636 = smul.addr %s1635, 8
        %s1637 = scalar_lea.vmem %s5, %s1636
      $region60: #{lstm_forward.3} parent=55 // pred_fallthru
        _
    $region56: #{lstm_forward.3} parent=5 // pred_fallthru
      _
  $region6: #{lstm_forward.3} parent=0 // loop_footer
    %s15 = sadd.s32 1, %s11
  $region7: #{lstm_forward.3} parent=0 // loop_footer_branch
    %10 = sbr.rel target = $region3
  $region8: #{lstm_forward.3} parent=0 // loop_exit
    _

</llo_original>
